<compile_context>
chip_gen: v5e
topology: v5e:2x2
jax: 0.10.0
libtpu: 0.0.40
codegen_flags: <defaults>
</compile_context>

<pallas_src>
import functools

import jax
import jax.numpy as jnp
from jax.experimental import pallas as pl
from jax.experimental.pallas import tpu as pltpu

BN_EPS = 1e-5
NEG_SLOPE = 0.01
LANE = 128
SUBLANE_BF16 = 16      # bf16 packs 16 sublanes per vreg


def _round_up(n, m):
    return ((n + m - 1) // m) * m


def _dqn_kernel(x_ref,
                b1_ref, b2_ref, b3_ref, b4_ref, b5_ref,
                w1_hbm, w2_hbm, w3_hbm, w4_hbm, w5_hbm,
                out_ref,
                w1_buf, w2_buf, w3_buf, w4_buf, w5_buf,
                sem):
    """Fused DQN forward (eval mode). BN already folded into W/b; weights bf16.

    Weights stream from HBM via manual async copies into per-layer VMEM
    scratch; each layer's matmul begins as soon as its own weight has landed
    while the remaining copies stay in flight.
    """
    cps = [
        pltpu.make_async_copy(w1_hbm, w1_buf, sem.at[0]),
        pltpu.make_async_copy(w2_hbm, w2_buf, sem.at[1]),
        pltpu.make_async_copy(w3_hbm, w3_buf, sem.at[2]),
        pltpu.make_async_copy(w4_hbm, w4_buf, sem.at[3]),
        pltpu.make_async_copy(w5_hbm, w5_buf, sem.at[4]),
    ]
    for cp in cps:
        cp.start()

    def linear(h, w_buf, b_ref):
        # h: (B, in) f32 -> bf16 for the MXU; w: (in, out) bf16; f32 accumulate.
        return jnp.dot(h.astype(jnp.bfloat16), w_buf[...],
                       preferred_element_type=jnp.float32) + b_ref[...]

    def leaky(y):
        # Single VPU max instead of compare+select.
        return jnp.maximum(y, NEG_SLOPE * y)

    h = x_ref[...]
    # TODO(synk): nn.Dropout is stochastic in training mode; eval-mode identity is used here.
    cps[0].wait()
    h = leaky(linear(h, w1_buf, b1_ref))
    cps[1].wait()
    h = leaky(linear(h, w2_buf, b2_ref))
    cps[2].wait()
    h = leaky(linear(h, w3_buf, b3_ref))
    cps[3].wait()
    h = leaky(linear(h, w4_buf, b4_ref))
    cps[4].wait()
    out_ref[...] = linear(h, w5_buf, b5_ref).astype(out_ref.dtype)


def prepare_params(params, n_actions):
    """One-time transform (do outside the hot call):
      * fold eval-mode BN into the preceding Linear,
      * cast weights to bf16,
      * pad fc1's input dim to a multiple of 16 (bf16 sublane tile),
      * lane-pad the final layer's output dim to a multiple of 128.
    """
    (w1, b1, w2, b2, w3, b3, w4, b4, w5, b5,
     gamma, beta, mean, var) = params

    def fold(w, b, i):
        scale = gamma[i] * jax.lax.rsqrt(var[i] + BN_EPS)            # (out,)
        w_f = (w * scale[None, :]).astype(jnp.bfloat16)
        b_f = ((b - mean[i][None, :]) * scale[None, :] + beta[i][None, :])
        return w_f, b_f.astype(jnp.float32)

    w1f, b1f = fold(w1, b1, 0)
    w2f, b2f = fold(w2, b2, 1)
    w3f, b3f = fold(w3, b3, 2)
    w4f, b4f = fold(w4, b4, 3)

    # Pad fc1's fan_in to a multiple of 16 with zero rows (padded x columns
    # are zero, so the result is unchanged).
    n_obs = w1f.shape[0]
    in_pad = _round_up(n_obs, SUBLANE_BF16)
    if in_pad != n_obs:
        w1f = jnp.zeros((in_pad, w1f.shape[1]), jnp.bfloat16).at[:n_obs, :].set(w1f)

    # Pad the n_actions-wide last layer to a lane-dense 128-multiple tile.
    out_pad = _round_up(n_actions, LANE)
    w5p = jnp.zeros((w5.shape[0], out_pad), jnp.bfloat16)
    w5p = w5p.at[:, :n_actions].set(w5.astype(jnp.bfloat16))
    b5p = jnp.zeros((1, out_pad), jnp.float32).at[:, :n_actions].set(b5)

    return (w1f, b1f, w2f, b2f, w3f, b3f, w4f, b4f, w5p, b5p)


@functools.partial(jax.jit, static_argnames=("n_actions", "n_observations"))
def dqn_forward(x, folded_params, n_actions, n_observations):
    """Pads batch/feature dims, calls the fused Pallas kernel once (grid-less),
    and slices the padded output back to (batch, n_actions)."""
    (w1, b1, w2, b2, w3, b3, w4, b4, w5, b5) = folded_params
    batch = x.shape[0]
    in_pad = w1.shape[0]
    hidden = w1.shape[1]
    out_pad = w5.shape[1]

    # Pad batch to a multiple of 16 (bf16 sublane packing) and pad the feature
    # dim with zero columns to match the zero-row-padded w1.
    b_pad = _round_up(batch, SUBLANE_BF16)
    x_p = jnp.zeros((b_pad, in_pad), jnp.float32)
    x_p = x_p.at[:batch, :n_observations].set(x.astype(jnp.float32))

    vmem = pl.BlockSpec(memory_space=pltpu.MemorySpace.VMEM)
    hbm = pl.BlockSpec(memory_space=pl.ANY)

    weight_elems = (in_pad * hidden + 3 * hidden * hidden + hidden * out_pad)
    cost = pl.CostEstimate(
        flops=2 * b_pad * weight_elems,
        transcendentals=0,
        bytes_accessed=(2 * weight_elems                      # bf16 weights
                        + 4 * (4 * hidden + out_pad)          # f32 biases
                        + 4 * b_pad * (in_pad + out_pad)),    # x + out
    )

    out = pl.pallas_call(
        _dqn_kernel,
        out_shape=jax.ShapeDtypeStruct((b_pad, out_pad), jnp.float32),
        in_specs=[vmem] * 6 + [hbm] * 5,
        out_specs=vmem,
        scratch_shapes=[
            pltpu.VMEM((in_pad, hidden), jnp.bfloat16),
            pltpu.VMEM((hidden, hidden), jnp.bfloat16),
            pltpu.VMEM((hidden, hidden), jnp.bfloat16),
            pltpu.VMEM((hidden, hidden), jnp.bfloat16),
            pltpu.VMEM((hidden, out_pad), jnp.bfloat16),
            pltpu.SemaphoreType.DMA((5,)),
        ],
        compiler_params=pltpu.CompilerParams(vmem_limit_bytes=16 << 20),
        cost_estimate=cost,
    )(x_p, b1, b2, b3, b4, b5, w1, w2, w3, w4, w5)

    return out[:batch, :n_actions]


def init_params(key, n_observations, n_actions, hidden):
    """Deterministic init matching the PyTorch module's __init__ shapes.

    Weights: xavier_uniform (as in the module). Biases: PyTorch Linear default
    U(-1/sqrt(fan_in), 1/sqrt(fan_in)). BN: gamma=1, beta=0, mean=0, var=1.
    Weights are stored transposed, i.e. (in, out), for the kernel.  All f32;
    bf16 conversion / folding / padding happens in prepare_params.
    """
    dims = [(n_observations, hidden), (hidden, hidden), (hidden, hidden),
            (hidden, hidden), (hidden, n_actions)]
    keys = jax.random.split(key, 2 * len(dims))
    weights, biases = [], []
    for i, (fan_in, fan_out) in enumerate(dims):
        a = (6.0 / (fan_in + fan_out)) ** 0.5          # xavier_uniform bound
        w = jax.random.uniform(keys[2 * i], (fan_in, fan_out),
                               minval=-a, maxval=a, dtype=jnp.float32)
        bnd = 1.0 / (fan_in ** 0.5)
        b = jax.random.uniform(keys[2 * i + 1], (1, fan_out),
                               minval=-bnd, maxval=bnd, dtype=jnp.float32)
        weights.append(w)
        biases.append(b)

    gamma = jnp.ones((4, hidden), jnp.float32)
    beta = jnp.zeros((4, hidden), jnp.float32)
    running_mean = jnp.zeros((4, hidden), jnp.float32)
    running_var = jnp.ones((4, hidden), jnp.float32)

    return (weights[0], biases[0], weights[1], biases[1], weights[2], biases[2],
            weights[3], biases[3], weights[4], biases[4],
            gamma, beta, running_mean, running_var)


def dqn_forward_ref(x, params):
    """Pure-JAX f32 reference of the same (eval-mode) forward pass."""
    (w1, b1, w2, b2, w3, b3, w4, b4, w5, b5,
     gamma, beta, mean, var) = params

    def bn_leaky(h, i):
        y = (h - mean[i]) * (gamma[i] * jax.lax.rsqrt(var[i] + BN_EPS)) + beta[i]
        return jnp.where(y > 0, y, NEG_SLOPE * y)

    h = bn_leaky(x @ w1 + b1, 0)
    h = bn_leaky(h @ w2 + b2, 1)
    h = bn_leaky(h @ w3 + b3, 2)
    h = bn_leaky(h @ w4 + b4, 3)
    return h @ w5 + b5


if __name__ == "__main__":
    # Small shapes consistent with the module's forward:
    #   n_observations = flattened state length, numberOfNeurons = 512 hidden,
    #   n_actions = env.action_space.n (e.g. 3 for a trading env).
    batch = 8
    n_observations = 32
    hidden = 512
    n_actions = 3

    key = jax.random.PRNGKey(0)
    kx, kp = jax.random.split(key)
    x = jax.random.normal(kx, (batch, n_observations), dtype=jnp.float32)
    params = init_params(kp, n_observations, n_actions, hidden)

    folded = prepare_params(params, n_actions)   # one-time BN fold + bf16 + pad
    out = jax.block_until_ready(
        dqn_forward(x, folded, n_actions, n_observations))
    ref = jax.block_until_ready(dqn_forward_ref(x, params))

    assert out.shape == (batch, n_actions)
    # Looser tolerance: kernel uses bf16 weights/activations on the MXU with
    # f32 accumulation; reference is pure f32.
    assert jnp.allclose(out, ref, atol=5e-2, rtol=5e-2)
    print("KERNEL_OK")
</pallas_src>

<mosaic_0001>
module attributes {stable_mosaic.version = 11 : i64} {
  func.func @_dqn_kernel(%arg0: memref<16x32xf32, #tpu.memory_space<vmem>>, %arg1: memref<1x512xf32, #tpu.memory_space<vmem>>, %arg2: memref<1x512xf32, #tpu.memory_space<vmem>>, %arg3: memref<1x512xf32, #tpu.memory_space<vmem>>, %arg4: memref<1x512xf32, #tpu.memory_space<vmem>>, %arg5: memref<1x128xf32, #tpu.memory_space<vmem>>, %arg6: memref<32x512xbf16, #tpu.memory_space<any>>, %arg7: memref<512x512xbf16, #tpu.memory_space<any>>, %arg8: memref<512x512xbf16, #tpu.memory_space<any>>, %arg9: memref<512x512xbf16, #tpu.memory_space<any>>, %arg10: memref<512x128xbf16, #tpu.memory_space<any>>, %arg11: memref<16x128xf32, #tpu.memory_space<vmem>>, %arg12: memref<32x512xbf16, #tpu.memory_space<vmem>>, %arg13: memref<512x512xbf16, #tpu.memory_space<vmem>>, %arg14: memref<512x512xbf16, #tpu.memory_space<vmem>>, %arg15: memref<512x512xbf16, #tpu.memory_space<vmem>>, %arg16: memref<512x128xbf16, #tpu.memory_space<vmem>>, %arg17: memref<5x!tpu.dma_semaphore, #tpu.memory_space<semaphore_mem>>) attributes {dimension_semantics = [], scalar_prefetch = 0 : i64, scratch_operands = 6 : i64, tpu.core_type = #tpu.core_type<tc>} {
    %c0_i32 = arith.constant 0 : i32
    %0 = tpu.memref_slice %arg17[%c0_i32] : memref<5x!tpu.dma_semaphore, #tpu.memory_space<semaphore_mem>> -> memref<1x!tpu.dma_semaphore, #tpu.memory_space<semaphore_mem>>
    %1 = tpu.memref_squeeze %0 : memref<1x!tpu.dma_semaphore, #tpu.memory_space<semaphore_mem>> -> memref<!tpu.dma_semaphore, #tpu.memory_space<semaphore_mem>>
    tpu.enqueue_dma source(%arg6 : memref<32x512xbf16, #tpu.memory_space<any>>) target(%arg12 : memref<32x512xbf16, #tpu.memory_space<vmem>>) target_semaphore(%1 : memref<!tpu.dma_semaphore, #tpu.memory_space<semaphore_mem>>)
    %c1_i32 = arith.constant 1 : i32
    %2 = tpu.memref_slice %arg17[%c1_i32] : memref<5x!tpu.dma_semaphore, #tpu.memory_space<semaphore_mem>> -> memref<1x!tpu.dma_semaphore, #tpu.memory_space<semaphore_mem>>
    %3 = tpu.memref_squeeze %2 : memref<1x!tpu.dma_semaphore, #tpu.memory_space<semaphore_mem>> -> memref<!tpu.dma_semaphore, #tpu.memory_space<semaphore_mem>>
    tpu.enqueue_dma source(%arg7 : memref<512x512xbf16, #tpu.memory_space<any>>) target(%arg13 : memref<512x512xbf16, #tpu.memory_space<vmem>>) target_semaphore(%3 : memref<!tpu.dma_semaphore, #tpu.memory_space<semaphore_mem>>)
    %c2_i32 = arith.constant 2 : i32
    %4 = tpu.memref_slice %arg17[%c2_i32] : memref<5x!tpu.dma_semaphore, #tpu.memory_space<semaphore_mem>> -> memref<1x!tpu.dma_semaphore, #tpu.memory_space<semaphore_mem>>
    %5 = tpu.memref_squeeze %4 : memref<1x!tpu.dma_semaphore, #tpu.memory_space<semaphore_mem>> -> memref<!tpu.dma_semaphore, #tpu.memory_space<semaphore_mem>>
    tpu.enqueue_dma source(%arg8 : memref<512x512xbf16, #tpu.memory_space<any>>) target(%arg14 : memref<512x512xbf16, #tpu.memory_space<vmem>>) target_semaphore(%5 : memref<!tpu.dma_semaphore, #tpu.memory_space<semaphore_mem>>)
    %c3_i32 = arith.constant 3 : i32
    %6 = tpu.memref_slice %arg17[%c3_i32] : memref<5x!tpu.dma_semaphore, #tpu.memory_space<semaphore_mem>> -> memref<1x!tpu.dma_semaphore, #tpu.memory_space<semaphore_mem>>
    %7 = tpu.memref_squeeze %6 : memref<1x!tpu.dma_semaphore, #tpu.memory_space<semaphore_mem>> -> memref<!tpu.dma_semaphore, #tpu.memory_space<semaphore_mem>>
    tpu.enqueue_dma source(%arg9 : memref<512x512xbf16, #tpu.memory_space<any>>) target(%arg15 : memref<512x512xbf16, #tpu.memory_space<vmem>>) target_semaphore(%7 : memref<!tpu.dma_semaphore, #tpu.memory_space<semaphore_mem>>)
    %c4_i32 = arith.constant 4 : i32
    %8 = tpu.memref_slice %arg17[%c4_i32] : memref<5x!tpu.dma_semaphore, #tpu.memory_space<semaphore_mem>> -> memref<1x!tpu.dma_semaphore, #tpu.memory_space<semaphore_mem>>
    %9 = tpu.memref_squeeze %8 : memref<1x!tpu.dma_semaphore, #tpu.memory_space<semaphore_mem>> -> memref<!tpu.dma_semaphore, #tpu.memory_space<semaphore_mem>>
    tpu.enqueue_dma source(%arg10 : memref<512x128xbf16, #tpu.memory_space<any>>) target(%arg16 : memref<512x128xbf16, #tpu.memory_space<vmem>>) target_semaphore(%9 : memref<!tpu.dma_semaphore, #tpu.memory_space<semaphore_mem>>)
    %c0 = arith.constant 0 : index
    %c0_0 = arith.constant 0 : index
    %10 = vector.load %arg0[%c0, %c0_0] : memref<16x32xf32, #tpu.memory_space<vmem>>, vector<16x32xf32>
    %c0_i32_1 = arith.constant 0 : i32
    %11 = tpu.memref_slice %arg17[%c0_i32_1] : memref<5x!tpu.dma_semaphore, #tpu.memory_space<semaphore_mem>> -> memref<1x!tpu.dma_semaphore, #tpu.memory_space<semaphore_mem>>
    %12 = tpu.memref_squeeze %11 : memref<1x!tpu.dma_semaphore, #tpu.memory_space<semaphore_mem>> -> memref<!tpu.dma_semaphore, #tpu.memory_space<semaphore_mem>>
    tpu.wait_dma2 semaphore(%12 : memref<!tpu.dma_semaphore, #tpu.memory_space<semaphore_mem>>) src(%arg6 : memref<32x512xbf16, #tpu.memory_space<any>>) dst(%arg12 : memref<32x512xbf16, #tpu.memory_space<vmem>>)
    %13 = arith.truncf %10 : vector<16x32xf32> to vector<16x32xbf16>
    %c0_2 = arith.constant 0 : index
    %c0_3 = arith.constant 0 : index
    %14 = vector.load %arg12[%c0_2, %c0_3] : memref<32x512xbf16, #tpu.memory_space<vmem>>, vector<32x512xbf16>
    %cst = arith.constant dense<0.000000e+00> : vector<16x512xf32>
    %15 = tpu.matmul %13, %14, %cst {dimension_numbers = #tpu.dot_dimension_numbers<[1], [0], [0], [1], [0, 0, 1, 1], [], []>} : vector<16x32xbf16>, vector<32x512xbf16>, vector<16x512xf32> -> vector<16x512xf32>
    %c0_4 = arith.constant 0 : index
    %c0_5 = arith.constant 0 : index
    %16 = vector.load %arg1[%c0_4, %c0_5] : memref<1x512xf32, #tpu.memory_space<vmem>>, vector<1x512xf32>
    %17 = vector.broadcast %16 : vector<1x512xf32> to vector<16x512xf32>
    %18 = arith.addf %15, %17 : vector<16x512xf32>
    %cst_6 = arith.constant 0.00999999977 : f32
    %19 = vector.broadcast %cst_6 : f32 to vector<16x512xf32>
    %20 = arith.mulf %19, %18 : vector<16x512xf32>
    %21 = arith.maximumf %18, %20 : vector<16x512xf32>
    %c1_i32_7 = arith.constant 1 : i32
    %22 = tpu.memref_slice %arg17[%c1_i32_7] : memref<5x!tpu.dma_semaphore, #tpu.memory_space<semaphore_mem>> -> memref<1x!tpu.dma_semaphore, #tpu.memory_space<semaphore_mem>>
    %23 = tpu.memref_squeeze %22 : memref<1x!tpu.dma_semaphore, #tpu.memory_space<semaphore_mem>> -> memref<!tpu.dma_semaphore, #tpu.memory_space<semaphore_mem>>
    tpu.wait_dma2 semaphore(%23 : memref<!tpu.dma_semaphore, #tpu.memory_space<semaphore_mem>>) src(%arg7 : memref<512x512xbf16, #tpu.memory_space<any>>) dst(%arg13 : memref<512x512xbf16, #tpu.memory_space<vmem>>)
    %24 = arith.truncf %21 : vector<16x512xf32> to vector<16x512xbf16>
    %c0_8 = arith.constant 0 : index
    %c0_9 = arith.constant 0 : index
    %25 = vector.load %arg13[%c0_8, %c0_9] : memref<512x512xbf16, #tpu.memory_space<vmem>>, vector<512x512xbf16>
    %cst_10 = arith.constant dense<0.000000e+00> : vector<16x512xf32>
    %26 = tpu.matmul %24, %25, %cst_10 {dimension_numbers = #tpu.dot_dimension_numbers<[1], [0], [0], [1], [0, 0, 1, 1], [], []>} : vector<16x512xbf16>, vector<512x512xbf16>, vector<16x512xf32> -> vector<16x512xf32>
    %c0_11 = arith.constant 0 : index
    %c0_12 = arith.constant 0 : index
    %27 = vector.load %arg2[%c0_11, %c0_12] : memref<1x512xf32, #tpu.memory_space<vmem>>, vector<1x512xf32>
    %28 = vector.broadcast %27 : vector<1x512xf32> to vector<16x512xf32>
    %29 = arith.addf %26, %28 : vector<16x512xf32>
    %cst_13 = arith.constant 0.00999999977 : f32
    %30 = vector.broadcast %cst_13 : f32 to vector<16x512xf32>
    %31 = arith.mulf %30, %29 : vector<16x512xf32>
    %32 = arith.maximumf %29, %31 : vector<16x512xf32>
    %c2_i32_14 = arith.constant 2 : i32
    %33 = tpu.memref_slice %arg17[%c2_i32_14] : memref<5x!tpu.dma_semaphore, #tpu.memory_space<semaphore_mem>> -> memref<1x!tpu.dma_semaphore, #tpu.memory_space<semaphore_mem>>
    %34 = tpu.memref_squeeze %33 : memref<1x!tpu.dma_semaphore, #tpu.memory_space<semaphore_mem>> -> memref<!tpu.dma_semaphore, #tpu.memory_space<semaphore_mem>>
    tpu.wait_dma2 semaphore(%34 : memref<!tpu.dma_semaphore, #tpu.memory_space<semaphore_mem>>) src(%arg8 : memref<512x512xbf16, #tpu.memory_space<any>>) dst(%arg14 : memref<512x512xbf16, #tpu.memory_space<vmem>>)
    %35 = arith.truncf %32 : vector<16x512xf32> to vector<16x512xbf16>
    %c0_15 = arith.constant 0 : index
    %c0_16 = arith.constant 0 : index
    %36 = vector.load %arg14[%c0_15, %c0_16] : memref<512x512xbf16, #tpu.memory_space<vmem>>, vector<512x512xbf16>
    %cst_17 = arith.constant dense<0.000000e+00> : vector<16x512xf32>
    %37 = tpu.matmul %35, %36, %cst_17 {dimension_numbers = #tpu.dot_dimension_numbers<[1], [0], [0], [1], [0, 0, 1, 1], [], []>} : vector<16x512xbf16>, vector<512x512xbf16>, vector<16x512xf32> -> vector<16x512xf32>
    %c0_18 = arith.constant 0 : index
    %c0_19 = arith.constant 0 : index
    %38 = vector.load %arg3[%c0_18, %c0_19] : memref<1x512xf32, #tpu.memory_space<vmem>>, vector<1x512xf32>
    %39 = vector.broadcast %38 : vector<1x512xf32> to vector<16x512xf32>
    %40 = arith.addf %37, %39 : vector<16x512xf32>
    %cst_20 = arith.constant 0.00999999977 : f32
    %41 = vector.broadcast %cst_20 : f32 to vector<16x512xf32>
    %42 = arith.mulf %41, %40 : vector<16x512xf32>
    %43 = arith.maximumf %40, %42 : vector<16x512xf32>
    %c3_i32_21 = arith.constant 3 : i32
    %44 = tpu.memref_slice %arg17[%c3_i32_21] : memref<5x!tpu.dma_semaphore, #tpu.memory_space<semaphore_mem>> -> memref<1x!tpu.dma_semaphore, #tpu.memory_space<semaphore_mem>>
    %45 = tpu.memref_squeeze %44 : memref<1x!tpu.dma_semaphore, #tpu.memory_space<semaphore_mem>> -> memref<!tpu.dma_semaphore, #tpu.memory_space<semaphore_mem>>
    tpu.wait_dma2 semaphore(%45 : memref<!tpu.dma_semaphore, #tpu.memory_space<semaphore_mem>>) src(%arg9 : memref<512x512xbf16, #tpu.memory_space<any>>) dst(%arg15 : memref<512x512xbf16, #tpu.memory_space<vmem>>)
    %46 = arith.truncf %43 : vector<16x512xf32> to vector<16x512xbf16>
    %c0_22 = arith.constant 0 : index
    %c0_23 = arith.constant 0 : index
    %47 = vector.load %arg15[%c0_22, %c0_23] : memref<512x512xbf16, #tpu.memory_space<vmem>>, vector<512x512xbf16>
    %cst_24 = arith.constant dense<0.000000e+00> : vector<16x512xf32>
    %48 = tpu.matmul %46, %47, %cst_24 {dimension_numbers = #tpu.dot_dimension_numbers<[1], [0], [0], [1], [0, 0, 1, 1], [], []>} : vector<16x512xbf16>, vector<512x512xbf16>, vector<16x512xf32> -> vector<16x512xf32>
    %c0_25 = arith.constant 0 : index
    %c0_26 = arith.constant 0 : index
    %49 = vector.load %arg4[%c0_25, %c0_26] : memref<1x512xf32, #tpu.memory_space<vmem>>, vector<1x512xf32>
    %50 = vector.broadcast %49 : vector<1x512xf32> to vector<16x512xf32>
    %51 = arith.addf %48, %50 : vector<16x512xf32>
    %cst_27 = arith.constant 0.00999999977 : f32
    %52 = vector.broadcast %cst_27 : f32 to vector<16x512xf32>
    %53 = arith.mulf %52, %51 : vector<16x512xf32>
    %54 = arith.maximumf %51, %53 : vector<16x512xf32>
    %c4_i32_28 = arith.constant 4 : i32
    %55 = tpu.memref_slice %arg17[%c4_i32_28] : memref<5x!tpu.dma_semaphore, #tpu.memory_space<semaphore_mem>> -> memref<1x!tpu.dma_semaphore, #tpu.memory_space<semaphore_mem>>
    %56 = tpu.memref_squeeze %55 : memref<1x!tpu.dma_semaphore, #tpu.memory_space<semaphore_mem>> -> memref<!tpu.dma_semaphore, #tpu.memory_space<semaphore_mem>>
    tpu.wait_dma2 semaphore(%56 : memref<!tpu.dma_semaphore, #tpu.memory_space<semaphore_mem>>) src(%arg10 : memref<512x128xbf16, #tpu.memory_space<any>>) dst(%arg16 : memref<512x128xbf16, #tpu.memory_space<vmem>>)
    %57 = arith.truncf %54 : vector<16x512xf32> to vector<16x512xbf16>
    %c0_29 = arith.constant 0 : index
    %c0_30 = arith.constant 0 : index
    %58 = vector.load %arg16[%c0_29, %c0_30] : memref<512x128xbf16, #tpu.memory_space<vmem>>, vector<512x128xbf16>
    %cst_31 = arith.constant dense<0.000000e+00> : vector<16x128xf32>
    %59 = tpu.matmul %57, %58, %cst_31 {dimension_numbers = #tpu.dot_dimension_numbers<[1], [0], [0], [1], [0, 0, 1, 1], [], []>} : vector<16x512xbf16>, vector<512x128xbf16>, vector<16x128xf32> -> vector<16x128xf32>
    %c0_32 = arith.constant 0 : index
    %c0_33 = arith.constant 0 : index
    %60 = vector.load %arg5[%c0_32, %c0_33] : memref<1x128xf32, #tpu.memory_space<vmem>>, vector<1x128xf32>
    %61 = vector.broadcast %60 : vector<1x128xf32> to vector<16x128xf32>
    %62 = arith.addf %59, %61 : vector<16x128xf32>
    %c0_34 = arith.constant 0 : index
    %c0_35 = arith.constant 0 : index
    %63 = vector.load %arg11[%c0_34, %c0_35] : memref<16x128xf32, #tpu.memory_space<vmem>>, vector<16x128xf32>
    tpu.vector_store %arg11[%c0_34, %c0_35], %62 {strides = array<i32>} : memref<16x128xf32, #tpu.memory_space<vmem>>, vector<16x128xf32>,
    return
  }
}

</mosaic_0001>

<llo_original>
// kernel: dqn_forward.1
$region0: #{dqn_forward.1}
  #allocation0 [shape = 'u32[]', space=smem, size = 0x4, offset = 0x4, fixed_abs, tag = 'smem constant byte address 0x4 - core index']
  #allocation1 [shape = 'u32[72,128]{1,0:T(1,128)}', space=vmem, size = 0x9000, scoped, tag = 'internal scratch']
  #allocation2 [shape = 'bf16[32,512]{1,0:T(8,128)(2,1)}', space=vmem, size = 0x8000, scoped, tag = 'scratch operand']
  #allocation3 [shape = 'bf16[512,512]{1,0:T(8,128)(2,1)}', space=vmem, size = 0x80000, scoped, tag = 'scratch operand']
  #allocation4 [shape = 'bf16[512,512]{1,0:T(8,128)(2,1)}', space=vmem, size = 0x80000, scoped, tag = 'scratch operand']
  #allocation5 [shape = 'bf16[512,512]{1,0:T(8,128)(2,1)}', space=vmem, size = 0x80000, scoped, tag = 'scratch operand']
  #allocation6 [shape = 'bf16[512,128]{1,0:T(8,128)(2,1)}', space=vmem, size = 0x20000, scoped, tag = 'scratch operand']
  #allocation7 [shape = 's32[5]{0}', space=sflag, size = 0x14, scoped, tag = 'scratch operand']
  #allocation8 [shape = 's32[]', space=sflag, size = 0x4, offset = 0, fixed_abs, tag = 'sflag constant byte address 0x0 - dummy sync flag']
  #allocation9 [shape = 's32[]', space=sflag, size = 0x4, offset = 0, fixed_abs, tag = 'sflag constant byte address 0x0 - dummy sync flag']
  #allocation10 [shape = 'u32[]', space=smem, size = 0x4, offset = 0x44, fixed_abs, tag = 'smem constant byte address 0x44 - assertion arg 0']
  #allocation11 [shape = 'u32[]', space=smem, size = 0x4, offset = 0x48, fixed_abs, tag = 'smem constant byte address 0x48 - assertion arg 1']
  #allocation12 [shape = 's32[]', space=sflag, size = 0x4, offset = 0, fixed_abs, tag = 'sflag constant byte address 0x0 - dummy sync flag']
  #allocation13 [shape = 's32[]', space=sflag, size = 0x4, offset = 0, fixed_abs, tag = 'sflag constant byte address 0x0 - dummy sync flag']
  #allocation14 [shape = 's32[]', space=sflag, size = 0x4, offset = 0, fixed_abs, tag = 'sflag constant byte address 0x0 - dummy sync flag']
  #allocation15 [shape = 's32[]', space=sflag, size = 0x4, offset = 0, fixed_abs, tag = 'sflag constant byte address 0x0 - dummy sync flag']
  #allocation16 [shape = 's32[]', space=sflag, size = 0x4, offset = 0, fixed_abs, tag = 'sflag constant byte address 0x0 - dummy sync flag']
  #allocation17 [shape = 's32[]', space=sflag, size = 0x4, offset = 0, fixed_abs, tag = 'sflag constant byte address 0x0 - dummy sync flag']
  #allocation18 [shape = 's32[]', space=sflag, size = 0x4, offset = 0, fixed_abs, tag = 'sflag constant byte address 0x0 - dummy sync flag']
  #allocation19 [shape = 's32[]', space=sflag, size = 0x4, offset = 0, fixed_abs, tag = 'sflag constant byte address 0x0 - dummy sync flag']
  %s0 = inlined_call_operand.vmem [shape: f32[16,32], index: 0, kind: input, shape index: {}]
  %s1 = inlined_call_operand.vmem [shape: f32[1,512], index: 1, kind: input, shape index: {}]
  %s2 = inlined_call_operand.vmem [shape: f32[1,512], index: 2, kind: input, shape index: {}]
  %s3 = inlined_call_operand.vmem [shape: f32[1,512], index: 3, kind: input, shape index: {}]
  %s4 = inlined_call_operand.vmem [shape: f32[1,512], index: 4, kind: input, shape index: {}]
  %s5 = inlined_call_operand.vmem [shape: f32[1,128], index: 5, kind: input, shape index: {}]
  %s6 = inlined_call_operand.hbm [shape: bf16[32,512], index: 6, kind: input, shape index: {}]
  %s7 = inlined_call_operand.hbm [shape: bf16[512,512], index: 7, kind: input, shape index: {}]
  %s8 = inlined_call_operand.hbm [shape: bf16[512,512], index: 8, kind: input, shape index: {}]
  %s9 = inlined_call_operand.hbm [shape: bf16[512,512], index: 9, kind: input, shape index: {}]
  %s10 = inlined_call_operand.hbm [shape: bf16[512,128], index: 10, kind: input, shape index: {}]
  %s11 = inlined_call_operand.vmem [shape: f32[16,128], index: 11, kind: output, shape index: {}]
  %s12 = sld [smem:[#allocation0]]
  $region54: #{dqn_forward.1} parent=0
    _
  %s14 = ssub.s32 1, %s12
  %s15 = scalar_select 0, %s14, %s12
  // Predicated region
  $region2: #{dqn_forward.1} parent=0 // pred_check
    _
  $region3: #{dqn_forward.1} parent=0 // pred_check_branch
    %17 = sbr.rel (0) target = $region5
  $region4: #{dqn_forward.1} parent=0 // pred_region
    _
  $region5: #{dqn_forward.1} parent=0 // pred_fallthru
    _
  // Predicated region
  $region6: #{dqn_forward.1} parent=0 // pred_check
    _
  $region7: #{dqn_forward.1} parent=0 // pred_check_branch
    %19 = sbr.rel (0) target = $region9
  $region8: #{dqn_forward.1} parent=0 // pred_region
    _
  $region9: #{dqn_forward.1} parent=0 // pred_fallthru
    _
  // Predicated region
  $region10: #{dqn_forward.1} parent=0 // pred_check
    _
  $region11: #{dqn_forward.1} parent=0 // pred_check_branch
    %21 = sbr.rel (0) target = $region13
  $region12: #{dqn_forward.1} parent=0 // pred_region
    _
  $region13: #{dqn_forward.1} parent=0 // pred_fallthru
    _
  // Predicated region
  $region14: #{dqn_forward.1} parent=0 // pred_check
    _
  $region15: #{dqn_forward.1} parent=0 // pred_check_branch
    %23 = sbr.rel (0) target = $region17
  $region16: #{dqn_forward.1} parent=0 // pred_region
    _
  $region17: #{dqn_forward.1} parent=0 // pred_fallthru
    _
  // Predicated region
  $region18: #{dqn_forward.1} parent=0 // pred_check
    _
  $region19: #{dqn_forward.1} parent=0 // pred_check_branch
    %25 = sbr.rel (0) target = $region21
  $region20: #{dqn_forward.1} parent=0 // pred_region
    _
  $region21: #{dqn_forward.1} parent=0 // pred_fallthru
    _
  // Predicated region
  $region22: #{dqn_forward.1} parent=0 // pred_check
    _
  $region23: #{dqn_forward.1} parent=0 // pred_check_branch
    %27 = sbr.rel (0) target = $region25
  $region24: #{dqn_forward.1} parent=0 // pred_region
    _
  $region25: #{dqn_forward.1} parent=0 // pred_fallthru
    _
  // Predicated region
  $region26: #{dqn_forward.1} parent=0 // pred_check
    _
  $region27: #{dqn_forward.1} parent=0 // pred_check_branch
    %30 = sbr.rel target = $region29
  $region28: #{dqn_forward.1} parent=0 // pred_region
    %31 = sst [smem:[#allocation10]] [#allocation9]
    %32 = sst [smem:[#allocation11]] [#allocation8]
  $region29: #{dqn_forward.1} parent=0 // pred_fallthru
    _
  %34 = shalt.err (0)
  %s36 = sshll.u32 %s6, 4
  %s37 = int_to_ptr.hbm [resolvable:$true] %s36
  %s38 = sshll.u32 [#allocation2], 4
  %s39 = int_to_ptr.vmem [resolvable:$true] %s38
  %41 = dma.hbm_to_vmem [thread:$0]  %s37, 1024, %s39, [#allocation7]
  %s42 = scalar_lea.sflag [#allocation7], 1
  // Predicated region
  $region30: #{dqn_forward.1} parent=0 // pred_check
    _
  $region31: #{dqn_forward.1} parent=0 // pred_check_branch
    %44 = sbr.rel target = $region33
  $region32: #{dqn_forward.1} parent=0 // pred_region
    %45 = sst [smem:[#allocation10]] [#allocation13]
    %46 = sst [smem:[#allocation11]] [#allocation12]
  $region33: #{dqn_forward.1} parent=0 // pred_fallthru
    _
  %48 = shalt.err (0)
  %s50 = sshll.u32 %s7, 4
  %s51 = int_to_ptr.hbm [resolvable:$true] %s50
  %s52 = sshll.u32 [#allocation3], 4
  %s53 = int_to_ptr.vmem [resolvable:$true] %s52
  %55 = dma.hbm_to_vmem [thread:$0]  %s51, 16384, %s53, %s42
  %s56 = scalar_lea.sflag [#allocation7], 2
  // Predicated region
  $region34: #{dqn_forward.1} parent=0 // pred_check
    _
  $region35: #{dqn_forward.1} parent=0 // pred_check_branch
    %58 = sbr.rel target = $region37
  $region36: #{dqn_forward.1} parent=0 // pred_region
    %59 = sst [smem:[#allocation10]] [#allocation15]
    %60 = sst [smem:[#allocation11]] [#allocation14]
  $region37: #{dqn_forward.1} parent=0 // pred_fallthru
    _
  %62 = shalt.err (0)
  %s64 = sshll.u32 %s8, 4
  %s65 = int_to_ptr.hbm [resolvable:$true] %s64
  %s66 = sshll.u32 [#allocation4], 4
  %s67 = int_to_ptr.vmem [resolvable:$true] %s66
  %69 = dma.hbm_to_vmem [thread:$0]  %s65, 16384, %s67, %s56
  %s70 = scalar_lea.sflag [#allocation7], 3
  // Predicated region
  $region38: #{dqn_forward.1} parent=0 // pred_check
    _
  $region39: #{dqn_forward.1} parent=0 // pred_check_branch
    %72 = sbr.rel target = $region41
  $region40: #{dqn_forward.1} parent=0 // pred_region
    %73 = sst [smem:[#allocation10]] [#allocation17]
    %74 = sst [smem:[#allocation11]] [#allocation16]
  $region41: #{dqn_forward.1} parent=0 // pred_fallthru
    _
  %76 = shalt.err (0)
  %s78 = sshll.u32 %s9, 4
  %s79 = int_to_ptr.hbm [resolvable:$true] %s78
  %s80 = sshll.u32 [#allocation5], 4
  %s81 = int_to_ptr.vmem [resolvable:$true] %s80
  %83 = dma.hbm_to_vmem [thread:$0]  %s79, 16384, %s81, %s70
  %s84 = scalar_lea.sflag [#allocation7], 4
  // Predicated region
  $region42: #{dqn_forward.1} parent=0 // pred_check
    _
  $region43: #{dqn_forward.1} parent=0 // pred_check_branch
    %86 = sbr.rel target = $region45
  $region44: #{dqn_forward.1} parent=0 // pred_region
    %87 = sst [smem:[#allocation10]] [#allocation19]
    %88 = sst [smem:[#allocation11]] [#allocation18]
  $region45: #{dqn_forward.1} parent=0 // pred_fallthru
    _
  %90 = shalt.err (0)
  %s92 = sshll.u32 %s10, 4
  %s93 = int_to_ptr.hbm [resolvable:$true] %s92
  %s94 = sshll.u32 [#allocation6], 4
  %s95 = int_to_ptr.vmem [resolvable:$true] %s94
  %97 = dma.hbm_to_vmem [thread:$0]  %s93, 4096, %s95, %s84
  %v98 = vld [vmem:[%s0] sm:$0xff]
  %v99 = vld [vmem:[%s0 + $0x8] sm:$0xff]
  %s100 = smul.u32 4, 4
  %s101 = smul.u32 %s100, 4
  %s102 = sshll.u32 %s101, 4
  %103 = dma.done [#allocation7], %s102
  %v104 = vpack.c.bf16 %v99, %v98
  %v105 = vld [vmem:[#allocation2] sm:$0xff]
  %v106 = vld [vmem:[#allocation2 + $0x8] sm:$0xff]
  %v107 = vld [vmem:[#allocation2 + $0x10] sm:$0xff]
  %v108 = vld [vmem:[#allocation2 + $0x18] sm:$0xff]
  %v109 = vld [vmem:[#allocation2 + $0x20] sm:$0xff]
  %v110 = vld [vmem:[#allocation2 + $0x28] sm:$0xff]
  %v111 = vld [vmem:[#allocation2 + $0x30] sm:$0xff]
  %v112 = vld [vmem:[#allocation2 + $0x38] sm:$0xff]
  %v113 = vld [vmem:[%s1] sm:$0xf]
  %v115 = vperm.slane %v113, 0
  %v116 = vperm.slane %v113, 1
  %v117 = vperm.slane %v113, 2
  %v118 = vperm.slane %v113, 3
  %v131 = vunpack.c.l.b16 %v105
  %v132 = vunpack.c.h.b16 %v105
  %v133 = vunpack.c.l.b16 %v106
  %v134 = vunpack.c.h.b16 %v106
  %v135 = vunpack.c.l.b16 %v107
  %v136 = vunpack.c.h.b16 %v107
  %v137 = vunpack.c.l.b16 %v108
  %v138 = vunpack.c.h.b16 %v108
  %v139 = vunpack.c.l.b16 %v109
  %v140 = vunpack.c.h.b16 %v109
  %v141 = vunpack.c.l.b16 %v110
  %v142 = vunpack.c.h.b16 %v110
  %v143 = vunpack.c.l.b16 %v111
  %v144 = vunpack.c.h.b16 %v111
  %v145 = vunpack.c.l.b16 %v112
  %v146 = vunpack.c.h.b16 %v112
  %v147 = vpack.c.b16 %v135, %v131
  %v148 = vpack.c.b16 %v136, %v132
  %v149 = vpack.c.b16 %v137, %v133
  %v150 = vpack.c.b16 %v138, %v134
  %v151 = vpack.c.b16 %v143, %v139
  %v152 = vpack.c.b16 %v144, %v140
  %v153 = vpack.c.b16 %v145, %v141
  %v154 = vpack.c.b16 %v146, %v142
  %vm163 = vcmask 261120
  %v165 = vsel %vm163, %v104, 0
  %167 = vmatpush.bf16.msra.mxu0 0
  %168 = vmatpush.bf16.msra.mxu0 0
  %169 = vmatpush.bf16.msra.mxu0 0
  %170 = vmatpush.bf16.msra.mxu0 0
  %171 = vmatpush.bf16.msra.mxu0 0
  %172 = vmatpush.bf16.msra.mxu0 0
  %173 = vmatpush.bf16.msra.mxu0 %v151
  %174 = vmatpush.bf16.msra.mxu0 %v147
  %175 = vmatmul.bf16.gmra.mxu0 %v165
  %v176 = vpop.f32.mrf.mxu0
  %v177 = vadd.f32 %v115, %v176
  %v178 = vpop.f32.mrf.mxu0
  %v179 = vadd.f32 %v115, %v178
  %180 = vdwg.mxu0
  %181 = vmatpush.bf16.msra.mxu0 0
  %182 = vmatpush.bf16.msra.mxu0 0
  %183 = vmatpush.bf16.msra.mxu0 0
  %184 = vmatpush.bf16.msra.mxu0 0
  %185 = vmatpush.bf16.msra.mxu0 0
  %186 = vmatpush.bf16.msra.mxu0 0
  %187 = vmatpush.bf16.msra.mxu0 %v152
  %188 = vmatpush.bf16.msra.mxu0 %v148
  %189 = vmatmul.bf16.gmra.mxu0 %v165
  %v190 = vpop.f32.mrf.mxu0
  %v191 = vadd.f32 %v116, %v190
  %v192 = vpop.f32.mrf.mxu0
  %v193 = vadd.f32 %v116, %v192
  %194 = vdwg.mxu0
  %195 = vmatpush.bf16.msra.mxu0 0
  %196 = vmatpush.bf16.msra.mxu0 0
  %197 = vmatpush.bf16.msra.mxu0 0
  %198 = vmatpush.bf16.msra.mxu0 0
  %199 = vmatpush.bf16.msra.mxu0 0
  %200 = vmatpush.bf16.msra.mxu0 0
  %201 = vmatpush.bf16.msra.mxu0 %v153
  %202 = vmatpush.bf16.msra.mxu0 %v149
  %203 = vmatmul.bf16.gmra.mxu0 %v165
  %v204 = vpop.f32.mrf.mxu0
  %v205 = vadd.f32 %v117, %v204
  %v206 = vpop.f32.mrf.mxu0
  %v207 = vadd.f32 %v117, %v206
  %208 = vdwg.mxu0
  %209 = vmatpush.bf16.msra.mxu0 0
  %210 = vmatpush.bf16.msra.mxu0 0
  %211 = vmatpush.bf16.msra.mxu0 0
  %212 = vmatpush.bf16.msra.mxu0 0
  %213 = vmatpush.bf16.msra.mxu0 0
  %214 = vmatpush.bf16.msra.mxu0 0
  %215 = vmatpush.bf16.msra.mxu0 %v154
  %216 = vmatpush.bf16.msra.mxu0 %v150
  %217 = vmatmul.bf16.gmra.mxu0 %v165
  %v218 = vpop.f32.mrf.mxu0
  %v219 = vadd.f32 %v118, %v218
  %v220 = vpop.f32.mrf.mxu0
  %v221 = vadd.f32 %v118, %v220
  %222 = vdwg.mxu0
  %v223 = vmul.f32 %v177, 0.01
  %v224 = vmul.f32 %v191, 0.01
  %v225 = vmul.f32 %v205, 0.01
  %v226 = vmul.f32 %v219, 0.01
  %v227 = vmul.f32 %v179, 0.01
  %v228 = vmul.f32 %v193, 0.01
  %v229 = vmul.f32 %v207, 0.01
  %v230 = vmul.f32 %v221, 0.01
  %v231 = vmax.f32 %v177, %v223
  %v232 = vmax.f32 %v191, %v224
  %v233 = vmax.f32 %v205, %v225
  %v234 = vmax.f32 %v219, %v226
  %v235 = vmax.f32 %v179, %v227
  %v236 = vmax.f32 %v193, %v228
  %v237 = vmax.f32 %v207, %v229
  %v238 = vmax.f32 %v221, %v230
  %s239 = smul.u32 4, 64
  %s240 = smul.u32 %s239, 4
  %s241 = sshll.u32 %s240, 4
  %242 = dma.done %s42, %s241
  %v243 = vpack.c.bf16 %v235, %v231
  %v244 = vpack.c.bf16 %v236, %v232
  %v245 = vpack.c.bf16 %v237, %v233
  %v246 = vpack.c.bf16 %v238, %v234
  %v247 = vld [vmem:[#allocation3] sm:$0xff]
  %v248 = vld [vmem:[#allocation3 + $0x8] sm:$0xff]
  %v249 = vld [vmem:[#allocation3 + $0x10] sm:$0xff]
  %v250 = vld [vmem:[#allocation3 + $0x18] sm:$0xff]
  %v251 = vld [vmem:[#allocation3 + $0x20] sm:$0xff]
  %v252 = vld [vmem:[#allocation3 + $0x28] sm:$0xff]
  %v253 = vld [vmem:[#allocation3 + $0x30] sm:$0xff]
  %v254 = vld [vmem:[#allocation3 + $0x38] sm:$0xff]
  %v255 = vld [vmem:[#allocation3 + $0x40] sm:$0xff]
  %v256 = vld [vmem:[#allocation3 + $0x48] sm:$0xff]
  %v257 = vld [vmem:[#allocation3 + $0x50] sm:$0xff]
  %v258 = vld [vmem:[#allocation3 + $0x58] sm:$0xff]
  %v259 = vld [vmem:[#allocation3 + $0x60] sm:$0xff]
  %v260 = vld [vmem:[#allocation3 + $0x68] sm:$0xff]
  %v261 = vld [vmem:[#allocation3 + $0x70] sm:$0xff]
  %v262 = vld [vmem:[#allocation3 + $0x78] sm:$0xff]
  %v263 = vld [vmem:[#allocation3 + $0x80] sm:$0xff]
  %v264 = vld [vmem:[#allocation3 + $0x88] sm:$0xff]
  %v265 = vld [vmem:[#allocation3 + $0x90] sm:$0xff]
  %v266 = vld [vmem:[#allocation3 + $0x98] sm:$0xff]
  %v267 = vld [vmem:[#allocation3 + $0xa0] sm:$0xff]
  %v268 = vld [vmem:[#allocation3 + $0xa8] sm:$0xff]
  %v269 = vld [vmem:[#allocation3 + $0xb0] sm:$0xff]
  %v270 = vld [vmem:[#allocation3 + $0xb8] sm:$0xff]
  %v271 = vld [vmem:[#allocation3 + $0xc0] sm:$0xff]
  %v272 = vld [vmem:[#allocation3 + $0xc8] sm:$0xff]
  %v273 = vld [vmem:[#allocation3 + $0xd0] sm:$0xff]
  %v274 = vld [vmem:[#allocation3 + $0xd8] sm:$0xff]
  %v275 = vld [vmem:[#allocation3 + $0xe0] sm:$0xff]
  %v276 = vld [vmem:[#allocation3 + $0xe8] sm:$0xff]
  %v277 = vld [vmem:[#allocation3 + $0xf0] sm:$0xff]
  %v278 = vld [vmem:[#allocation3 + $0xf8] sm:$0xff]
  %v279 = vld [vmem:[#allocation3 + $0x100] sm:$0xff]
  %v280 = vld [vmem:[#allocation3 + $0x108] sm:$0xff]
  %v281 = vld [vmem:[#allocation3 + $0x110] sm:$0xff]
  %v282 = vld [vmem:[#allocation3 + $0x118] sm:$0xff]
  %v283 = vld [vmem:[#allocation3 + $0x120] sm:$0xff]
  %v284 = vld [vmem:[#allocation3 + $0x128] sm:$0xff]
  %v285 = vld [vmem:[#allocation3 + $0x130] sm:$0xff]
  %v286 = vld [vmem:[#allocation3 + $0x138] sm:$0xff]
  %v287 = vld [vmem:[#allocation3 + $0x140] sm:$0xff]
  %v288 = vld [vmem:[#allocation3 + $0x148] sm:$0xff]
  %v289 = vld [vmem:[#allocation3 + $0x150] sm:$0xff]
  %v290 = vld [vmem:[#allocation3 + $0x158] sm:$0xff]
  %v291 = vld [vmem:[#allocation3 + $0x160] sm:$0xff]
  %v292 = vld [vmem:[#allocation3 + $0x168] sm:$0xff]
  %v293 = vld [vmem:[#allocation3 + $0x170] sm:$0xff]
  %v294 = vld [vmem:[#allocation3 + $0x178] sm:$0xff]
  %v295 = vld [vmem:[#allocation3 + $0x180] sm:$0xff]
  %v296 = vld [vmem:[#allocation3 + $0x188] sm:$0xff]
  %v297 = vld [vmem:[#allocation3 + $0x190] sm:$0xff]
  %v298 = vld [vmem:[#allocation3 + $0x198] sm:$0xff]
  %v299 = vld [vmem:[#allocation3 + $0x1a0] sm:$0xff]
  %v300 = vld [vmem:[#allocation3 + $0x1a8] sm:$0xff]
  %v301 = vld [vmem:[#allocation3 + $0x1b0] sm:$0xff]
  %v302 = vld [vmem:[#allocation3 + $0x1b8] sm:$0xff]
  %v303 = vld [vmem:[#allocation3 + $0x1c0] sm:$0xff]
  %v304 = vld [vmem:[#allocation3 + $0x1c8] sm:$0xff]
  %v305 = vld [vmem:[#allocation3 + $0x1d0] sm:$0xff]
  %v306 = vld [vmem:[#allocation3 + $0x1d8] sm:$0xff]
  %v307 = vld [vmem:[#allocation3 + $0x1e0] sm:$0xff]
  %v308 = vld [vmem:[#allocation3 + $0x1e8] sm:$0xff]
  %v309 = vld [vmem:[#allocation3 + $0x1f0] sm:$0xff]
  %v310 = vld [vmem:[#allocation3 + $0x1f8] sm:$0xff]
  %v311 = vld [vmem:[#allocation3 + $0x200] sm:$0xff]
  %v312 = vld [vmem:[#allocation3 + $0x208] sm:$0xff]
  %v313 = vld [vmem:[#allocation3 + $0x210] sm:$0xff]
  %v314 = vld [vmem:[#allocation3 + $0x218] sm:$0xff]
  %v315 = vld [vmem:[#allocation3 + $0x220] sm:$0xff]
  %v316 = vld [vmem:[#allocation3 + $0x228] sm:$0xff]
  %v317 = vld [vmem:[#allocation3 + $0x230] sm:$0xff]
  %v318 = vld [vmem:[#allocation3 + $0x238] sm:$0xff]
  %v319 = vld [vmem:[#allocation3 + $0x240] sm:$0xff]
  %v320 = vld [vmem:[#allocation3 + $0x248] sm:$0xff]
  %v321 = vld [vmem:[#allocation3 + $0x250] sm:$0xff]
  %v322 = vld [vmem:[#allocation3 + $0x258] sm:$0xff]
  %v323 = vld [vmem:[#allocation3 + $0x260] sm:$0xff]
  %v324 = vld [vmem:[#allocation3 + $0x268] sm:$0xff]
  %v325 = vld [vmem:[#allocation3 + $0x270] sm:$0xff]
  %v326 = vld [vmem:[#allocation3 + $0x278] sm:$0xff]
  %v327 = vld [vmem:[#allocation3 + $0x280] sm:$0xff]
  %v328 = vld [vmem:[#allocation3 + $0x288] sm:$0xff]
  %v329 = vld [vmem:[#allocation3 + $0x290] sm:$0xff]
  %v330 = vld [vmem:[#allocation3 + $0x298] sm:$0xff]
  %v331 = vld [vmem:[#allocation3 + $0x2a0] sm:$0xff]
  %v332 = vld [vmem:[#allocation3 + $0x2a8] sm:$0xff]
  %v333 = vld [vmem:[#allocation3 + $0x2b0] sm:$0xff]
  %v334 = vld [vmem:[#allocation3 + $0x2b8] sm:$0xff]
  %v335 = vld [vmem:[#allocation3 + $0x2c0] sm:$0xff]
  %v336 = vld [vmem:[#allocation3 + $0x2c8] sm:$0xff]
  %v337 = vld [vmem:[#allocation3 + $0x2d0] sm:$0xff]
  %v338 = vld [vmem:[#allocation3 + $0x2d8] sm:$0xff]
  %v339 = vld [vmem:[#allocation3 + $0x2e0] sm:$0xff]
  %v340 = vld [vmem:[#allocation3 + $0x2e8] sm:$0xff]
  %v341 = vld [vmem:[#allocation3 + $0x2f0] sm:$0xff]
  %v342 = vld [vmem:[#allocation3 + $0x2f8] sm:$0xff]
  %v343 = vld [vmem:[#allocation3 + $0x300] sm:$0xff]
  %v344 = vld [vmem:[#allocation3 + $0x308] sm:$0xff]
  %v345 = vld [vmem:[#allocation3 + $0x310] sm:$0xff]
  %v346 = vld [vmem:[#allocation3 + $0x318] sm:$0xff]
  %v347 = vld [vmem:[#allocation3 + $0x320] sm:$0xff]
  %v348 = vld [vmem:[#allocation3 + $0x328] sm:$0xff]
  %v349 = vld [vmem:[#allocation3 + $0x330] sm:$0xff]
  %v350 = vld [vmem:[#allocation3 + $0x338] sm:$0xff]
  %v351 = vld [vmem:[#allocation3 + $0x340] sm:$0xff]
  %v352 = vld [vmem:[#allocation3 + $0x348] sm:$0xff]
  %v353 = vld [vmem:[#allocation3 + $0x350] sm:$0xff]
  %v354 = vld [vmem:[#allocation3 + $0x358] sm:$0xff]
  %v355 = vld [vmem:[#allocation3 + $0x360] sm:$0xff]
  %v356 = vld [vmem:[#allocation3 + $0x368] sm:$0xff]
  %v357 = vld [vmem:[#allocation3 + $0x370] sm:$0xff]
  %v358 = vld [vmem:[#allocation3 + $0x378] sm:$0xff]
  %v359 = vld [vmem:[#allocation3 + $0x380] sm:$0xff]
  %v360 = vld [vmem:[#allocation3 + $0x388] sm:$0xff]
  %v361 = vld [vmem:[#allocation3 + $0x390] sm:$0xff]
  %v362 = vld [vmem:[#allocation3 + $0x398] sm:$0xff]
  %v363 = vld [vmem:[#allocation3 + $0x3a0] sm:$0xff]
  %v364 = vld [vmem:[#allocation3 + $0x3a8] sm:$0xff]
  %v365 = vld [vmem:[#allocation3 + $0x3b0] sm:$0xff]
  %v366 = vld [vmem:[#allocation3 + $0x3b8] sm:$0xff]
  %v367 = vld [vmem:[#allocation3 + $0x3c0] sm:$0xff]
  %v368 = vld [vmem:[#allocation3 + $0x3c8] sm:$0xff]
  %v369 = vld [vmem:[#allocation3 + $0x3d0] sm:$0xff]
  %v370 = vld [vmem:[#allocation3 + $0x3d8] sm:$0xff]
  %v371 = vld [vmem:[#allocation3 + $0x3e0] sm:$0xff]
  %v372 = vld [vmem:[#allocation3 + $0x3e8] sm:$0xff]
  %v373 = vld [vmem:[#allocation3 + $0x3f0] sm:$0xff]
  %v374 = vld [vmem:[#allocation3 + $0x3f8] sm:$0xff]
  %v375 = vld [vmem:[%s2] sm:$0xf]
  %v377 = vperm.slane %v375, 0
  %v378 = vperm.slane %v375, 1
  %v379 = vperm.slane %v375, 2
  %v380 = vperm.slane %v375, 3
  %v513 = vunpack.c.l.b16 %v247
  %v514 = vunpack.c.h.b16 %v247
  %v515 = vunpack.c.l.b16 %v248
  %v516 = vunpack.c.h.b16 %v248
  %v517 = vunpack.c.l.b16 %v249
  %v518 = vunpack.c.h.b16 %v249
  %v519 = vunpack.c.l.b16 %v250
  %v520 = vunpack.c.h.b16 %v250
  %v521 = vunpack.c.l.b16 %v251
  %v522 = vunpack.c.h.b16 %v251
  %v523 = vunpack.c.l.b16 %v252
  %v524 = vunpack.c.h.b16 %v252
  %v525 = vunpack.c.l.b16 %v253
  %v526 = vunpack.c.h.b16 %v253
  %v527 = vunpack.c.l.b16 %v254
  %v528 = vunpack.c.h.b16 %v254
  %v529 = vunpack.c.l.b16 %v255
  %v530 = vunpack.c.h.b16 %v255
  %v531 = vunpack.c.l.b16 %v256
  %v532 = vunpack.c.h.b16 %v256
  %v533 = vunpack.c.l.b16 %v257
  %v534 = vunpack.c.h.b16 %v257
  %v535 = vunpack.c.l.b16 %v258
  %v536 = vunpack.c.h.b16 %v258
  %v537 = vunpack.c.l.b16 %v259
  %v538 = vunpack.c.h.b16 %v259
  %v539 = vunpack.c.l.b16 %v260
  %v540 = vunpack.c.h.b16 %v260
  %v541 = vunpack.c.l.b16 %v261
  %v542 = vunpack.c.h.b16 %v261
  %v543 = vunpack.c.l.b16 %v262
  %v544 = vunpack.c.h.b16 %v262
  %v545 = vunpack.c.l.b16 %v263
  %v546 = vunpack.c.h.b16 %v263
  %v547 = vunpack.c.l.b16 %v264
  %v548 = vunpack.c.h.b16 %v264
  %v549 = vunpack.c.l.b16 %v265
  %v550 = vunpack.c.h.b16 %v265
  %v551 = vunpack.c.l.b16 %v266
  %v552 = vunpack.c.h.b16 %v266
  %v553 = vunpack.c.l.b16 %v267
  %v554 = vunpack.c.h.b16 %v267
  %v555 = vunpack.c.l.b16 %v268
  %v556 = vunpack.c.h.b16 %v268
  %v557 = vunpack.c.l.b16 %v269
  %v558 = vunpack.c.h.b16 %v269
  %v559 = vunpack.c.l.b16 %v270
  %v560 = vunpack.c.h.b16 %v270
  %v561 = vunpack.c.l.b16 %v271
  %v562 = vunpack.c.h.b16 %v271
  %v563 = vunpack.c.l.b16 %v272
  %v564 = vunpack.c.h.b16 %v272
  %v565 = vunpack.c.l.b16 %v273
  %v566 = vunpack.c.h.b16 %v273
  %v567 = vunpack.c.l.b16 %v274
  %v568 = vunpack.c.h.b16 %v274
  %v569 = vunpack.c.l.b16 %v275
  %v570 = vunpack.c.h.b16 %v275
  %v571 = vunpack.c.l.b16 %v276
  %v572 = vunpack.c.h.b16 %v276
  %v573 = vunpack.c.l.b16 %v277
  %v574 = vunpack.c.h.b16 %v277
  %v575 = vunpack.c.l.b16 %v278
  %v576 = vunpack.c.h.b16 %v278
  %v577 = vunpack.c.l.b16 %v279
  %v578 = vunpack.c.h.b16 %v279
  %v579 = vunpack.c.l.b16 %v280
  %v580 = vunpack.c.h.b16 %v280
  %v581 = vunpack.c.l.b16 %v281
  %v582 = vunpack.c.h.b16 %v281
  %v583 = vunpack.c.l.b16 %v282
  %v584 = vunpack.c.h.b16 %v282
  %v585 = vunpack.c.l.b16 %v283
  %v586 = vunpack.c.h.b16 %v283
  %v587 = vunpack.c.l.b16 %v284
  %v588 = vunpack.c.h.b16 %v284
  %v589 = vunpack.c.l.b16 %v285
  %v590 = vunpack.c.h.b16 %v285
  %v591 = vunpack.c.l.b16 %v286
  %v592 = vunpack.c.h.b16 %v286
  %v593 = vunpack.c.l.b16 %v287
  %v594 = vunpack.c.h.b16 %v287
  %v595 = vunpack.c.l.b16 %v288
  %v596 = vunpack.c.h.b16 %v288
  %v597 = vunpack.c.l.b16 %v289
  %v598 = vunpack.c.h.b16 %v289
  %v599 = vunpack.c.l.b16 %v290
  %v600 = vunpack.c.h.b16 %v290
  %v601 = vunpack.c.l.b16 %v291
  %v602 = vunpack.c.h.b16 %v291
  %v603 = vunpack.c.l.b16 %v292
  %v604 = vunpack.c.h.b16 %v292
  %v605 = vunpack.c.l.b16 %v293
  %v606 = vunpack.c.h.b16 %v293
  %v607 = vunpack.c.l.b16 %v294
  %v608 = vunpack.c.h.b16 %v294
  %v609 = vunpack.c.l.b16 %v295
  %v610 = vunpack.c.h.b16 %v295
  %v611 = vunpack.c.l.b16 %v296
  %v612 = vunpack.c.h.b16 %v296
  %v613 = vunpack.c.l.b16 %v297
  %v614 = vunpack.c.h.b16 %v297
  %v615 = vunpack.c.l.b16 %v298
  %v616 = vunpack.c.h.b16 %v298
  %v617 = vunpack.c.l.b16 %v299
  %v618 = vunpack.c.h.b16 %v299
  %v619 = vunpack.c.l.b16 %v300
  %v620 = vunpack.c.h.b16 %v300
  %v621 = vunpack.c.l.b16 %v301
  %v622 = vunpack.c.h.b16 %v301
  %v623 = vunpack.c.l.b16 %v302
  %v624 = vunpack.c.h.b16 %v302
  %v625 = vunpack.c.l.b16 %v303
  %v626 = vunpack.c.h.b16 %v303
  %v627 = vunpack.c.l.b16 %v304
  %v628 = vunpack.c.h.b16 %v304
  %v629 = vunpack.c.l.b16 %v305
  %v630 = vunpack.c.h.b16 %v305
  %v631 = vunpack.c.l.b16 %v306
  %v632 = vunpack.c.h.b16 %v306
  %v633 = vunpack.c.l.b16 %v307
  %v634 = vunpack.c.h.b16 %v307
  %v635 = vunpack.c.l.b16 %v308
  %v636 = vunpack.c.h.b16 %v308
  %v637 = vunpack.c.l.b16 %v309
  %v638 = vunpack.c.h.b16 %v309
  %v639 = vunpack.c.l.b16 %v310
  %v640 = vunpack.c.h.b16 %v310
  %v641 = vunpack.c.l.b16 %v311
  %v642 = vunpack.c.h.b16 %v311
  %v643 = vunpack.c.l.b16 %v312
  %v644 = vunpack.c.h.b16 %v312
  %v645 = vunpack.c.l.b16 %v313
  %v646 = vunpack.c.h.b16 %v313
  %v647 = vunpack.c.l.b16 %v314
  %v648 = vunpack.c.h.b16 %v314
  %v649 = vunpack.c.l.b16 %v315
  %v650 = vunpack.c.h.b16 %v315
  %v651 = vunpack.c.l.b16 %v316
  %v652 = vunpack.c.h.b16 %v316
  %v653 = vunpack.c.l.b16 %v317
  %v654 = vunpack.c.h.b16 %v317
  %v655 = vunpack.c.l.b16 %v318
  %v656 = vunpack.c.h.b16 %v318
  %v657 = vunpack.c.l.b16 %v319
  %v658 = vunpack.c.h.b16 %v319
  %v659 = vunpack.c.l.b16 %v320
  %v660 = vunpack.c.h.b16 %v320
  %v661 = vunpack.c.l.b16 %v321
  %v662 = vunpack.c.h.b16 %v321
  %v663 = vunpack.c.l.b16 %v322
  %v664 = vunpack.c.h.b16 %v322
  %v665 = vunpack.c.l.b16 %v323
  %v666 = vunpack.c.h.b16 %v323
  %v667 = vunpack.c.l.b16 %v324
  %v668 = vunpack.c.h.b16 %v324
  %v669 = vunpack.c.l.b16 %v325
  %v670 = vunpack.c.h.b16 %v325
  %v671 = vunpack.c.l.b16 %v326
  %v672 = vunpack.c.h.b16 %v326
  %v673 = vunpack.c.l.b16 %v327
  %v674 = vunpack.c.h.b16 %v327
  %v675 = vunpack.c.l.b16 %v328
  %v676 = vunpack.c.h.b16 %v328
  %v677 = vunpack.c.l.b16 %v329
  %v678 = vunpack.c.h.b16 %v329
  %v679 = vunpack.c.l.b16 %v330
  %v680 = vunpack.c.h.b16 %v330
  %v681 = vunpack.c.l.b16 %v331
  %v682 = vunpack.c.h.b16 %v331
  %v683 = vunpack.c.l.b16 %v332
  %v684 = vunpack.c.h.b16 %v332
  %v685 = vunpack.c.l.b16 %v333
  %v686 = vunpack.c.h.b16 %v333
  %v687 = vunpack.c.l.b16 %v334
  %v688 = vunpack.c.h.b16 %v334
  %v689 = vunpack.c.l.b16 %v335
  %v690 = vunpack.c.h.b16 %v335
  %v691 = vunpack.c.l.b16 %v336
  %v692 = vunpack.c.h.b16 %v336
  %v693 = vunpack.c.l.b16 %v337
  %v694 = vunpack.c.h.b16 %v337
  %v695 = vunpack.c.l.b16 %v338
  %v696 = vunpack.c.h.b16 %v338
  %v697 = vunpack.c.l.b16 %v339
  %v698 = vunpack.c.h.b16 %v339
  %v699 = vunpack.c.l.b16 %v340
  %v700 = vunpack.c.h.b16 %v340
  %v701 = vunpack.c.l.b16 %v341
  %v702 = vunpack.c.h.b16 %v341
  %v703 = vunpack.c.l.b16 %v342
  %v704 = vunpack.c.h.b16 %v342
  %v705 = vunpack.c.l.b16 %v343
  %v706 = vunpack.c.h.b16 %v343
  %v707 = vunpack.c.l.b16 %v344
  %v708 = vunpack.c.h.b16 %v344
  %v709 = vunpack.c.l.b16 %v345
  %v710 = vunpack.c.h.b16 %v345
  %v711 = vunpack.c.l.b16 %v346
  %v712 = vunpack.c.h.b16 %v346
  %v713 = vunpack.c.l.b16 %v347
  %v714 = vunpack.c.h.b16 %v347
  %v715 = vunpack.c.l.b16 %v348
  %v716 = vunpack.c.h.b16 %v348
  %v717 = vunpack.c.l.b16 %v349
  %v718 = vunpack.c.h.b16 %v349
  %v719 = vunpack.c.l.b16 %v350
  %v720 = vunpack.c.h.b16 %v350
  %v721 = vunpack.c.l.b16 %v351
  %v722 = vunpack.c.h.b16 %v351
  %v723 = vunpack.c.l.b16 %v352
  %v724 = vunpack.c.h.b16 %v352
  %v725 = vunpack.c.l.b16 %v353
  %v726 = vunpack.c.h.b16 %v353
  %v727 = vunpack.c.l.b16 %v354
  %v728 = vunpack.c.h.b16 %v354
  %v729 = vunpack.c.l.b16 %v355
  %v730 = vunpack.c.h.b16 %v355
  %v731 = vunpack.c.l.b16 %v356
  %v732 = vunpack.c.h.b16 %v356
  %v733 = vunpack.c.l.b16 %v357
  %v734 = vunpack.c.h.b16 %v357
  %v735 = vunpack.c.l.b16 %v358
  %v736 = vunpack.c.h.b16 %v358
  %v737 = vunpack.c.l.b16 %v359
  %v738 = vunpack.c.h.b16 %v359
  %v739 = vunpack.c.l.b16 %v360
  %v740 = vunpack.c.h.b16 %v360
  %v741 = vunpack.c.l.b16 %v361
  %v742 = vunpack.c.h.b16 %v361
  %v743 = vunpack.c.l.b16 %v362
  %v744 = vunpack.c.h.b16 %v362
  %v745 = vunpack.c.l.b16 %v363
  %v746 = vunpack.c.h.b16 %v363
  %v747 = vunpack.c.l.b16 %v364
  %v748 = vunpack.c.h.b16 %v364
  %v749 = vunpack.c.l.b16 %v365
  %v750 = vunpack.c.h.b16 %v365
  %v751 = vunpack.c.l.b16 %v366
  %v752 = vunpack.c.h.b16 %v366
  %v753 = vunpack.c.l.b16 %v367
  %v754 = vunpack.c.h.b16 %v367
  %v755 = vunpack.c.l.b16 %v368
  %v756 = vunpack.c.h.b16 %v368
  %v757 = vunpack.c.l.b16 %v369
  %v758 = vunpack.c.h.b16 %v369
  %v759 = vunpack.c.l.b16 %v370
  %v760 = vunpack.c.h.b16 %v370
  %v761 = vunpack.c.l.b16 %v371
  %v762 = vunpack.c.h.b16 %v371
  %v763 = vunpack.c.l.b16 %v372
  %v764 = vunpack.c.h.b16 %v372
  %v765 = vunpack.c.l.b16 %v373
  %v766 = vunpack.c.h.b16 %v373
  %v767 = vunpack.c.l.b16 %v374
  %v768 = vunpack.c.h.b16 %v374
  %v769 = vpack.c.b16 %v517, %v513
  %v770 = vpack.c.b16 %v518, %v514
  %v771 = vpack.c.b16 %v519, %v515
  %v772 = vpack.c.b16 %v520, %v516
  %v773 = vpack.c.b16 %v525, %v521
  %v774 = vpack.c.b16 %v526, %v522
  %v775 = vpack.c.b16 %v527, %v523
  %v776 = vpack.c.b16 %v528, %v524
  %v777 = vpack.c.b16 %v533, %v529
  %v778 = vpack.c.b16 %v534, %v530
  %v779 = vpack.c.b16 %v535, %v531
  %v780 = vpack.c.b16 %v536, %v532
  %v781 = vpack.c.b16 %v541, %v537
  %v782 = vpack.c.b16 %v542, %v538
  %v783 = vpack.c.b16 %v543, %v539
  %v784 = vpack.c.b16 %v544, %v540
  %v785 = vpack.c.b16 %v549, %v545
  %v786 = vpack.c.b16 %v550, %v546
  %v787 = vpack.c.b16 %v551, %v547
  %v788 = vpack.c.b16 %v552, %v548
  %v789 = vpack.c.b16 %v557, %v553
  %v790 = vpack.c.b16 %v558, %v554
  %v791 = vpack.c.b16 %v559, %v555
  %v792 = vpack.c.b16 %v560, %v556
  %v793 = vpack.c.b16 %v565, %v561
  %v794 = vpack.c.b16 %v566, %v562
  %v795 = vpack.c.b16 %v567, %v563
  %v796 = vpack.c.b16 %v568, %v564
  %v797 = vpack.c.b16 %v573, %v569
  %v798 = vpack.c.b16 %v574, %v570
  %v799 = vpack.c.b16 %v575, %v571
  %v800 = vpack.c.b16 %v576, %v572
  %v801 = vpack.c.b16 %v581, %v577
  %v802 = vpack.c.b16 %v582, %v578
  %v803 = vpack.c.b16 %v583, %v579
  %v804 = vpack.c.b16 %v584, %v580
  %v805 = vpack.c.b16 %v589, %v585
  %v806 = vpack.c.b16 %v590, %v586
  %v807 = vpack.c.b16 %v591, %v587
  %v808 = vpack.c.b16 %v592, %v588
  %v809 = vpack.c.b16 %v597, %v593
  %v810 = vpack.c.b16 %v598, %v594
  %v811 = vpack.c.b16 %v599, %v595
  %v812 = vpack.c.b16 %v600, %v596
  %v813 = vpack.c.b16 %v605, %v601
  %v814 = vpack.c.b16 %v606, %v602
  %v815 = vpack.c.b16 %v607, %v603
  %v816 = vpack.c.b16 %v608, %v604
  %v817 = vpack.c.b16 %v613, %v609
  %v818 = vpack.c.b16 %v614, %v610
  %v819 = vpack.c.b16 %v615, %v611
  %v820 = vpack.c.b16 %v616, %v612
  %v821 = vpack.c.b16 %v621, %v617
  %v822 = vpack.c.b16 %v622, %v618
  %v823 = vpack.c.b16 %v623, %v619
  %v824 = vpack.c.b16 %v624, %v620
  %v825 = vpack.c.b16 %v629, %v625
  %v826 = vpack.c.b16 %v630, %v626
  %v827 = vpack.c.b16 %v631, %v627
  %v828 = vpack.c.b16 %v632, %v628
  %v829 = vpack.c.b16 %v637, %v633
  %v830 = vpack.c.b16 %v638, %v634
  %v831 = vpack.c.b16 %v639, %v635
  %v832 = vpack.c.b16 %v640, %v636
  %v833 = vpack.c.b16 %v645, %v641
  %v834 = vpack.c.b16 %v646, %v642
  %v835 = vpack.c.b16 %v647, %v643
  %v836 = vpack.c.b16 %v648, %v644
  %v837 = vpack.c.b16 %v653, %v649
  %v838 = vpack.c.b16 %v654, %v650
  %v839 = vpack.c.b16 %v655, %v651
  %v840 = vpack.c.b16 %v656, %v652
  %v841 = vpack.c.b16 %v661, %v657
  %v842 = vpack.c.b16 %v662, %v658
  %v843 = vpack.c.b16 %v663, %v659
  %v844 = vpack.c.b16 %v664, %v660
  %v845 = vpack.c.b16 %v669, %v665
  %v846 = vpack.c.b16 %v670, %v666
  %v847 = vpack.c.b16 %v671, %v667
  %v848 = vpack.c.b16 %v672, %v668
  %v849 = vpack.c.b16 %v677, %v673
  %v850 = vpack.c.b16 %v678, %v674
  %v851 = vpack.c.b16 %v679, %v675
  %v852 = vpack.c.b16 %v680, %v676
  %v853 = vpack.c.b16 %v685, %v681
  %v854 = vpack.c.b16 %v686, %v682
  %v855 = vpack.c.b16 %v687, %v683
  %v856 = vpack.c.b16 %v688, %v684
  %v857 = vpack.c.b16 %v693, %v689
  %v858 = vpack.c.b16 %v694, %v690
  %v859 = vpack.c.b16 %v695, %v691
  %v860 = vpack.c.b16 %v696, %v692
  %v861 = vpack.c.b16 %v701, %v697
  %v862 = vpack.c.b16 %v702, %v698
  %v863 = vpack.c.b16 %v703, %v699
  %v864 = vpack.c.b16 %v704, %v700
  %v865 = vpack.c.b16 %v709, %v705
  %v866 = vpack.c.b16 %v710, %v706
  %v867 = vpack.c.b16 %v711, %v707
  %v868 = vpack.c.b16 %v712, %v708
  %v869 = vpack.c.b16 %v717, %v713
  %v870 = vpack.c.b16 %v718, %v714
  %v871 = vpack.c.b16 %v719, %v715
  %v872 = vpack.c.b16 %v720, %v716
  %v873 = vpack.c.b16 %v725, %v721
  %v874 = vpack.c.b16 %v726, %v722
  %v875 = vpack.c.b16 %v727, %v723
  %v876 = vpack.c.b16 %v728, %v724
  %v877 = vpack.c.b16 %v733, %v729
  %v878 = vpack.c.b16 %v734, %v730
  %v879 = vpack.c.b16 %v735, %v731
  %v880 = vpack.c.b16 %v736, %v732
  %v881 = vpack.c.b16 %v741, %v737
  %v882 = vpack.c.b16 %v742, %v738
  %v883 = vpack.c.b16 %v743, %v739
  %v884 = vpack.c.b16 %v744, %v740
  %v885 = vpack.c.b16 %v749, %v745
  %v886 = vpack.c.b16 %v750, %v746
  %v887 = vpack.c.b16 %v751, %v747
  %v888 = vpack.c.b16 %v752, %v748
  %v889 = vpack.c.b16 %v757, %v753
  %v890 = vpack.c.b16 %v758, %v754
  %v891 = vpack.c.b16 %v759, %v755
  %v892 = vpack.c.b16 %v760, %v756
  %v893 = vpack.c.b16 %v765, %v761
  %v894 = vpack.c.b16 %v766, %v762
  %v895 = vpack.c.b16 %v767, %v763
  %v896 = vpack.c.b16 %v768, %v764
  %1025 = vmatpush.bf16.msra.mxu0 %v797
  %1026 = vmatpush.bf16.msra.mxu0 %v793
  %1027 = vmatpush.bf16.msra.mxu0 %v789
  %1028 = vmatpush.bf16.msra.mxu0 %v785
  %1029 = vmatpush.bf16.msra.mxu0 %v781
  %1030 = vmatpush.bf16.msra.mxu0 %v777
  %1031 = vmatpush.bf16.msra.mxu0 %v773
  %1032 = vmatpush.bf16.msra.mxu0 %v769
  %1033 = vmatmul.bf16.gmra.mxu0 %v243
  %v1034 = vpop.f32.mrf.mxu0
  %v1035 = vadd.f32 %v377, %v1034
  %v1036 = vpop.f32.mrf.mxu0
  %v1037 = vadd.f32 %v377, %v1036
  %1038 = vdwg.mxu0
  %1039 = vmatpush.bf16.msra.mxu0 %v829
  %1040 = vmatpush.bf16.msra.mxu0 %v825
  %1041 = vmatpush.bf16.msra.mxu0 %v821
  %1042 = vmatpush.bf16.msra.mxu0 %v817
  %1043 = vmatpush.bf16.msra.mxu0 %v813
  %1044 = vmatpush.bf16.msra.mxu0 %v809
  %1045 = vmatpush.bf16.msra.mxu0 %v805
  %1046 = vmatpush.bf16.msra.mxu0 %v801
  %1047 = vmatmul.bf16.gmra.mxu0 %v244
  %v1048 = vpop.f32.mrf.mxu0
  %v1049 = vadd.f32 %v1035, %v1048
  %v1050 = vpop.f32.mrf.mxu0
  %v1051 = vadd.f32 %v1037, %v1050
  %1052 = vdwg.mxu0
  %1053 = vmatpush.bf16.msra.mxu0 %v861
  %1054 = vmatpush.bf16.msra.mxu0 %v857
  %1055 = vmatpush.bf16.msra.mxu0 %v853
  %1056 = vmatpush.bf16.msra.mxu0 %v849
  %1057 = vmatpush.bf16.msra.mxu0 %v845
  %1058 = vmatpush.bf16.msra.mxu0 %v841
  %1059 = vmatpush.bf16.msra.mxu0 %v837
  %1060 = vmatpush.bf16.msra.mxu0 %v833
  %1061 = vmatmul.bf16.gmra.mxu0 %v245
  %v1062 = vpop.f32.mrf.mxu0
  %v1063 = vadd.f32 %v1049, %v1062
  %v1064 = vpop.f32.mrf.mxu0
  %v1065 = vadd.f32 %v1051, %v1064
  %1066 = vdwg.mxu0
  %1067 = vmatpush.bf16.msra.mxu0 %v893
  %1068 = vmatpush.bf16.msra.mxu0 %v889
  %1069 = vmatpush.bf16.msra.mxu0 %v885
  %1070 = vmatpush.bf16.msra.mxu0 %v881
  %1071 = vmatpush.bf16.msra.mxu0 %v877
  %1072 = vmatpush.bf16.msra.mxu0 %v873
  %1073 = vmatpush.bf16.msra.mxu0 %v869
  %1074 = vmatpush.bf16.msra.mxu0 %v865
  %1075 = vmatmul.bf16.gmra.mxu0 %v246
  %v1076 = vpop.f32.mrf.mxu0
  %v1077 = vadd.f32 %v1063, %v1076
  %v1078 = vpop.f32.mrf.mxu0
  %v1079 = vadd.f32 %v1065, %v1078
  %1080 = vdwg.mxu0
  %1081 = vmatpush.bf16.msra.mxu0 %v798
  %1082 = vmatpush.bf16.msra.mxu0 %v794
  %1083 = vmatpush.bf16.msra.mxu0 %v790
  %1084 = vmatpush.bf16.msra.mxu0 %v786
  %1085 = vmatpush.bf16.msra.mxu0 %v782
  %1086 = vmatpush.bf16.msra.mxu0 %v778
  %1087 = vmatpush.bf16.msra.mxu0 %v774
  %1088 = vmatpush.bf16.msra.mxu0 %v770
  %1089 = vmatmul.bf16.gmra.mxu0 %v243
  %v1090 = vpop.f32.mrf.mxu0
  %v1091 = vadd.f32 %v378, %v1090
  %v1092 = vpop.f32.mrf.mxu0
  %v1093 = vadd.f32 %v378, %v1092
  %1094 = vdwg.mxu0
  %1095 = vmatpush.bf16.msra.mxu0 %v830
  %1096 = vmatpush.bf16.msra.mxu0 %v826
  %1097 = vmatpush.bf16.msra.mxu0 %v822
  %1098 = vmatpush.bf16.msra.mxu0 %v818
  %1099 = vmatpush.bf16.msra.mxu0 %v814
  %1100 = vmatpush.bf16.msra.mxu0 %v810
  %1101 = vmatpush.bf16.msra.mxu0 %v806
  %1102 = vmatpush.bf16.msra.mxu0 %v802
  %1103 = vmatmul.bf16.gmra.mxu0 %v244
  %v1104 = vpop.f32.mrf.mxu0
  %v1105 = vadd.f32 %v1091, %v1104
  %v1106 = vpop.f32.mrf.mxu0
  %v1107 = vadd.f32 %v1093, %v1106
  %1108 = vdwg.mxu0
  %1109 = vmatpush.bf16.msra.mxu0 %v862
  %1110 = vmatpush.bf16.msra.mxu0 %v858
  %1111 = vmatpush.bf16.msra.mxu0 %v854
  %1112 = vmatpush.bf16.msra.mxu0 %v850
  %1113 = vmatpush.bf16.msra.mxu0 %v846
  %1114 = vmatpush.bf16.msra.mxu0 %v842
  %1115 = vmatpush.bf16.msra.mxu0 %v838
  %1116 = vmatpush.bf16.msra.mxu0 %v834
  %1117 = vmatmul.bf16.gmra.mxu0 %v245
  %v1118 = vpop.f32.mrf.mxu0
  %v1119 = vadd.f32 %v1105, %v1118
  %v1120 = vpop.f32.mrf.mxu0
  %v1121 = vadd.f32 %v1107, %v1120
  %1122 = vdwg.mxu0
  %1123 = vmatpush.bf16.msra.mxu0 %v894
  %1124 = vmatpush.bf16.msra.mxu0 %v890
  %1125 = vmatpush.bf16.msra.mxu0 %v886
  %1126 = vmatpush.bf16.msra.mxu0 %v882
  %1127 = vmatpush.bf16.msra.mxu0 %v878
  %1128 = vmatpush.bf16.msra.mxu0 %v874
  %1129 = vmatpush.bf16.msra.mxu0 %v870
  %1130 = vmatpush.bf16.msra.mxu0 %v866
  %1131 = vmatmul.bf16.gmra.mxu0 %v246
  %v1132 = vpop.f32.mrf.mxu0
  %v1133 = vadd.f32 %v1119, %v1132
  %v1134 = vpop.f32.mrf.mxu0
  %v1135 = vadd.f32 %v1121, %v1134
  %1136 = vdwg.mxu0
  %1137 = vmatpush.bf16.msra.mxu0 %v799
  %1138 = vmatpush.bf16.msra.mxu0 %v795
  %1139 = vmatpush.bf16.msra.mxu0 %v791
  %1140 = vmatpush.bf16.msra.mxu0 %v787
  %1141 = vmatpush.bf16.msra.mxu0 %v783
  %1142 = vmatpush.bf16.msra.mxu0 %v779
  %1143 = vmatpush.bf16.msra.mxu0 %v775
  %1144 = vmatpush.bf16.msra.mxu0 %v771
  %1145 = vmatmul.bf16.gmra.mxu0 %v243
  %v1146 = vpop.f32.mrf.mxu0
  %v1147 = vadd.f32 %v379, %v1146
  %v1148 = vpop.f32.mrf.mxu0
  %v1149 = vadd.f32 %v379, %v1148
  %1150 = vdwg.mxu0
  %1151 = vmatpush.bf16.msra.mxu0 %v831
  %1152 = vmatpush.bf16.msra.mxu0 %v827
  %1153 = vmatpush.bf16.msra.mxu0 %v823
  %1154 = vmatpush.bf16.msra.mxu0 %v819
  %1155 = vmatpush.bf16.msra.mxu0 %v815
  %1156 = vmatpush.bf16.msra.mxu0 %v811
  %1157 = vmatpush.bf16.msra.mxu0 %v807
  %1158 = vmatpush.bf16.msra.mxu0 %v803
  %1159 = vmatmul.bf16.gmra.mxu0 %v244
  %v1160 = vpop.f32.mrf.mxu0
  %v1161 = vadd.f32 %v1147, %v1160
  %v1162 = vpop.f32.mrf.mxu0
  %v1163 = vadd.f32 %v1149, %v1162
  %1164 = vdwg.mxu0
  %1165 = vmatpush.bf16.msra.mxu0 %v863
  %1166 = vmatpush.bf16.msra.mxu0 %v859
  %1167 = vmatpush.bf16.msra.mxu0 %v855
  %1168 = vmatpush.bf16.msra.mxu0 %v851
  %1169 = vmatpush.bf16.msra.mxu0 %v847
  %1170 = vmatpush.bf16.msra.mxu0 %v843
  %1171 = vmatpush.bf16.msra.mxu0 %v839
  %1172 = vmatpush.bf16.msra.mxu0 %v835
  %1173 = vmatmul.bf16.gmra.mxu0 %v245
  %v1174 = vpop.f32.mrf.mxu0
  %v1175 = vadd.f32 %v1161, %v1174
  %v1176 = vpop.f32.mrf.mxu0
  %v1177 = vadd.f32 %v1163, %v1176
  %1178 = vdwg.mxu0
  %1179 = vmatpush.bf16.msra.mxu0 %v895
  %1180 = vmatpush.bf16.msra.mxu0 %v891
  %1181 = vmatpush.bf16.msra.mxu0 %v887
  %1182 = vmatpush.bf16.msra.mxu0 %v883
  %1183 = vmatpush.bf16.msra.mxu0 %v879
  %1184 = vmatpush.bf16.msra.mxu0 %v875
  %1185 = vmatpush.bf16.msra.mxu0 %v871
  %1186 = vmatpush.bf16.msra.mxu0 %v867
  %1187 = vmatmul.bf16.gmra.mxu0 %v246
  %v1188 = vpop.f32.mrf.mxu0
  %v1189 = vadd.f32 %v1175, %v1188
  %v1190 = vpop.f32.mrf.mxu0
  %v1191 = vadd.f32 %v1177, %v1190
  %1192 = vdwg.mxu0
  %1193 = vmatpush.bf16.msra.mxu0 %v800
  %1194 = vmatpush.bf16.msra.mxu0 %v796
  %1195 = vmatpush.bf16.msra.mxu0 %v792
  %1196 = vmatpush.bf16.msra.mxu0 %v788
  %1197 = vmatpush.bf16.msra.mxu0 %v784
  %1198 = vmatpush.bf16.msra.mxu0 %v780
  %1199 = vmatpush.bf16.msra.mxu0 %v776
  %1200 = vmatpush.bf16.msra.mxu0 %v772
  %1201 = vmatmul.bf16.gmra.mxu0 %v243
  %v1202 = vpop.f32.mrf.mxu0
  %v1203 = vadd.f32 %v380, %v1202
  %v1204 = vpop.f32.mrf.mxu0
  %v1205 = vadd.f32 %v380, %v1204
  %1206 = vdwg.mxu0
  %1207 = vmatpush.bf16.msra.mxu0 %v832
  %1208 = vmatpush.bf16.msra.mxu0 %v828
  %1209 = vmatpush.bf16.msra.mxu0 %v824
  %1210 = vmatpush.bf16.msra.mxu0 %v820
  %1211 = vmatpush.bf16.msra.mxu0 %v816
  %1212 = vmatpush.bf16.msra.mxu0 %v812
  %1213 = vmatpush.bf16.msra.mxu0 %v808
  %1214 = vmatpush.bf16.msra.mxu0 %v804
  %1215 = vmatmul.bf16.gmra.mxu0 %v244
  %v1216 = vpop.f32.mrf.mxu0
  %v1217 = vadd.f32 %v1203, %v1216
  %v1218 = vpop.f32.mrf.mxu0
  %v1219 = vadd.f32 %v1205, %v1218
  %1220 = vdwg.mxu0
  %1221 = vmatpush.bf16.msra.mxu0 %v864
  %1222 = vmatpush.bf16.msra.mxu0 %v860
  %1223 = vmatpush.bf16.msra.mxu0 %v856
  %1224 = vmatpush.bf16.msra.mxu0 %v852
  %1225 = vmatpush.bf16.msra.mxu0 %v848
  %1226 = vmatpush.bf16.msra.mxu0 %v844
  %1227 = vmatpush.bf16.msra.mxu0 %v840
  %1228 = vmatpush.bf16.msra.mxu0 %v836
  %1229 = vmatmul.bf16.gmra.mxu0 %v245
  %v1230 = vpop.f32.mrf.mxu0
  %v1231 = vadd.f32 %v1217, %v1230
  %v1232 = vpop.f32.mrf.mxu0
  %v1233 = vadd.f32 %v1219, %v1232
  %1234 = vdwg.mxu0
  %1235 = vmatpush.bf16.msra.mxu0 %v896
  %1236 = vmatpush.bf16.msra.mxu0 %v892
  %1237 = vmatpush.bf16.msra.mxu0 %v888
  %1238 = vmatpush.bf16.msra.mxu0 %v884
  %1239 = vmatpush.bf16.msra.mxu0 %v880
  %1240 = vmatpush.bf16.msra.mxu0 %v876
  %1241 = vmatpush.bf16.msra.mxu0 %v872
  %1242 = vmatpush.bf16.msra.mxu0 %v868
  %1243 = vmatmul.bf16.gmra.mxu0 %v246
  %v1244 = vpop.f32.mrf.mxu0
  %v1245 = vadd.f32 %v1231, %v1244
  %v1246 = vpop.f32.mrf.mxu0
  %v1247 = vadd.f32 %v1233, %v1246
  %1248 = vdwg.mxu0
  %v1249 = vmul.f32 %v1077, 0.01
  %v1250 = vmul.f32 %v1133, 0.01
  %v1251 = vmul.f32 %v1189, 0.01
  %v1252 = vmul.f32 %v1245, 0.01
  %v1253 = vmul.f32 %v1079, 0.01
  %v1254 = vmul.f32 %v1135, 0.01
  %v1255 = vmul.f32 %v1191, 0.01
  %v1256 = vmul.f32 %v1247, 0.01
  %v1257 = vmax.f32 %v1077, %v1249
  %v1258 = vmax.f32 %v1133, %v1250
  %v1259 = vmax.f32 %v1189, %v1251
  %v1260 = vmax.f32 %v1245, %v1252
  %v1261 = vmax.f32 %v1079, %v1253
  %v1262 = vmax.f32 %v1135, %v1254
  %v1263 = vmax.f32 %v1191, %v1255
  %v1264 = vmax.f32 %v1247, %v1256
  %s1265 = sshll.u32 %s240, 4
  %1266 = dma.done %s56, %s1265
  %v1267 = vpack.c.bf16 %v1261, %v1257
  %v1268 = vpack.c.bf16 %v1262, %v1258
  %v1269 = vpack.c.bf16 %v1263, %v1259
  %v1270 = vpack.c.bf16 %v1264, %v1260
  %v1271 = vld [vmem:[#allocation4] sm:$0xff]
  %v1272 = vld [vmem:[#allocation4 + $0x8] sm:$0xff]
  %v1273 = vld [vmem:[#allocation4 + $0x10] sm:$0xff]
  %v1274 = vld [vmem:[#allocation4 + $0x18] sm:$0xff]
  %v1275 = vld [vmem:[#allocation4 + $0x20] sm:$0xff]
  %v1276 = vld [vmem:[#allocation4 + $0x28] sm:$0xff]
  %v1277 = vld [vmem:[#allocation4 + $0x30] sm:$0xff]
  %v1278 = vld [vmem:[#allocation4 + $0x38] sm:$0xff]
  %v1279 = vld [vmem:[#allocation4 + $0x40] sm:$0xff]
  %v1280 = vld [vmem:[#allocation4 + $0x48] sm:$0xff]
  %v1281 = vld [vmem:[#allocation4 + $0x50] sm:$0xff]
  %v1282 = vld [vmem:[#allocation4 + $0x58] sm:$0xff]
  %v1283 = vld [vmem:[#allocation4 + $0x60] sm:$0xff]
  %v1284 = vld [vmem:[#allocation4 + $0x68] sm:$0xff]
  %v1285 = vld [vmem:[#allocation4 + $0x70] sm:$0xff]
  %v1286 = vld [vmem:[#allocation4 + $0x78] sm:$0xff]
  %v1287 = vld [vmem:[#allocation4 + $0x80] sm:$0xff]
  %v1288 = vld [vmem:[#allocation4 + $0x88] sm:$0xff]
  %v1289 = vld [vmem:[#allocation4 + $0x90] sm:$0xff]
  %v1290 = vld [vmem:[#allocation4 + $0x98] sm:$0xff]
  %v1291 = vld [vmem:[#allocation4 + $0xa0] sm:$0xff]
  %v1292 = vld [vmem:[#allocation4 + $0xa8] sm:$0xff]
  %v1293 = vld [vmem:[#allocation4 + $0xb0] sm:$0xff]
  %v1294 = vld [vmem:[#allocation4 + $0xb8] sm:$0xff]
  %v1295 = vld [vmem:[#allocation4 + $0xc0] sm:$0xff]
  %v1296 = vld [vmem:[#allocation4 + $0xc8] sm:$0xff]
  %v1297 = vld [vmem:[#allocation4 + $0xd0] sm:$0xff]
  %v1298 = vld [vmem:[#allocation4 + $0xd8] sm:$0xff]
  %v1299 = vld [vmem:[#allocation4 + $0xe0] sm:$0xff]
  %v1300 = vld [vmem:[#allocation4 + $0xe8] sm:$0xff]
  %v1301 = vld [vmem:[#allocation4 + $0xf0] sm:$0xff]
  %v1302 = vld [vmem:[#allocation4 + $0xf8] sm:$0xff]
  %v1303 = vld [vmem:[#allocation4 + $0x100] sm:$0xff]
  %v1304 = vld [vmem:[#allocation4 + $0x108] sm:$0xff]
  %v1305 = vld [vmem:[#allocation4 + $0x110] sm:$0xff]
  %v1306 = vld [vmem:[#allocation4 + $0x118] sm:$0xff]
  %v1307 = vld [vmem:[#allocation4 + $0x120] sm:$0xff]
  %v1308 = vld [vmem:[#allocation4 + $0x128] sm:$0xff]
  %v1309 = vld [vmem:[#allocation4 + $0x130] sm:$0xff]
  %v1310 = vld [vmem:[#allocation4 + $0x138] sm:$0xff]
  %v1311 = vld [vmem:[#allocation4 + $0x140] sm:$0xff]
  %v1312 = vld [vmem:[#allocation4 + $0x148] sm:$0xff]
  %v1313 = vld [vmem:[#allocation4 + $0x150] sm:$0xff]
  %v1314 = vld [vmem:[#allocation4 + $0x158] sm:$0xff]
  %v1315 = vld [vmem:[#allocation4 + $0x160] sm:$0xff]
  %v1316 = vld [vmem:[#allocation4 + $0x168] sm:$0xff]
  %v1317 = vld [vmem:[#allocation4 + $0x170] sm:$0xff]
  %v1318 = vld [vmem:[#allocation4 + $0x178] sm:$0xff]
  %v1319 = vld [vmem:[#allocation4 + $0x180] sm:$0xff]
  %v1320 = vld [vmem:[#allocation4 + $0x188] sm:$0xff]
  %v1321 = vld [vmem:[#allocation4 + $0x190] sm:$0xff]
  %v1322 = vld [vmem:[#allocation4 + $0x198] sm:$0xff]
  %v1323 = vld [vmem:[#allocation4 + $0x1a0] sm:$0xff]
  %v1324 = vld [vmem:[#allocation4 + $0x1a8] sm:$0xff]
  %v1325 = vld [vmem:[#allocation4 + $0x1b0] sm:$0xff]
  %v1326 = vld [vmem:[#allocation4 + $0x1b8] sm:$0xff]
  %v1327 = vld [vmem:[#allocation4 + $0x1c0] sm:$0xff]
  %v1328 = vld [vmem:[#allocation4 + $0x1c8] sm:$0xff]
  %v1329 = vld [vmem:[#allocation4 + $0x1d0] sm:$0xff]
  %v1330 = vld [vmem:[#allocation4 + $0x1d8] sm:$0xff]
  %v1331 = vld [vmem:[#allocation4 + $0x1e0] sm:$0xff]
  %v1332 = vld [vmem:[#allocation4 + $0x1e8] sm:$0xff]
  %v1333 = vld [vmem:[#allocation4 + $0x1f0] sm:$0xff]
  %v1334 = vld [vmem:[#allocation4 + $0x1f8] sm:$0xff]
  %v1335 = vld [vmem:[#allocation4 + $0x200] sm:$0xff]
  %v1336 = vld [vmem:[#allocation4 + $0x208] sm:$0xff]
  %v1337 = vld [vmem:[#allocation4 + $0x210] sm:$0xff]
  %v1338 = vld [vmem:[#allocation4 + $0x218] sm:$0xff]
  %v1339 = vld [vmem:[#allocation4 + $0x220] sm:$0xff]
  %v1340 = vld [vmem:[#allocation4 + $0x228] sm:$0xff]
  %v1341 = vld [vmem:[#allocation4 + $0x230] sm:$0xff]
  %v1342 = vld [vmem:[#allocation4 + $0x238] sm:$0xff]
  %v1343 = vld [vmem:[#allocation4 + $0x240] sm:$0xff]
  %v1344 = vld [vmem:[#allocation4 + $0x248] sm:$0xff]
  %v1345 = vld [vmem:[#allocation4 + $0x250] sm:$0xff]
  %v1346 = vld [vmem:[#allocation4 + $0x258] sm:$0xff]
  %v1347 = vld [vmem:[#allocation4 + $0x260] sm:$0xff]
  %v1348 = vld [vmem:[#allocation4 + $0x268] sm:$0xff]
  %v1349 = vld [vmem:[#allocation4 + $0x270] sm:$0xff]
  %v1350 = vld [vmem:[#allocation4 + $0x278] sm:$0xff]
  %v1351 = vld [vmem:[#allocation4 + $0x280] sm:$0xff]
  %v1352 = vld [vmem:[#allocation4 + $0x288] sm:$0xff]
  %v1353 = vld [vmem:[#allocation4 + $0x290] sm:$0xff]
  %v1354 = vld [vmem:[#allocation4 + $0x298] sm:$0xff]
  %v1355 = vld [vmem:[#allocation4 + $0x2a0] sm:$0xff]
  %v1356 = vld [vmem:[#allocation4 + $0x2a8] sm:$0xff]
  %v1357 = vld [vmem:[#allocation4 + $0x2b0] sm:$0xff]
  %v1358 = vld [vmem:[#allocation4 + $0x2b8] sm:$0xff]
  %v1359 = vld [vmem:[#allocation4 + $0x2c0] sm:$0xff]
  %v1360 = vld [vmem:[#allocation4 + $0x2c8] sm:$0xff]
  %v1361 = vld [vmem:[#allocation4 + $0x2d0] sm:$0xff]
  %v1362 = vld [vmem:[#allocation4 + $0x2d8] sm:$0xff]
  %v1363 = vld [vmem:[#allocation4 + $0x2e0] sm:$0xff]
  %v1364 = vld [vmem:[#allocation4 + $0x2e8] sm:$0xff]
  %v1365 = vld [vmem:[#allocation4 + $0x2f0] sm:$0xff]
  %v1366 = vld [vmem:[#allocation4 + $0x2f8] sm:$0xff]
  %v1367 = vld [vmem:[#allocation4 + $0x300] sm:$0xff]
  %v1368 = vld [vmem:[#allocation4 + $0x308] sm:$0xff]
  %v1369 = vld [vmem:[#allocation4 + $0x310] sm:$0xff]
  %v1370 = vld [vmem:[#allocation4 + $0x318] sm:$0xff]
  %v1371 = vld [vmem:[#allocation4 + $0x320] sm:$0xff]
  %v1372 = vld [vmem:[#allocation4 + $0x328] sm:$0xff]
  %v1373 = vld [vmem:[#allocation4 + $0x330] sm:$0xff]
  %v1374 = vld [vmem:[#allocation4 + $0x338] sm:$0xff]
  %v1375 = vld [vmem:[#allocation4 + $0x340] sm:$0xff]
  %v1376 = vld [vmem:[#allocation4 + $0x348] sm:$0xff]
  %v1377 = vld [vmem:[#allocation4 + $0x350] sm:$0xff]
  %v1378 = vld [vmem:[#allocation4 + $0x358] sm:$0xff]
  %v1379 = vld [vmem:[#allocation4 + $0x360] sm:$0xff]
  %v1380 = vld [vmem:[#allocation4 + $0x368] sm:$0xff]
  %v1381 = vld [vmem:[#allocation4 + $0x370] sm:$0xff]
  %v1382 = vld [vmem:[#allocation4 + $0x378] sm:$0xff]
  %v1383 = vld [vmem:[#allocation4 + $0x380] sm:$0xff]
  %v1384 = vld [vmem:[#allocation4 + $0x388] sm:$0xff]
  %v1385 = vld [vmem:[#allocation4 + $0x390] sm:$0xff]
  %v1386 = vld [vmem:[#allocation4 + $0x398] sm:$0xff]
  %v1387 = vld [vmem:[#allocation4 + $0x3a0] sm:$0xff]
  %v1388 = vld [vmem:[#allocation4 + $0x3a8] sm:$0xff]
  %v1389 = vld [vmem:[#allocation4 + $0x3b0] sm:$0xff]
  %v1390 = vld [vmem:[#allocation4 + $0x3b8] sm:$0xff]
  %v1391 = vld [vmem:[#allocation4 + $0x3c0] sm:$0xff]
  %v1392 = vld [vmem:[#allocation4 + $0x3c8] sm:$0xff]
  %v1393 = vld [vmem:[#allocation4 + $0x3d0] sm:$0xff]
  %v1394 = vld [vmem:[#allocation4 + $0x3d8] sm:$0xff]
  %v1395 = vld [vmem:[#allocation4 + $0x3e0] sm:$0xff]
  %v1396 = vld [vmem:[#allocation4 + $0x3e8] sm:$0xff]
  %v1397 = vld [vmem:[#allocation4 + $0x3f0] sm:$0xff]
  %v1398 = vld [vmem:[#allocation4 + $0x3f8] sm:$0xff]
  %v1399 = vld [vmem:[%s3] sm:$0xf]
  %v1401 = vperm.slane %v1399, 0
  %v1402 = vperm.slane %v1399, 1
  %v1403 = vperm.slane %v1399, 2
  %v1404 = vperm.slane %v1399, 3
  %v1537 = vunpack.c.l.b16 %v1271
  %v1538 = vunpack.c.h.b16 %v1271
  %v1539 = vunpack.c.l.b16 %v1272
  %v1540 = vunpack.c.h.b16 %v1272
  %v1541 = vunpack.c.l.b16 %v1273
  %v1542 = vunpack.c.h.b16 %v1273
  %v1543 = vunpack.c.l.b16 %v1274
  %v1544 = vunpack.c.h.b16 %v1274
  %v1545 = vunpack.c.l.b16 %v1275
  %v1546 = vunpack.c.h.b16 %v1275
  %v1547 = vunpack.c.l.b16 %v1276
  %v1548 = vunpack.c.h.b16 %v1276
  %v1549 = vunpack.c.l.b16 %v1277
  %v1550 = vunpack.c.h.b16 %v1277
  %v1551 = vunpack.c.l.b16 %v1278
  %v1552 = vunpack.c.h.b16 %v1278
  %v1553 = vunpack.c.l.b16 %v1279
  %v1554 = vunpack.c.h.b16 %v1279
  %v1555 = vunpack.c.l.b16 %v1280
  %v1556 = vunpack.c.h.b16 %v1280
  %v1557 = vunpack.c.l.b16 %v1281
  %v1558 = vunpack.c.h.b16 %v1281
  %v1559 = vunpack.c.l.b16 %v1282
  %v1560 = vunpack.c.h.b16 %v1282
  %v1561 = vunpack.c.l.b16 %v1283
  %v1562 = vunpack.c.h.b16 %v1283
  %v1563 = vunpack.c.l.b16 %v1284
  %v1564 = vunpack.c.h.b16 %v1284
  %v1565 = vunpack.c.l.b16 %v1285
  %v1566 = vunpack.c.h.b16 %v1285
  %v1567 = vunpack.c.l.b16 %v1286
  %v1568 = vunpack.c.h.b16 %v1286
  %v1569 = vunpack.c.l.b16 %v1287
  %v1570 = vunpack.c.h.b16 %v1287
  %v1571 = vunpack.c.l.b16 %v1288
  %v1572 = vunpack.c.h.b16 %v1288
  %v1573 = vunpack.c.l.b16 %v1289
  %v1574 = vunpack.c.h.b16 %v1289
  %v1575 = vunpack.c.l.b16 %v1290
  %v1576 = vunpack.c.h.b16 %v1290
  %v1577 = vunpack.c.l.b16 %v1291
  %v1578 = vunpack.c.h.b16 %v1291
  %v1579 = vunpack.c.l.b16 %v1292
  %v1580 = vunpack.c.h.b16 %v1292
  %v1581 = vunpack.c.l.b16 %v1293
  %v1582 = vunpack.c.h.b16 %v1293
  %v1583 = vunpack.c.l.b16 %v1294
  %v1584 = vunpack.c.h.b16 %v1294
  %v1585 = vunpack.c.l.b16 %v1295
  %v1586 = vunpack.c.h.b16 %v1295
  %v1587 = vunpack.c.l.b16 %v1296
  %v1588 = vunpack.c.h.b16 %v1296
  %v1589 = vunpack.c.l.b16 %v1297
  %v1590 = vunpack.c.h.b16 %v1297
  %v1591 = vunpack.c.l.b16 %v1298
  %v1592 = vunpack.c.h.b16 %v1298
  %v1593 = vunpack.c.l.b16 %v1299
  %v1594 = vunpack.c.h.b16 %v1299
  %v1595 = vunpack.c.l.b16 %v1300
  %v1596 = vunpack.c.h.b16 %v1300
  %v1597 = vunpack.c.l.b16 %v1301
  %v1598 = vunpack.c.h.b16 %v1301
  %v1599 = vunpack.c.l.b16 %v1302
  %v1600 = vunpack.c.h.b16 %v1302
  %v1601 = vunpack.c.l.b16 %v1303
  %v1602 = vunpack.c.h.b16 %v1303
  %v1603 = vunpack.c.l.b16 %v1304
  %v1604 = vunpack.c.h.b16 %v1304
  %v1605 = vunpack.c.l.b16 %v1305
  %v1606 = vunpack.c.h.b16 %v1305
  %v1607 = vunpack.c.l.b16 %v1306
  %v1608 = vunpack.c.h.b16 %v1306
  %v1609 = vunpack.c.l.b16 %v1307
  %v1610 = vunpack.c.h.b16 %v1307
  %v1611 = vunpack.c.l.b16 %v1308
  %v1612 = vunpack.c.h.b16 %v1308
  %v1613 = vunpack.c.l.b16 %v1309
  %v1614 = vunpack.c.h.b16 %v1309
  %v1615 = vunpack.c.l.b16 %v1310
  %v1616 = vunpack.c.h.b16 %v1310
  %v1617 = vunpack.c.l.b16 %v1311
  %v1618 = vunpack.c.h.b16 %v1311
  %v1619 = vunpack.c.l.b16 %v1312
  %v1620 = vunpack.c.h.b16 %v1312
  %v1621 = vunpack.c.l.b16 %v1313
  %v1622 = vunpack.c.h.b16 %v1313
  %v1623 = vunpack.c.l.b16 %v1314
  %v1624 = vunpack.c.h.b16 %v1314
  %v1625 = vunpack.c.l.b16 %v1315
  %v1626 = vunpack.c.h.b16 %v1315
  %v1627 = vunpack.c.l.b16 %v1316
  %v1628 = vunpack.c.h.b16 %v1316
  %v1629 = vunpack.c.l.b16 %v1317
  %v1630 = vunpack.c.h.b16 %v1317
  %v1631 = vunpack.c.l.b16 %v1318
  %v1632 = vunpack.c.h.b16 %v1318
  %v1633 = vunpack.c.l.b16 %v1319
  %v1634 = vunpack.c.h.b16 %v1319
  %v1635 = vunpack.c.l.b16 %v1320
  %v1636 = vunpack.c.h.b16 %v1320
  %v1637 = vunpack.c.l.b16 %v1321
  %v1638 = vunpack.c.h.b16 %v1321
  %v1639 = vunpack.c.l.b16 %v1322
  %v1640 = vunpack.c.h.b16 %v1322
  %v1641 = vunpack.c.l.b16 %v1323
  %v1642 = vunpack.c.h.b16 %v1323
  %v1643 = vunpack.c.l.b16 %v1324
  %v1644 = vunpack.c.h.b16 %v1324
  %v1645 = vunpack.c.l.b16 %v1325
  %v1646 = vunpack.c.h.b16 %v1325
  %v1647 = vunpack.c.l.b16 %v1326
  %v1648 = vunpack.c.h.b16 %v1326
  %v1649 = vunpack.c.l.b16 %v1327
  %v1650 = vunpack.c.h.b16 %v1327
  %v1651 = vunpack.c.l.b16 %v1328
  %v1652 = vunpack.c.h.b16 %v1328
  %v1653 = vunpack.c.l.b16 %v1329
  %v1654 = vunpack.c.h.b16 %v1329
  %v1655 = vunpack.c.l.b16 %v1330
  %v1656 = vunpack.c.h.b16 %v1330
  %v1657 = vunpack.c.l.b16 %v1331
  %v1658 = vunpack.c.h.b16 %v1331
  %v1659 = vunpack.c.l.b16 %v1332
  %v1660 = vunpack.c.h.b16 %v1332
  %v1661 = vunpack.c.l.b16 %v1333
  %v1662 = vunpack.c.h.b16 %v1333
  %v1663 = vunpack.c.l.b16 %v1334
  %v1664 = vunpack.c.h.b16 %v1334
  %v1665 = vunpack.c.l.b16 %v1335
  %v1666 = vunpack.c.h.b16 %v1335
  %v1667 = vunpack.c.l.b16 %v1336
  %v1668 = vunpack.c.h.b16 %v1336
  %v1669 = vunpack.c.l.b16 %v1337
  %v1670 = vunpack.c.h.b16 %v1337
  %v1671 = vunpack.c.l.b16 %v1338
  %v1672 = vunpack.c.h.b16 %v1338
  %v1673 = vunpack.c.l.b16 %v1339
  %v1674 = vunpack.c.h.b16 %v1339
  %v1675 = vunpack.c.l.b16 %v1340
  %v1676 = vunpack.c.h.b16 %v1340
  %v1677 = vunpack.c.l.b16 %v1341
  %v1678 = vunpack.c.h.b16 %v1341
  %v1679 = vunpack.c.l.b16 %v1342
  %v1680 = vunpack.c.h.b16 %v1342
  %v1681 = vunpack.c.l.b16 %v1343
  %v1682 = vunpack.c.h.b16 %v1343
  %v1683 = vunpack.c.l.b16 %v1344
  %v1684 = vunpack.c.h.b16 %v1344
  %v1685 = vunpack.c.l.b16 %v1345
  %v1686 = vunpack.c.h.b16 %v1345
  %v1687 = vunpack.c.l.b16 %v1346
  %v1688 = vunpack.c.h.b16 %v1346
  %v1689 = vunpack.c.l.b16 %v1347
  %v1690 = vunpack.c.h.b16 %v1347
  %v1691 = vunpack.c.l.b16 %v1348
  %v1692 = vunpack.c.h.b16 %v1348
  %v1693 = vunpack.c.l.b16 %v1349
  %v1694 = vunpack.c.h.b16 %v1349
  %v1695 = vunpack.c.l.b16 %v1350
  %v1696 = vunpack.c.h.b16 %v1350
  %v1697 = vunpack.c.l.b16 %v1351
  %v1698 = vunpack.c.h.b16 %v1351
  %v1699 = vunpack.c.l.b16 %v1352
  %v1700 = vunpack.c.h.b16 %v1352
  %v1701 = vunpack.c.l.b16 %v1353
  %v1702 = vunpack.c.h.b16 %v1353
  %v1703 = vunpack.c.l.b16 %v1354
  %v1704 = vunpack.c.h.b16 %v1354
  %v1705 = vunpack.c.l.b16 %v1355
  %v1706 = vunpack.c.h.b16 %v1355
  %v1707 = vunpack.c.l.b16 %v1356
  %v1708 = vunpack.c.h.b16 %v1356
  %v1709 = vunpack.c.l.b16 %v1357
  %v1710 = vunpack.c.h.b16 %v1357
  %v1711 = vunpack.c.l.b16 %v1358
  %v1712 = vunpack.c.h.b16 %v1358
  %v1713 = vunpack.c.l.b16 %v1359
  %v1714 = vunpack.c.h.b16 %v1359
  %v1715 = vunpack.c.l.b16 %v1360
  %v1716 = vunpack.c.h.b16 %v1360
  %v1717 = vunpack.c.l.b16 %v1361
  %v1718 = vunpack.c.h.b16 %v1361
  %v1719 = vunpack.c.l.b16 %v1362
  %v1720 = vunpack.c.h.b16 %v1362
  %v1721 = vunpack.c.l.b16 %v1363
  %v1722 = vunpack.c.h.b16 %v1363
  %v1723 = vunpack.c.l.b16 %v1364
  %v1724 = vunpack.c.h.b16 %v1364
  %v1725 = vunpack.c.l.b16 %v1365
  %v1726 = vunpack.c.h.b16 %v1365
  %v1727 = vunpack.c.l.b16 %v1366
  %v1728 = vunpack.c.h.b16 %v1366
  %v1729 = vunpack.c.l.b16 %v1367
  %v1730 = vunpack.c.h.b16 %v1367
  %v1731 = vunpack.c.l.b16 %v1368
  %v1732 = vunpack.c.h.b16 %v1368
  %v1733 = vunpack.c.l.b16 %v1369
  %v1734 = vunpack.c.h.b16 %v1369
  %v1735 = vunpack.c.l.b16 %v1370
  %v1736 = vunpack.c.h.b16 %v1370
  %v1737 = vunpack.c.l.b16 %v1371
  %v1738 = vunpack.c.h.b16 %v1371
  %v1739 = vunpack.c.l.b16 %v1372
  %v1740 = vunpack.c.h.b16 %v1372
  %v1741 = vunpack.c.l.b16 %v1373
  %v1742 = vunpack.c.h.b16 %v1373
  %v1743 = vunpack.c.l.b16 %v1374
  %v1744 = vunpack.c.h.b16 %v1374
  %v1745 = vunpack.c.l.b16 %v1375
  %v1746 = vunpack.c.h.b16 %v1375
  %v1747 = vunpack.c.l.b16 %v1376
  %v1748 = vunpack.c.h.b16 %v1376
  %v1749 = vunpack.c.l.b16 %v1377
  %v1750 = vunpack.c.h.b16 %v1377
  %v1751 = vunpack.c.l.b16 %v1378
  %v1752 = vunpack.c.h.b16 %v1378
  %v1753 = vunpack.c.l.b16 %v1379
  %v1754 = vunpack.c.h.b16 %v1379
  %v1755 = vunpack.c.l.b16 %v1380
  %v1756 = vunpack.c.h.b16 %v1380
  %v1757 = vunpack.c.l.b16 %v1381
  %v1758 = vunpack.c.h.b16 %v1381
  %v1759 = vunpack.c.l.b16 %v1382
  %v1760 = vunpack.c.h.b16 %v1382
  %v1761 = vunpack.c.l.b16 %v1383
  %v1762 = vunpack.c.h.b16 %v1383
  %v1763 = vunpack.c.l.b16 %v1384
  %v1764 = vunpack.c.h.b16 %v1384
  %v1765 = vunpack.c.l.b16 %v1385
  %v1766 = vunpack.c.h.b16 %v1385
  %v1767 = vunpack.c.l.b16 %v1386
  %v1768 = vunpack.c.h.b16 %v1386
  %v1769 = vunpack.c.l.b16 %v1387
  %v1770 = vunpack.c.h.b16 %v1387
  %v1771 = vunpack.c.l.b16 %v1388
  %v1772 = vunpack.c.h.b16 %v1388
  %v1773 = vunpack.c.l.b16 %v1389
  %v1774 = vunpack.c.h.b16 %v1389
  %v1775 = vunpack.c.l.b16 %v1390
  %v1776 = vunpack.c.h.b16 %v1390
  %v1777 = vunpack.c.l.b16 %v1391
  %v1778 = vunpack.c.h.b16 %v1391
  %v1779 = vunpack.c.l.b16 %v1392
  %v1780 = vunpack.c.h.b16 %v1392
  %v1781 = vunpack.c.l.b16 %v1393
  %v1782 = vunpack.c.h.b16 %v1393
  %v1783 = vunpack.c.l.b16 %v1394
  %v1784 = vunpack.c.h.b16 %v1394
  %v1785 = vunpack.c.l.b16 %v1395
  %v1786 = vunpack.c.h.b16 %v1395
  %v1787 = vunpack.c.l.b16 %v1396
  %v1788 = vunpack.c.h.b16 %v1396
  %v1789 = vunpack.c.l.b16 %v1397
  %v1790 = vunpack.c.h.b16 %v1397
  %v1791 = vunpack.c.l.b16 %v1398
  %v1792 = vunpack.c.h.b16 %v1398
  %v1793 = vpack.c.b16 %v1541, %v1537
  %v1794 = vpack.c.b16 %v1542, %v1538
  %v1795 = vpack.c.b16 %v1543, %v1539
  %v1796 = vpack.c.b16 %v1544, %v1540
  %v1797 = vpack.c.b16 %v1549, %v1545
  %v1798 = vpack.c.b16 %v1550, %v1546
  %v1799 = vpack.c.b16 %v1551, %v1547
  %v1800 = vpack.c.b16 %v1552, %v1548
  %v1801 = vpack.c.b16 %v1557, %v1553
  %v1802 = vpack.c.b16 %v1558, %v1554
  %v1803 = vpack.c.b16 %v1559, %v1555
  %v1804 = vpack.c.b16 %v1560, %v1556
  %v1805 = vpack.c.b16 %v1565, %v1561
  %v1806 = vpack.c.b16 %v1566, %v1562
  %v1807 = vpack.c.b16 %v1567, %v1563
  %v1808 = vpack.c.b16 %v1568, %v1564
  %v1809 = vpack.c.b16 %v1573, %v1569
  %v1810 = vpack.c.b16 %v1574, %v1570
  %v1811 = vpack.c.b16 %v1575, %v1571
  %v1812 = vpack.c.b16 %v1576, %v1572
  %v1813 = vpack.c.b16 %v1581, %v1577
  %v1814 = vpack.c.b16 %v1582, %v1578
  %v1815 = vpack.c.b16 %v1583, %v1579
  %v1816 = vpack.c.b16 %v1584, %v1580
  %v1817 = vpack.c.b16 %v1589, %v1585
  %v1818 = vpack.c.b16 %v1590, %v1586
  %v1819 = vpack.c.b16 %v1591, %v1587
  %v1820 = vpack.c.b16 %v1592, %v1588
  %v1821 = vpack.c.b16 %v1597, %v1593
  %v1822 = vpack.c.b16 %v1598, %v1594
  %v1823 = vpack.c.b16 %v1599, %v1595
  %v1824 = vpack.c.b16 %v1600, %v1596
  %v1825 = vpack.c.b16 %v1605, %v1601
  %v1826 = vpack.c.b16 %v1606, %v1602
  %v1827 = vpack.c.b16 %v1607, %v1603
  %v1828 = vpack.c.b16 %v1608, %v1604
  %v1829 = vpack.c.b16 %v1613, %v1609
  %v1830 = vpack.c.b16 %v1614, %v1610
  %v1831 = vpack.c.b16 %v1615, %v1611
  %v1832 = vpack.c.b16 %v1616, %v1612
  %v1833 = vpack.c.b16 %v1621, %v1617
  %v1834 = vpack.c.b16 %v1622, %v1618
  %v1835 = vpack.c.b16 %v1623, %v1619
  %v1836 = vpack.c.b16 %v1624, %v1620
  %v1837 = vpack.c.b16 %v1629, %v1625
  %v1838 = vpack.c.b16 %v1630, %v1626
  %v1839 = vpack.c.b16 %v1631, %v1627
  %v1840 = vpack.c.b16 %v1632, %v1628
  %v1841 = vpack.c.b16 %v1637, %v1633
  %v1842 = vpack.c.b16 %v1638, %v1634
  %v1843 = vpack.c.b16 %v1639, %v1635
  %v1844 = vpack.c.b16 %v1640, %v1636
  %v1845 = vpack.c.b16 %v1645, %v1641
  %v1846 = vpack.c.b16 %v1646, %v1642
  %v1847 = vpack.c.b16 %v1647, %v1643
  %v1848 = vpack.c.b16 %v1648, %v1644
  %v1849 = vpack.c.b16 %v1653, %v1649
  %v1850 = vpack.c.b16 %v1654, %v1650
  %v1851 = vpack.c.b16 %v1655, %v1651
  %v1852 = vpack.c.b16 %v1656, %v1652
  %v1853 = vpack.c.b16 %v1661, %v1657
  %v1854 = vpack.c.b16 %v1662, %v1658
  %v1855 = vpack.c.b16 %v1663, %v1659
  %v1856 = vpack.c.b16 %v1664, %v1660
  %v1857 = vpack.c.b16 %v1669, %v1665
  %v1858 = vpack.c.b16 %v1670, %v1666
  %v1859 = vpack.c.b16 %v1671, %v1667
  %v1860 = vpack.c.b16 %v1672, %v1668
  %v1861 = vpack.c.b16 %v1677, %v1673
  %v1862 = vpack.c.b16 %v1678, %v1674
  %v1863 = vpack.c.b16 %v1679, %v1675
  %v1864 = vpack.c.b16 %v1680, %v1676
  %v1865 = vpack.c.b16 %v1685, %v1681
  %v1866 = vpack.c.b16 %v1686, %v1682
  %v1867 = vpack.c.b16 %v1687, %v1683
  %v1868 = vpack.c.b16 %v1688, %v1684
  %v1869 = vpack.c.b16 %v1693, %v1689
  %v1870 = vpack.c.b16 %v1694, %v1690
  %v1871 = vpack.c.b16 %v1695, %v1691
  %v1872 = vpack.c.b16 %v1696, %v1692
  %v1873 = vpack.c.b16 %v1701, %v1697
  %v1874 = vpack.c.b16 %v1702, %v1698
  %v1875 = vpack.c.b16 %v1703, %v1699
  %v1876 = vpack.c.b16 %v1704, %v1700
  %v1877 = vpack.c.b16 %v1709, %v1705
  %v1878 = vpack.c.b16 %v1710, %v1706
  %v1879 = vpack.c.b16 %v1711, %v1707
  %v1880 = vpack.c.b16 %v1712, %v1708
  %v1881 = vpack.c.b16 %v1717, %v1713
  %v1882 = vpack.c.b16 %v1718, %v1714
  %v1883 = vpack.c.b16 %v1719, %v1715
  %v1884 = vpack.c.b16 %v1720, %v1716
  %v1885 = vpack.c.b16 %v1725, %v1721
  %v1886 = vpack.c.b16 %v1726, %v1722
  %v1887 = vpack.c.b16 %v1727, %v1723
  %v1888 = vpack.c.b16 %v1728, %v1724
  %v1889 = vpack.c.b16 %v1733, %v1729
  %v1890 = vpack.c.b16 %v1734, %v1730
  %v1891 = vpack.c.b16 %v1735, %v1731
  %v1892 = vpack.c.b16 %v1736, %v1732
  %v1893 = vpack.c.b16 %v1741, %v1737
  %v1894 = vpack.c.b16 %v1742, %v1738
  %v1895 = vpack.c.b16 %v1743, %v1739
  %v1896 = vpack.c.b16 %v1744, %v1740
  %v1897 = vpack.c.b16 %v1749, %v1745
  %v1898 = vpack.c.b16 %v1750, %v1746
  %v1899 = vpack.c.b16 %v1751, %v1747
  %v1900 = vpack.c.b16 %v1752, %v1748
  %v1901 = vpack.c.b16 %v1757, %v1753
  %v1902 = vpack.c.b16 %v1758, %v1754
  %v1903 = vpack.c.b16 %v1759, %v1755
  %v1904 = vpack.c.b16 %v1760, %v1756
  %v1905 = vpack.c.b16 %v1765, %v1761
  %v1906 = vpack.c.b16 %v1766, %v1762
  %v1907 = vpack.c.b16 %v1767, %v1763
  %v1908 = vpack.c.b16 %v1768, %v1764
  %v1909 = vpack.c.b16 %v1773, %v1769
  %v1910 = vpack.c.b16 %v1774, %v1770
  %v1911 = vpack.c.b16 %v1775, %v1771
  %v1912 = vpack.c.b16 %v1776, %v1772
  %v1913 = vpack.c.b16 %v1781, %v1777
  %v1914 = vpack.c.b16 %v1782, %v1778
  %v1915 = vpack.c.b16 %v1783, %v1779
  %v1916 = vpack.c.b16 %v1784, %v1780
  %v1917 = vpack.c.b16 %v1789, %v1785
  %v1918 = vpack.c.b16 %v1790, %v1786
  %v1919 = vpack.c.b16 %v1791, %v1787
  %v1920 = vpack.c.b16 %v1792, %v1788
  %2049 = vmatpush.bf16.msra.mxu0 %v1821
  %2050 = vmatpush.bf16.msra.mxu0 %v1817
  %2051 = vmatpush.bf16.msra.mxu0 %v1813
  %2052 = vmatpush.bf16.msra.mxu0 %v1809
  %2053 = vmatpush.bf16.msra.mxu0 %v1805
  %2054 = vmatpush.bf16.msra.mxu0 %v1801
  %2055 = vmatpush.bf16.msra.mxu0 %v1797
  %2056 = vmatpush.bf16.msra.mxu0 %v1793
  %2057 = vmatmul.bf16.gmra.mxu0 %v1267
  %v2058 = vpop.f32.mrf.mxu0
  %v2059 = vadd.f32 %v1401, %v2058
  %v2060 = vpop.f32.mrf.mxu0
  %v2061 = vadd.f32 %v1401, %v2060
  %2062 = vdwg.mxu0
  %2063 = vmatpush.bf16.msra.mxu0 %v1853
  %2064 = vmatpush.bf16.msra.mxu0 %v1849
  %2065 = vmatpush.bf16.msra.mxu0 %v1845
  %2066 = vmatpush.bf16.msra.mxu0 %v1841
  %2067 = vmatpush.bf16.msra.mxu0 %v1837
  %2068 = vmatpush.bf16.msra.mxu0 %v1833
  %2069 = vmatpush.bf16.msra.mxu0 %v1829
  %2070 = vmatpush.bf16.msra.mxu0 %v1825
  %2071 = vmatmul.bf16.gmra.mxu0 %v1268
  %v2072 = vpop.f32.mrf.mxu0
  %v2073 = vadd.f32 %v2059, %v2072
  %v2074 = vpop.f32.mrf.mxu0
  %v2075 = vadd.f32 %v2061, %v2074
  %2076 = vdwg.mxu0
  %2077 = vmatpush.bf16.msra.mxu0 %v1885
  %2078 = vmatpush.bf16.msra.mxu0 %v1881
  %2079 = vmatpush.bf16.msra.mxu0 %v1877
  %2080 = vmatpush.bf16.msra.mxu0 %v1873
  %2081 = vmatpush.bf16.msra.mxu0 %v1869
  %2082 = vmatpush.bf16.msra.mxu0 %v1865
  %2083 = vmatpush.bf16.msra.mxu0 %v1861
  %2084 = vmatpush.bf16.msra.mxu0 %v1857
  %2085 = vmatmul.bf16.gmra.mxu0 %v1269
  %v2086 = vpop.f32.mrf.mxu0
  %v2087 = vadd.f32 %v2073, %v2086
  %v2088 = vpop.f32.mrf.mxu0
  %v2089 = vadd.f32 %v2075, %v2088
  %2090 = vdwg.mxu0
  %2091 = vmatpush.bf16.msra.mxu0 %v1917
  %2092 = vmatpush.bf16.msra.mxu0 %v1913
  %2093 = vmatpush.bf16.msra.mxu0 %v1909
  %2094 = vmatpush.bf16.msra.mxu0 %v1905
  %2095 = vmatpush.bf16.msra.mxu0 %v1901
  %2096 = vmatpush.bf16.msra.mxu0 %v1897
  %2097 = vmatpush.bf16.msra.mxu0 %v1893
  %2098 = vmatpush.bf16.msra.mxu0 %v1889
  %2099 = vmatmul.bf16.gmra.mxu0 %v1270
  %v2100 = vpop.f32.mrf.mxu0
  %v2101 = vadd.f32 %v2087, %v2100
  %v2102 = vpop.f32.mrf.mxu0
  %v2103 = vadd.f32 %v2089, %v2102
  %2104 = vdwg.mxu0
  %2105 = vmatpush.bf16.msra.mxu0 %v1822
  %2106 = vmatpush.bf16.msra.mxu0 %v1818
  %2107 = vmatpush.bf16.msra.mxu0 %v1814
  %2108 = vmatpush.bf16.msra.mxu0 %v1810
  %2109 = vmatpush.bf16.msra.mxu0 %v1806
  %2110 = vmatpush.bf16.msra.mxu0 %v1802
  %2111 = vmatpush.bf16.msra.mxu0 %v1798
  %2112 = vmatpush.bf16.msra.mxu0 %v1794
  %2113 = vmatmul.bf16.gmra.mxu0 %v1267
  %v2114 = vpop.f32.mrf.mxu0
  %v2115 = vadd.f32 %v1402, %v2114
  %v2116 = vpop.f32.mrf.mxu0
  %v2117 = vadd.f32 %v1402, %v2116
  %2118 = vdwg.mxu0
  %2119 = vmatpush.bf16.msra.mxu0 %v1854
  %2120 = vmatpush.bf16.msra.mxu0 %v1850
  %2121 = vmatpush.bf16.msra.mxu0 %v1846
  %2122 = vmatpush.bf16.msra.mxu0 %v1842
  %2123 = vmatpush.bf16.msra.mxu0 %v1838
  %2124 = vmatpush.bf16.msra.mxu0 %v1834
  %2125 = vmatpush.bf16.msra.mxu0 %v1830
  %2126 = vmatpush.bf16.msra.mxu0 %v1826
  %2127 = vmatmul.bf16.gmra.mxu0 %v1268
  %v2128 = vpop.f32.mrf.mxu0
  %v2129 = vadd.f32 %v2115, %v2128
  %v2130 = vpop.f32.mrf.mxu0
  %v2131 = vadd.f32 %v2117, %v2130
  %2132 = vdwg.mxu0
  %2133 = vmatpush.bf16.msra.mxu0 %v1886
  %2134 = vmatpush.bf16.msra.mxu0 %v1882
  %2135 = vmatpush.bf16.msra.mxu0 %v1878
  %2136 = vmatpush.bf16.msra.mxu0 %v1874
  %2137 = vmatpush.bf16.msra.mxu0 %v1870
  %2138 = vmatpush.bf16.msra.mxu0 %v1866
  %2139 = vmatpush.bf16.msra.mxu0 %v1862
  %2140 = vmatpush.bf16.msra.mxu0 %v1858
  %2141 = vmatmul.bf16.gmra.mxu0 %v1269
  %v2142 = vpop.f32.mrf.mxu0
  %v2143 = vadd.f32 %v2129, %v2142
  %v2144 = vpop.f32.mrf.mxu0
  %v2145 = vadd.f32 %v2131, %v2144
  %2146 = vdwg.mxu0
  %2147 = vmatpush.bf16.msra.mxu0 %v1918
  %2148 = vmatpush.bf16.msra.mxu0 %v1914
  %2149 = vmatpush.bf16.msra.mxu0 %v1910
  %2150 = vmatpush.bf16.msra.mxu0 %v1906
  %2151 = vmatpush.bf16.msra.mxu0 %v1902
  %2152 = vmatpush.bf16.msra.mxu0 %v1898
  %2153 = vmatpush.bf16.msra.mxu0 %v1894
  %2154 = vmatpush.bf16.msra.mxu0 %v1890
  %2155 = vmatmul.bf16.gmra.mxu0 %v1270
  %v2156 = vpop.f32.mrf.mxu0
  %v2157 = vadd.f32 %v2143, %v2156
  %v2158 = vpop.f32.mrf.mxu0
  %v2159 = vadd.f32 %v2145, %v2158
  %2160 = vdwg.mxu0
  %2161 = vmatpush.bf16.msra.mxu0 %v1823
  %2162 = vmatpush.bf16.msra.mxu0 %v1819
  %2163 = vmatpush.bf16.msra.mxu0 %v1815
  %2164 = vmatpush.bf16.msra.mxu0 %v1811
  %2165 = vmatpush.bf16.msra.mxu0 %v1807
  %2166 = vmatpush.bf16.msra.mxu0 %v1803
  %2167 = vmatpush.bf16.msra.mxu0 %v1799
  %2168 = vmatpush.bf16.msra.mxu0 %v1795
  %2169 = vmatmul.bf16.gmra.mxu0 %v1267
  %v2170 = vpop.f32.mrf.mxu0
  %v2171 = vadd.f32 %v1403, %v2170
  %v2172 = vpop.f32.mrf.mxu0
  %v2173 = vadd.f32 %v1403, %v2172
  %2174 = vdwg.mxu0
  %2175 = vmatpush.bf16.msra.mxu0 %v1855
  %2176 = vmatpush.bf16.msra.mxu0 %v1851
  %2177 = vmatpush.bf16.msra.mxu0 %v1847
  %2178 = vmatpush.bf16.msra.mxu0 %v1843
  %2179 = vmatpush.bf16.msra.mxu0 %v1839
  %2180 = vmatpush.bf16.msra.mxu0 %v1835
  %2181 = vmatpush.bf16.msra.mxu0 %v1831
  %2182 = vmatpush.bf16.msra.mxu0 %v1827
  %2183 = vmatmul.bf16.gmra.mxu0 %v1268
  %v2184 = vpop.f32.mrf.mxu0
  %v2185 = vadd.f32 %v2171, %v2184
  %v2186 = vpop.f32.mrf.mxu0
  %v2187 = vadd.f32 %v2173, %v2186
  %2188 = vdwg.mxu0
  %2189 = vmatpush.bf16.msra.mxu0 %v1887
  %2190 = vmatpush.bf16.msra.mxu0 %v1883
  %2191 = vmatpush.bf16.msra.mxu0 %v1879
  %2192 = vmatpush.bf16.msra.mxu0 %v1875
  %2193 = vmatpush.bf16.msra.mxu0 %v1871
  %2194 = vmatpush.bf16.msra.mxu0 %v1867
  %2195 = vmatpush.bf16.msra.mxu0 %v1863
  %2196 = vmatpush.bf16.msra.mxu0 %v1859
  %2197 = vmatmul.bf16.gmra.mxu0 %v1269
  %v2198 = vpop.f32.mrf.mxu0
  %v2199 = vadd.f32 %v2185, %v2198
  %v2200 = vpop.f32.mrf.mxu0
  %v2201 = vadd.f32 %v2187, %v2200
  %2202 = vdwg.mxu0
  %2203 = vmatpush.bf16.msra.mxu0 %v1919
  %2204 = vmatpush.bf16.msra.mxu0 %v1915
  %2205 = vmatpush.bf16.msra.mxu0 %v1911
  %2206 = vmatpush.bf16.msra.mxu0 %v1907
  %2207 = vmatpush.bf16.msra.mxu0 %v1903
  %2208 = vmatpush.bf16.msra.mxu0 %v1899
  %2209 = vmatpush.bf16.msra.mxu0 %v1895
  %2210 = vmatpush.bf16.msra.mxu0 %v1891
  %2211 = vmatmul.bf16.gmra.mxu0 %v1270
  %v2212 = vpop.f32.mrf.mxu0
  %v2213 = vadd.f32 %v2199, %v2212
  %v2214 = vpop.f32.mrf.mxu0
  %v2215 = vadd.f32 %v2201, %v2214
  %2216 = vdwg.mxu0
  %2217 = vmatpush.bf16.msra.mxu0 %v1824
  %2218 = vmatpush.bf16.msra.mxu0 %v1820
  %2219 = vmatpush.bf16.msra.mxu0 %v1816
  %2220 = vmatpush.bf16.msra.mxu0 %v1812
  %2221 = vmatpush.bf16.msra.mxu0 %v1808
  %2222 = vmatpush.bf16.msra.mxu0 %v1804
  %2223 = vmatpush.bf16.msra.mxu0 %v1800
  %2224 = vmatpush.bf16.msra.mxu0 %v1796
  %2225 = vmatmul.bf16.gmra.mxu0 %v1267
  %v2226 = vpop.f32.mrf.mxu0
  %v2227 = vadd.f32 %v1404, %v2226
  %v2228 = vpop.f32.mrf.mxu0
  %v2229 = vadd.f32 %v1404, %v2228
  %2230 = vdwg.mxu0
  %2231 = vmatpush.bf16.msra.mxu0 %v1856
  %2232 = vmatpush.bf16.msra.mxu0 %v1852
  %2233 = vmatpush.bf16.msra.mxu0 %v1848
  %2234 = vmatpush.bf16.msra.mxu0 %v1844
  %2235 = vmatpush.bf16.msra.mxu0 %v1840
  %2236 = vmatpush.bf16.msra.mxu0 %v1836
  %2237 = vmatpush.bf16.msra.mxu0 %v1832
  %2238 = vmatpush.bf16.msra.mxu0 %v1828
  %2239 = vmatmul.bf16.gmra.mxu0 %v1268
  %v2240 = vpop.f32.mrf.mxu0
  %v2241 = vadd.f32 %v2227, %v2240
  %v2242 = vpop.f32.mrf.mxu0
  %v2243 = vadd.f32 %v2229, %v2242
  %2244 = vdwg.mxu0
  %2245 = vmatpush.bf16.msra.mxu0 %v1888
  %2246 = vmatpush.bf16.msra.mxu0 %v1884
  %2247 = vmatpush.bf16.msra.mxu0 %v1880
  %2248 = vmatpush.bf16.msra.mxu0 %v1876
  %2249 = vmatpush.bf16.msra.mxu0 %v1872
  %2250 = vmatpush.bf16.msra.mxu0 %v1868
  %2251 = vmatpush.bf16.msra.mxu0 %v1864
  %2252 = vmatpush.bf16.msra.mxu0 %v1860
  %2253 = vmatmul.bf16.gmra.mxu0 %v1269
  %v2254 = vpop.f32.mrf.mxu0
  %v2255 = vadd.f32 %v2241, %v2254
  %v2256 = vpop.f32.mrf.mxu0
  %v2257 = vadd.f32 %v2243, %v2256
  %2258 = vdwg.mxu0
  %2259 = vmatpush.bf16.msra.mxu0 %v1920
  %2260 = vmatpush.bf16.msra.mxu0 %v1916
  %2261 = vmatpush.bf16.msra.mxu0 %v1912
  %2262 = vmatpush.bf16.msra.mxu0 %v1908
  %2263 = vmatpush.bf16.msra.mxu0 %v1904
  %2264 = vmatpush.bf16.msra.mxu0 %v1900
  %2265 = vmatpush.bf16.msra.mxu0 %v1896
  %2266 = vmatpush.bf16.msra.mxu0 %v1892
  %2267 = vmatmul.bf16.gmra.mxu0 %v1270
  %v2268 = vpop.f32.mrf.mxu0
  %v2269 = vadd.f32 %v2255, %v2268
  %v2270 = vpop.f32.mrf.mxu0
  %v2271 = vadd.f32 %v2257, %v2270
  %2272 = vdwg.mxu0
  %v2273 = vmul.f32 %v2101, 0.01
  %v2274 = vmul.f32 %v2157, 0.01
  %v2275 = vmul.f32 %v2213, 0.01
  %v2276 = vmul.f32 %v2269, 0.01
  %v2277 = vmul.f32 %v2103, 0.01
  %v2278 = vmul.f32 %v2159, 0.01
  %v2279 = vmul.f32 %v2215, 0.01
  %v2280 = vmul.f32 %v2271, 0.01
  %v2281 = vmax.f32 %v2101, %v2273
  %v2282 = vmax.f32 %v2157, %v2274
  %v2283 = vmax.f32 %v2213, %v2275
  %v2284 = vmax.f32 %v2269, %v2276
  %v2285 = vmax.f32 %v2103, %v2277
  %v2286 = vmax.f32 %v2159, %v2278
  %v2287 = vmax.f32 %v2215, %v2279
  %v2288 = vmax.f32 %v2271, %v2280
  %s2289 = sshll.u32 %s240, 4
  %2290 = dma.done %s70, %s2289
  %v2291 = vpack.c.bf16 %v2285, %v2281
  %v2292 = vpack.c.bf16 %v2286, %v2282
  %v2293 = vpack.c.bf16 %v2287, %v2283
  %v2294 = vpack.c.bf16 %v2288, %v2284
  %v2295 = vld [vmem:[#allocation5] sm:$0xff]
  %v2296 = vld [vmem:[#allocation5 + $0x8] sm:$0xff]
  %v2297 = vld [vmem:[#allocation5 + $0x10] sm:$0xff]
  %v2298 = vld [vmem:[#allocation5 + $0x18] sm:$0xff]
  %v2299 = vld [vmem:[#allocation5 + $0x20] sm:$0xff]
  %v2300 = vld [vmem:[#allocation5 + $0x28] sm:$0xff]
  %v2301 = vld [vmem:[#allocation5 + $0x30] sm:$0xff]
  %v2302 = vld [vmem:[#allocation5 + $0x38] sm:$0xff]
  %v2303 = vld [vmem:[#allocation5 + $0x40] sm:$0xff]
  %v2304 = vld [vmem:[#allocation5 + $0x48] sm:$0xff]
  %v2305 = vld [vmem:[#allocation5 + $0x50] sm:$0xff]
  %v2306 = vld [vmem:[#allocation5 + $0x58] sm:$0xff]
  %v2307 = vld [vmem:[#allocation5 + $0x60] sm:$0xff]
  %v2308 = vld [vmem:[#allocation5 + $0x68] sm:$0xff]
  %v2309 = vld [vmem:[#allocation5 + $0x70] sm:$0xff]
  %v2310 = vld [vmem:[#allocation5 + $0x78] sm:$0xff]
  %v2311 = vld [vmem:[#allocation5 + $0x80] sm:$0xff]
  %v2312 = vld [vmem:[#allocation5 + $0x88] sm:$0xff]
  %v2313 = vld [vmem:[#allocation5 + $0x90] sm:$0xff]
  %v2314 = vld [vmem:[#allocation5 + $0x98] sm:$0xff]
  %v2315 = vld [vmem:[#allocation5 + $0xa0] sm:$0xff]
  %v2316 = vld [vmem:[#allocation5 + $0xa8] sm:$0xff]
  %v2317 = vld [vmem:[#allocation5 + $0xb0] sm:$0xff]
  %v2318 = vld [vmem:[#allocation5 + $0xb8] sm:$0xff]
  %v2319 = vld [vmem:[#allocation5 + $0xc0] sm:$0xff]
  %v2320 = vld [vmem:[#allocation5 + $0xc8] sm:$0xff]
  %v2321 = vld [vmem:[#allocation5 + $0xd0] sm:$0xff]
  %v2322 = vld [vmem:[#allocation5 + $0xd8] sm:$0xff]
  %v2323 = vld [vmem:[#allocation5 + $0xe0] sm:$0xff]
  %v2324 = vld [vmem:[#allocation5 + $0xe8] sm:$0xff]
  %v2325 = vld [vmem:[#allocation5 + $0xf0] sm:$0xff]
  %v2326 = vld [vmem:[#allocation5 + $0xf8] sm:$0xff]
  %v2327 = vld [vmem:[#allocation5 + $0x100] sm:$0xff]
  %v2328 = vld [vmem:[#allocation5 + $0x108] sm:$0xff]
  %v2329 = vld [vmem:[#allocation5 + $0x110] sm:$0xff]
  %v2330 = vld [vmem:[#allocation5 + $0x118] sm:$0xff]
  %v2331 = vld [vmem:[#allocation5 + $0x120] sm:$0xff]
  %v2332 = vld [vmem:[#allocation5 + $0x128] sm:$0xff]
  %v2333 = vld [vmem:[#allocation5 + $0x130] sm:$0xff]
  %v2334 = vld [vmem:[#allocation5 + $0x138] sm:$0xff]
  %v2335 = vld [vmem:[#allocation5 + $0x140] sm:$0xff]
  %v2336 = vld [vmem:[#allocation5 + $0x148] sm:$0xff]
  %v2337 = vld [vmem:[#allocation5 + $0x150] sm:$0xff]
  %v2338 = vld [vmem:[#allocation5 + $0x158] sm:$0xff]
  %v2339 = vld [vmem:[#allocation5 + $0x160] sm:$0xff]
  %v2340 = vld [vmem:[#allocation5 + $0x168] sm:$0xff]
  %v2341 = vld [vmem:[#allocation5 + $0x170] sm:$0xff]
  %v2342 = vld [vmem:[#allocation5 + $0x178] sm:$0xff]
  %v2343 = vld [vmem:[#allocation5 + $0x180] sm:$0xff]
  %v2344 = vld [vmem:[#allocation5 + $0x188] sm:$0xff]
  %v2345 = vld [vmem:[#allocation5 + $0x190] sm:$0xff]
  %v2346 = vld [vmem:[#allocation5 + $0x198] sm:$0xff]
  %v2347 = vld [vmem:[#allocation5 + $0x1a0] sm:$0xff]
  %v2348 = vld [vmem:[#allocation5 + $0x1a8] sm:$0xff]
  %v2349 = vld [vmem:[#allocation5 + $0x1b0] sm:$0xff]
  %v2350 = vld [vmem:[#allocation5 + $0x1b8] sm:$0xff]
  %v2351 = vld [vmem:[#allocation5 + $0x1c0] sm:$0xff]
  %v2352 = vld [vmem:[#allocation5 + $0x1c8] sm:$0xff]
  %v2353 = vld [vmem:[#allocation5 + $0x1d0] sm:$0xff]
  %v2354 = vld [vmem:[#allocation5 + $0x1d8] sm:$0xff]
  %v2355 = vld [vmem:[#allocation5 + $0x1e0] sm:$0xff]
  %v2356 = vld [vmem:[#allocation5 + $0x1e8] sm:$0xff]
  %v2357 = vld [vmem:[#allocation5 + $0x1f0] sm:$0xff]
  %v2358 = vld [vmem:[#allocation5 + $0x1f8] sm:$0xff]
  %v2359 = vld [vmem:[#allocation5 + $0x200] sm:$0xff]
  %v2360 = vld [vmem:[#allocation5 + $0x208] sm:$0xff]
  %v2361 = vld [vmem:[#allocation5 + $0x210] sm:$0xff]
  %v2362 = vld [vmem:[#allocation5 + $0x218] sm:$0xff]
  %v2363 = vld [vmem:[#allocation5 + $0x220] sm:$0xff]
  %v2364 = vld [vmem:[#allocation5 + $0x228] sm:$0xff]
  %v2365 = vld [vmem:[#allocation5 + $0x230] sm:$0xff]
  %v2366 = vld [vmem:[#allocation5 + $0x238] sm:$0xff]
  %v2367 = vld [vmem:[#allocation5 + $0x240] sm:$0xff]
  %v2368 = vld [vmem:[#allocation5 + $0x248] sm:$0xff]
  %v2369 = vld [vmem:[#allocation5 + $0x250] sm:$0xff]
  %v2370 = vld [vmem:[#allocation5 + $0x258] sm:$0xff]
  %v2371 = vld [vmem:[#allocation5 + $0x260] sm:$0xff]
  %v2372 = vld [vmem:[#allocation5 + $0x268] sm:$0xff]
  %v2373 = vld [vmem:[#allocation5 + $0x270] sm:$0xff]
  %v2374 = vld [vmem:[#allocation5 + $0x278] sm:$0xff]
  %v2375 = vld [vmem:[#allocation5 + $0x280] sm:$0xff]
  %v2376 = vld [vmem:[#allocation5 + $0x288] sm:$0xff]
  %v2377 = vld [vmem:[#allocation5 + $0x290] sm:$0xff]
  %v2378 = vld [vmem:[#allocation5 + $0x298] sm:$0xff]
  %v2379 = vld [vmem:[#allocation5 + $0x2a0] sm:$0xff]
  %v2380 = vld [vmem:[#allocation5 + $0x2a8] sm:$0xff]
  %v2381 = vld [vmem:[#allocation5 + $0x2b0] sm:$0xff]
  %v2382 = vld [vmem:[#allocation5 + $0x2b8] sm:$0xff]
  %v2383 = vld [vmem:[#allocation5 + $0x2c0] sm:$0xff]
  %v2384 = vld [vmem:[#allocation5 + $0x2c8] sm:$0xff]
  %v2385 = vld [vmem:[#allocation5 + $0x2d0] sm:$0xff]
  %v2386 = vld [vmem:[#allocation5 + $0x2d8] sm:$0xff]
  %v2387 = vld [vmem:[#allocation5 + $0x2e0] sm:$0xff]
  %v2388 = vld [vmem:[#allocation5 + $0x2e8] sm:$0xff]
  %v2389 = vld [vmem:[#allocation5 + $0x2f0] sm:$0xff]
  %v2390 = vld [vmem:[#allocation5 + $0x2f8] sm:$0xff]
  %v2391 = vld [vmem:[#allocation5 + $0x300] sm:$0xff]
  %v2392 = vld [vmem:[#allocation5 + $0x308] sm:$0xff]
  %v2393 = vld [vmem:[#allocation5 + $0x310] sm:$0xff]
  %v2394 = vld [vmem:[#allocation5 + $0x318] sm:$0xff]
  %v2395 = vld [vmem:[#allocation5 + $0x320] sm:$0xff]
  %v2396 = vld [vmem:[#allocation5 + $0x328] sm:$0xff]
  %v2397 = vld [vmem:[#allocation5 + $0x330] sm:$0xff]
  %v2398 = vld [vmem:[#allocation5 + $0x338] sm:$0xff]
  %v2399 = vld [vmem:[#allocation5 + $0x340] sm:$0xff]
  %v2400 = vld [vmem:[#allocation5 + $0x348] sm:$0xff]
  %v2401 = vld [vmem:[#allocation5 + $0x350] sm:$0xff]
  %v2402 = vld [vmem:[#allocation5 + $0x358] sm:$0xff]
  %v2403 = vld [vmem:[#allocation5 + $0x360] sm:$0xff]
  %v2404 = vld [vmem:[#allocation5 + $0x368] sm:$0xff]
  %v2405 = vld [vmem:[#allocation5 + $0x370] sm:$0xff]
  %v2406 = vld [vmem:[#allocation5 + $0x378] sm:$0xff]
  %v2407 = vld [vmem:[#allocation5 + $0x380] sm:$0xff]
  %v2408 = vld [vmem:[#allocation5 + $0x388] sm:$0xff]
  %v2409 = vld [vmem:[#allocation5 + $0x390] sm:$0xff]
  %v2410 = vld [vmem:[#allocation5 + $0x398] sm:$0xff]
  %v2411 = vld [vmem:[#allocation5 + $0x3a0] sm:$0xff]
  %v2412 = vld [vmem:[#allocation5 + $0x3a8] sm:$0xff]
  %v2413 = vld [vmem:[#allocation5 + $0x3b0] sm:$0xff]
  %v2414 = vld [vmem:[#allocation5 + $0x3b8] sm:$0xff]
  %v2415 = vld [vmem:[#allocation5 + $0x3c0] sm:$0xff]
  %v2416 = vld [vmem:[#allocation5 + $0x3c8] sm:$0xff]
  %v2417 = vld [vmem:[#allocation5 + $0x3d0] sm:$0xff]
  %v2418 = vld [vmem:[#allocation5 + $0x3d8] sm:$0xff]
  %v2419 = vld [vmem:[#allocation5 + $0x3e0] sm:$0xff]
  %v2420 = vld [vmem:[#allocation5 + $0x3e8] sm:$0xff]
  %v2421 = vld [vmem:[#allocation5 + $0x3f0] sm:$0xff]
  %v2422 = vld [vmem:[#allocation5 + $0x3f8] sm:$0xff]
  %v2423 = vld [vmem:[%s4] sm:$0xf]
  %v2425 = vperm.slane %v2423, 0
  %v2426 = vperm.slane %v2423, 1
  %v2427 = vperm.slane %v2423, 2
  %v2428 = vperm.slane %v2423, 3
  %v2561 = vunpack.c.l.b16 %v2295
  %v2562 = vunpack.c.h.b16 %v2295
  %v2563 = vunpack.c.l.b16 %v2296
  %v2564 = vunpack.c.h.b16 %v2296
  %v2565 = vunpack.c.l.b16 %v2297
  %v2566 = vunpack.c.h.b16 %v2297
  %v2567 = vunpack.c.l.b16 %v2298
  %v2568 = vunpack.c.h.b16 %v2298
  %v2569 = vunpack.c.l.b16 %v2299
  %v2570 = vunpack.c.h.b16 %v2299
  %v2571 = vunpack.c.l.b16 %v2300
  %v2572 = vunpack.c.h.b16 %v2300
  %v2573 = vunpack.c.l.b16 %v2301
  %v2574 = vunpack.c.h.b16 %v2301
  %v2575 = vunpack.c.l.b16 %v2302
  %v2576 = vunpack.c.h.b16 %v2302
  %v2577 = vunpack.c.l.b16 %v2303
  %v2578 = vunpack.c.h.b16 %v2303
  %v2579 = vunpack.c.l.b16 %v2304
  %v2580 = vunpack.c.h.b16 %v2304
  %v2581 = vunpack.c.l.b16 %v2305
  %v2582 = vunpack.c.h.b16 %v2305
  %v2583 = vunpack.c.l.b16 %v2306
  %v2584 = vunpack.c.h.b16 %v2306
  %v2585 = vunpack.c.l.b16 %v2307
  %v2586 = vunpack.c.h.b16 %v2307
  %v2587 = vunpack.c.l.b16 %v2308
  %v2588 = vunpack.c.h.b16 %v2308
  %v2589 = vunpack.c.l.b16 %v2309
  %v2590 = vunpack.c.h.b16 %v2309
  %v2591 = vunpack.c.l.b16 %v2310
  %v2592 = vunpack.c.h.b16 %v2310
  %v2593 = vunpack.c.l.b16 %v2311
  %v2594 = vunpack.c.h.b16 %v2311
  %v2595 = vunpack.c.l.b16 %v2312
  %v2596 = vunpack.c.h.b16 %v2312
  %v2597 = vunpack.c.l.b16 %v2313
  %v2598 = vunpack.c.h.b16 %v2313
  %v2599 = vunpack.c.l.b16 %v2314
  %v2600 = vunpack.c.h.b16 %v2314
  %v2601 = vunpack.c.l.b16 %v2315
  %v2602 = vunpack.c.h.b16 %v2315
  %v2603 = vunpack.c.l.b16 %v2316
  %v2604 = vunpack.c.h.b16 %v2316
  %v2605 = vunpack.c.l.b16 %v2317
  %v2606 = vunpack.c.h.b16 %v2317
  %v2607 = vunpack.c.l.b16 %v2318
  %v2608 = vunpack.c.h.b16 %v2318
  %v2609 = vunpack.c.l.b16 %v2319
  %v2610 = vunpack.c.h.b16 %v2319
  %v2611 = vunpack.c.l.b16 %v2320
  %v2612 = vunpack.c.h.b16 %v2320
  %v2613 = vunpack.c.l.b16 %v2321
  %v2614 = vunpack.c.h.b16 %v2321
  %v2615 = vunpack.c.l.b16 %v2322
  %v2616 = vunpack.c.h.b16 %v2322
  %v2617 = vunpack.c.l.b16 %v2323
  %v2618 = vunpack.c.h.b16 %v2323
  %v2619 = vunpack.c.l.b16 %v2324
  %v2620 = vunpack.c.h.b16 %v2324
  %v2621 = vunpack.c.l.b16 %v2325
  %v2622 = vunpack.c.h.b16 %v2325
  %v2623 = vunpack.c.l.b16 %v2326
  %v2624 = vunpack.c.h.b16 %v2326
  %v2625 = vunpack.c.l.b16 %v2327
  %v2626 = vunpack.c.h.b16 %v2327
  %v2627 = vunpack.c.l.b16 %v2328
  %v2628 = vunpack.c.h.b16 %v2328
  %v2629 = vunpack.c.l.b16 %v2329
  %v2630 = vunpack.c.h.b16 %v2329
  %v2631 = vunpack.c.l.b16 %v2330
  %v2632 = vunpack.c.h.b16 %v2330
  %v2633 = vunpack.c.l.b16 %v2331
  %v2634 = vunpack.c.h.b16 %v2331
  %v2635 = vunpack.c.l.b16 %v2332
  %v2636 = vunpack.c.h.b16 %v2332
  %v2637 = vunpack.c.l.b16 %v2333
  %v2638 = vunpack.c.h.b16 %v2333
  %v2639 = vunpack.c.l.b16 %v2334
  %v2640 = vunpack.c.h.b16 %v2334
  %v2641 = vunpack.c.l.b16 %v2335
  %v2642 = vunpack.c.h.b16 %v2335
  %v2643 = vunpack.c.l.b16 %v2336
  %v2644 = vunpack.c.h.b16 %v2336
  %v2645 = vunpack.c.l.b16 %v2337
  %v2646 = vunpack.c.h.b16 %v2337
  %v2647 = vunpack.c.l.b16 %v2338
  %v2648 = vunpack.c.h.b16 %v2338
  %v2649 = vunpack.c.l.b16 %v2339
  %v2650 = vunpack.c.h.b16 %v2339
  %v2651 = vunpack.c.l.b16 %v2340
  %v2652 = vunpack.c.h.b16 %v2340
  %v2653 = vunpack.c.l.b16 %v2341
  %v2654 = vunpack.c.h.b16 %v2341
  %v2655 = vunpack.c.l.b16 %v2342
  %v2656 = vunpack.c.h.b16 %v2342
  %v2657 = vunpack.c.l.b16 %v2343
  %v2658 = vunpack.c.h.b16 %v2343
  %v2659 = vunpack.c.l.b16 %v2344
  %v2660 = vunpack.c.h.b16 %v2344
  %v2661 = vunpack.c.l.b16 %v2345
  %v2662 = vunpack.c.h.b16 %v2345
  %v2663 = vunpack.c.l.b16 %v2346
  %v2664 = vunpack.c.h.b16 %v2346
  %v2665 = vunpack.c.l.b16 %v2347
  %v2666 = vunpack.c.h.b16 %v2347
  %v2667 = vunpack.c.l.b16 %v2348
  %v2668 = vunpack.c.h.b16 %v2348
  %v2669 = vunpack.c.l.b16 %v2349
  %v2670 = vunpack.c.h.b16 %v2349
  %v2671 = vunpack.c.l.b16 %v2350
  %v2672 = vunpack.c.h.b16 %v2350
  %v2673 = vunpack.c.l.b16 %v2351
  %v2674 = vunpack.c.h.b16 %v2351
  %v2675 = vunpack.c.l.b16 %v2352
  %v2676 = vunpack.c.h.b16 %v2352
  %v2677 = vunpack.c.l.b16 %v2353
  %v2678 = vunpack.c.h.b16 %v2353
  %v2679 = vunpack.c.l.b16 %v2354
  %v2680 = vunpack.c.h.b16 %v2354
  %v2681 = vunpack.c.l.b16 %v2355
  %v2682 = vunpack.c.h.b16 %v2355
  %v2683 = vunpack.c.l.b16 %v2356
  %v2684 = vunpack.c.h.b16 %v2356
  %v2685 = vunpack.c.l.b16 %v2357
  %v2686 = vunpack.c.h.b16 %v2357
  %v2687 = vunpack.c.l.b16 %v2358
  %v2688 = vunpack.c.h.b16 %v2358
  %v2689 = vunpack.c.l.b16 %v2359
  %v2690 = vunpack.c.h.b16 %v2359
  %v2691 = vunpack.c.l.b16 %v2360
  %v2692 = vunpack.c.h.b16 %v2360
  %v2693 = vunpack.c.l.b16 %v2361
  %v2694 = vunpack.c.h.b16 %v2361
  %v2695 = vunpack.c.l.b16 %v2362
  %v2696 = vunpack.c.h.b16 %v2362
  %v2697 = vunpack.c.l.b16 %v2363
  %v2698 = vunpack.c.h.b16 %v2363
  %v2699 = vunpack.c.l.b16 %v2364
  %v2700 = vunpack.c.h.b16 %v2364
  %v2701 = vunpack.c.l.b16 %v2365
  %v2702 = vunpack.c.h.b16 %v2365
  %v2703 = vunpack.c.l.b16 %v2366
  %v2704 = vunpack.c.h.b16 %v2366
  %v2705 = vunpack.c.l.b16 %v2367
  %v2706 = vunpack.c.h.b16 %v2367
  %v2707 = vunpack.c.l.b16 %v2368
  %v2708 = vunpack.c.h.b16 %v2368
  %v2709 = vunpack.c.l.b16 %v2369
  %v2710 = vunpack.c.h.b16 %v2369
  %v2711 = vunpack.c.l.b16 %v2370
  %v2712 = vunpack.c.h.b16 %v2370
  %v2713 = vunpack.c.l.b16 %v2371
  %v2714 = vunpack.c.h.b16 %v2371
  %v2715 = vunpack.c.l.b16 %v2372
  %v2716 = vunpack.c.h.b16 %v2372
  %v2717 = vunpack.c.l.b16 %v2373
  %v2718 = vunpack.c.h.b16 %v2373
  %v2719 = vunpack.c.l.b16 %v2374
  %v2720 = vunpack.c.h.b16 %v2374
  %v2721 = vunpack.c.l.b16 %v2375
  %v2722 = vunpack.c.h.b16 %v2375
  %v2723 = vunpack.c.l.b16 %v2376
  %v2724 = vunpack.c.h.b16 %v2376
  %v2725 = vunpack.c.l.b16 %v2377
  %v2726 = vunpack.c.h.b16 %v2377
  %v2727 = vunpack.c.l.b16 %v2378
  %v2728 = vunpack.c.h.b16 %v2378
  %v2729 = vunpack.c.l.b16 %v2379
  %v2730 = vunpack.c.h.b16 %v2379
  %v2731 = vunpack.c.l.b16 %v2380
  %v2732 = vunpack.c.h.b16 %v2380
  %v2733 = vunpack.c.l.b16 %v2381
  %v2734 = vunpack.c.h.b16 %v2381
  %v2735 = vunpack.c.l.b16 %v2382
  %v2736 = vunpack.c.h.b16 %v2382
  %v2737 = vunpack.c.l.b16 %v2383
  %v2738 = vunpack.c.h.b16 %v2383
  %v2739 = vunpack.c.l.b16 %v2384
  %v2740 = vunpack.c.h.b16 %v2384
  %v2741 = vunpack.c.l.b16 %v2385
  %v2742 = vunpack.c.h.b16 %v2385
  %v2743 = vunpack.c.l.b16 %v2386
  %v2744 = vunpack.c.h.b16 %v2386
  %v2745 = vunpack.c.l.b16 %v2387
  %v2746 = vunpack.c.h.b16 %v2387
  %v2747 = vunpack.c.l.b16 %v2388
  %v2748 = vunpack.c.h.b16 %v2388
  %v2749 = vunpack.c.l.b16 %v2389
  %v2750 = vunpack.c.h.b16 %v2389
  %v2751 = vunpack.c.l.b16 %v2390
  %v2752 = vunpack.c.h.b16 %v2390
  %v2753 = vunpack.c.l.b16 %v2391
  %v2754 = vunpack.c.h.b16 %v2391
  %v2755 = vunpack.c.l.b16 %v2392
  %v2756 = vunpack.c.h.b16 %v2392
  %v2757 = vunpack.c.l.b16 %v2393
  %v2758 = vunpack.c.h.b16 %v2393
  %v2759 = vunpack.c.l.b16 %v2394
  %v2760 = vunpack.c.h.b16 %v2394
  %v2761 = vunpack.c.l.b16 %v2395
  %v2762 = vunpack.c.h.b16 %v2395
  %v2763 = vunpack.c.l.b16 %v2396
  %v2764 = vunpack.c.h.b16 %v2396
  %v2765 = vunpack.c.l.b16 %v2397
  %v2766 = vunpack.c.h.b16 %v2397
  %v2767 = vunpack.c.l.b16 %v2398
  %v2768 = vunpack.c.h.b16 %v2398
  %v2769 = vunpack.c.l.b16 %v2399
  %v2770 = vunpack.c.h.b16 %v2399
  %v2771 = vunpack.c.l.b16 %v2400
  %v2772 = vunpack.c.h.b16 %v2400
  %v2773 = vunpack.c.l.b16 %v2401
  %v2774 = vunpack.c.h.b16 %v2401
  %v2775 = vunpack.c.l.b16 %v2402
  %v2776 = vunpack.c.h.b16 %v2402
  %v2777 = vunpack.c.l.b16 %v2403
  %v2778 = vunpack.c.h.b16 %v2403
  %v2779 = vunpack.c.l.b16 %v2404
  %v2780 = vunpack.c.h.b16 %v2404
  %v2781 = vunpack.c.l.b16 %v2405
  %v2782 = vunpack.c.h.b16 %v2405
  %v2783 = vunpack.c.l.b16 %v2406
  %v2784 = vunpack.c.h.b16 %v2406
  %v2785 = vunpack.c.l.b16 %v2407
  %v2786 = vunpack.c.h.b16 %v2407
  %v2787 = vunpack.c.l.b16 %v2408
  %v2788 = vunpack.c.h.b16 %v2408
  %v2789 = vunpack.c.l.b16 %v2409
  %v2790 = vunpack.c.h.b16 %v2409
  %v2791 = vunpack.c.l.b16 %v2410
  %v2792 = vunpack.c.h.b16 %v2410
  %v2793 = vunpack.c.l.b16 %v2411
  %v2794 = vunpack.c.h.b16 %v2411
  %v2795 = vunpack.c.l.b16 %v2412
  %v2796 = vunpack.c.h.b16 %v2412
  %v2797 = vunpack.c.l.b16 %v2413
  %v2798 = vunpack.c.h.b16 %v2413
  %v2799 = vunpack.c.l.b16 %v2414
  %v2800 = vunpack.c.h.b16 %v2414
  %v2801 = vunpack.c.l.b16 %v2415
  %v2802 = vunpack.c.h.b16 %v2415
  %v2803 = vunpack.c.l.b16 %v2416
  %v2804 = vunpack.c.h.b16 %v2416
  %v2805 = vunpack.c.l.b16 %v2417
  %v2806 = vunpack.c.h.b16 %v2417
  %v2807 = vunpack.c.l.b16 %v2418
  %v2808 = vunpack.c.h.b16 %v2418
  %v2809 = vunpack.c.l.b16 %v2419
  %v2810 = vunpack.c.h.b16 %v2419
  %v2811 = vunpack.c.l.b16 %v2420
  %v2812 = vunpack.c.h.b16 %v2420
  %v2813 = vunpack.c.l.b16 %v2421
  %v2814 = vunpack.c.h.b16 %v2421
  %v2815 = vunpack.c.l.b16 %v2422
  %v2816 = vunpack.c.h.b16 %v2422
  %v2817 = vpack.c.b16 %v2565, %v2561
  %v2818 = vpack.c.b16 %v2566, %v2562
  %v2819 = vpack.c.b16 %v2567, %v2563
  %v2820 = vpack.c.b16 %v2568, %v2564
  %v2821 = vpack.c.b16 %v2573, %v2569
  %v2822 = vpack.c.b16 %v2574, %v2570
  %v2823 = vpack.c.b16 %v2575, %v2571
  %v2824 = vpack.c.b16 %v2576, %v2572
  %v2825 = vpack.c.b16 %v2581, %v2577
  %v2826 = vpack.c.b16 %v2582, %v2578
  %v2827 = vpack.c.b16 %v2583, %v2579
  %v2828 = vpack.c.b16 %v2584, %v2580
  %v2829 = vpack.c.b16 %v2589, %v2585
  %v2830 = vpack.c.b16 %v2590, %v2586
  %v2831 = vpack.c.b16 %v2591, %v2587
  %v2832 = vpack.c.b16 %v2592, %v2588
  %v2833 = vpack.c.b16 %v2597, %v2593
  %v2834 = vpack.c.b16 %v2598, %v2594
  %v2835 = vpack.c.b16 %v2599, %v2595
  %v2836 = vpack.c.b16 %v2600, %v2596
  %v2837 = vpack.c.b16 %v2605, %v2601
  %v2838 = vpack.c.b16 %v2606, %v2602
  %v2839 = vpack.c.b16 %v2607, %v2603
  %v2840 = vpack.c.b16 %v2608, %v2604
  %v2841 = vpack.c.b16 %v2613, %v2609
  %v2842 = vpack.c.b16 %v2614, %v2610
  %v2843 = vpack.c.b16 %v2615, %v2611
  %v2844 = vpack.c.b16 %v2616, %v2612
  %v2845 = vpack.c.b16 %v2621, %v2617
  %v2846 = vpack.c.b16 %v2622, %v2618
  %v2847 = vpack.c.b16 %v2623, %v2619
  %v2848 = vpack.c.b16 %v2624, %v2620
  %v2849 = vpack.c.b16 %v2629, %v2625
  %v2850 = vpack.c.b16 %v2630, %v2626
  %v2851 = vpack.c.b16 %v2631, %v2627
  %v2852 = vpack.c.b16 %v2632, %v2628
  %v2853 = vpack.c.b16 %v2637, %v2633
  %v2854 = vpack.c.b16 %v2638, %v2634
  %v2855 = vpack.c.b16 %v2639, %v2635
  %v2856 = vpack.c.b16 %v2640, %v2636
  %v2857 = vpack.c.b16 %v2645, %v2641
  %v2858 = vpack.c.b16 %v2646, %v2642
  %v2859 = vpack.c.b16 %v2647, %v2643
  %v2860 = vpack.c.b16 %v2648, %v2644
  %v2861 = vpack.c.b16 %v2653, %v2649
  %v2862 = vpack.c.b16 %v2654, %v2650
  %v2863 = vpack.c.b16 %v2655, %v2651
  %v2864 = vpack.c.b16 %v2656, %v2652
  %v2865 = vpack.c.b16 %v2661, %v2657
  %v2866 = vpack.c.b16 %v2662, %v2658
  %v2867 = vpack.c.b16 %v2663, %v2659
  %v2868 = vpack.c.b16 %v2664, %v2660
  %v2869 = vpack.c.b16 %v2669, %v2665
  %v2870 = vpack.c.b16 %v2670, %v2666
  %v2871 = vpack.c.b16 %v2671, %v2667
  %v2872 = vpack.c.b16 %v2672, %v2668
  %v2873 = vpack.c.b16 %v2677, %v2673
  %v2874 = vpack.c.b16 %v2678, %v2674
  %v2875 = vpack.c.b16 %v2679, %v2675
  %v2876 = vpack.c.b16 %v2680, %v2676
  %v2877 = vpack.c.b16 %v2685, %v2681
  %v2878 = vpack.c.b16 %v2686, %v2682
  %v2879 = vpack.c.b16 %v2687, %v2683
  %v2880 = vpack.c.b16 %v2688, %v2684
  %v2881 = vpack.c.b16 %v2693, %v2689
  %v2882 = vpack.c.b16 %v2694, %v2690
  %v2883 = vpack.c.b16 %v2695, %v2691
  %v2884 = vpack.c.b16 %v2696, %v2692
  %v2885 = vpack.c.b16 %v2701, %v2697
  %v2886 = vpack.c.b16 %v2702, %v2698
  %v2887 = vpack.c.b16 %v2703, %v2699
  %v2888 = vpack.c.b16 %v2704, %v2700
  %v2889 = vpack.c.b16 %v2709, %v2705
  %v2890 = vpack.c.b16 %v2710, %v2706
  %v2891 = vpack.c.b16 %v2711, %v2707
  %v2892 = vpack.c.b16 %v2712, %v2708
  %v2893 = vpack.c.b16 %v2717, %v2713
  %v2894 = vpack.c.b16 %v2718, %v2714
  %v2895 = vpack.c.b16 %v2719, %v2715
  %v2896 = vpack.c.b16 %v2720, %v2716
  %v2897 = vpack.c.b16 %v2725, %v2721
  %v2898 = vpack.c.b16 %v2726, %v2722
  %v2899 = vpack.c.b16 %v2727, %v2723
  %v2900 = vpack.c.b16 %v2728, %v2724
  %v2901 = vpack.c.b16 %v2733, %v2729
  %v2902 = vpack.c.b16 %v2734, %v2730
  %v2903 = vpack.c.b16 %v2735, %v2731
  %v2904 = vpack.c.b16 %v2736, %v2732
  %v2905 = vpack.c.b16 %v2741, %v2737
  %v2906 = vpack.c.b16 %v2742, %v2738
  %v2907 = vpack.c.b16 %v2743, %v2739
  %v2908 = vpack.c.b16 %v2744, %v2740
  %v2909 = vpack.c.b16 %v2749, %v2745
  %v2910 = vpack.c.b16 %v2750, %v2746
  %v2911 = vpack.c.b16 %v2751, %v2747
  %v2912 = vpack.c.b16 %v2752, %v2748
  %v2913 = vpack.c.b16 %v2757, %v2753
  %v2914 = vpack.c.b16 %v2758, %v2754
  %v2915 = vpack.c.b16 %v2759, %v2755
  %v2916 = vpack.c.b16 %v2760, %v2756
  %v2917 = vpack.c.b16 %v2765, %v2761
  %v2918 = vpack.c.b16 %v2766, %v2762
  %v2919 = vpack.c.b16 %v2767, %v2763
  %v2920 = vpack.c.b16 %v2768, %v2764
  %v2921 = vpack.c.b16 %v2773, %v2769
  %v2922 = vpack.c.b16 %v2774, %v2770
  %v2923 = vpack.c.b16 %v2775, %v2771
  %v2924 = vpack.c.b16 %v2776, %v2772
  %v2925 = vpack.c.b16 %v2781, %v2777
  %v2926 = vpack.c.b16 %v2782, %v2778
  %v2927 = vpack.c.b16 %v2783, %v2779
  %v2928 = vpack.c.b16 %v2784, %v2780
  %v2929 = vpack.c.b16 %v2789, %v2785
  %v2930 = vpack.c.b16 %v2790, %v2786
  %v2931 = vpack.c.b16 %v2791, %v2787
  %v2932 = vpack.c.b16 %v2792, %v2788
  %v2933 = vpack.c.b16 %v2797, %v2793
  %v2934 = vpack.c.b16 %v2798, %v2794
  %v2935 = vpack.c.b16 %v2799, %v2795
  %v2936 = vpack.c.b16 %v2800, %v2796
  %v2937 = vpack.c.b16 %v2805, %v2801
  %v2938 = vpack.c.b16 %v2806, %v2802
  %v2939 = vpack.c.b16 %v2807, %v2803
  %v2940 = vpack.c.b16 %v2808, %v2804
  %v2941 = vpack.c.b16 %v2813, %v2809
  %v2942 = vpack.c.b16 %v2814, %v2810
  %v2943 = vpack.c.b16 %v2815, %v2811
  %v2944 = vpack.c.b16 %v2816, %v2812
  %3073 = vmatpush.bf16.msra.mxu0 %v2845
  %3074 = vmatpush.bf16.msra.mxu0 %v2841
  %3075 = vmatpush.bf16.msra.mxu0 %v2837
  %3076 = vmatpush.bf16.msra.mxu0 %v2833
  %3077 = vmatpush.bf16.msra.mxu0 %v2829
  %3078 = vmatpush.bf16.msra.mxu0 %v2825
  %3079 = vmatpush.bf16.msra.mxu0 %v2821
  %3080 = vmatpush.bf16.msra.mxu0 %v2817
  %3081 = vmatmul.bf16.gmra.mxu0 %v2291
  %v3082 = vpop.f32.mrf.mxu0
  %v3083 = vadd.f32 %v2425, %v3082
  %v3084 = vpop.f32.mrf.mxu0
  %v3085 = vadd.f32 %v2425, %v3084
  %3086 = vdwg.mxu0
  %3087 = vmatpush.bf16.msra.mxu0 %v2877
  %3088 = vmatpush.bf16.msra.mxu0 %v2873
  %3089 = vmatpush.bf16.msra.mxu0 %v2869
  %3090 = vmatpush.bf16.msra.mxu0 %v2865
  %3091 = vmatpush.bf16.msra.mxu0 %v2861
  %3092 = vmatpush.bf16.msra.mxu0 %v2857
  %3093 = vmatpush.bf16.msra.mxu0 %v2853
  %3094 = vmatpush.bf16.msra.mxu0 %v2849
  %3095 = vmatmul.bf16.gmra.mxu0 %v2292
  %v3096 = vpop.f32.mrf.mxu0
  %v3097 = vadd.f32 %v3083, %v3096
  %v3098 = vpop.f32.mrf.mxu0
  %v3099 = vadd.f32 %v3085, %v3098
  %3100 = vdwg.mxu0
  %3101 = vmatpush.bf16.msra.mxu0 %v2909
  %3102 = vmatpush.bf16.msra.mxu0 %v2905
  %3103 = vmatpush.bf16.msra.mxu0 %v2901
  %3104 = vmatpush.bf16.msra.mxu0 %v2897
  %3105 = vmatpush.bf16.msra.mxu0 %v2893
  %3106 = vmatpush.bf16.msra.mxu0 %v2889
  %3107 = vmatpush.bf16.msra.mxu0 %v2885
  %3108 = vmatpush.bf16.msra.mxu0 %v2881
  %3109 = vmatmul.bf16.gmra.mxu0 %v2293
  %v3110 = vpop.f32.mrf.mxu0
  %v3111 = vadd.f32 %v3097, %v3110
  %v3112 = vpop.f32.mrf.mxu0
  %v3113 = vadd.f32 %v3099, %v3112
  %3114 = vdwg.mxu0
  %3115 = vmatpush.bf16.msra.mxu0 %v2941
  %3116 = vmatpush.bf16.msra.mxu0 %v2937
  %3117 = vmatpush.bf16.msra.mxu0 %v2933
  %3118 = vmatpush.bf16.msra.mxu0 %v2929
  %3119 = vmatpush.bf16.msra.mxu0 %v2925
  %3120 = vmatpush.bf16.msra.mxu0 %v2921
  %3121 = vmatpush.bf16.msra.mxu0 %v2917
  %3122 = vmatpush.bf16.msra.mxu0 %v2913
  %3123 = vmatmul.bf16.gmra.mxu0 %v2294
  %v3124 = vpop.f32.mrf.mxu0
  %v3125 = vadd.f32 %v3111, %v3124
  %v3126 = vpop.f32.mrf.mxu0
  %v3127 = vadd.f32 %v3113, %v3126
  %3128 = vdwg.mxu0
  %3129 = vmatpush.bf16.msra.mxu0 %v2846
  %3130 = vmatpush.bf16.msra.mxu0 %v2842
  %3131 = vmatpush.bf16.msra.mxu0 %v2838
  %3132 = vmatpush.bf16.msra.mxu0 %v2834
  %3133 = vmatpush.bf16.msra.mxu0 %v2830
  %3134 = vmatpush.bf16.msra.mxu0 %v2826
  %3135 = vmatpush.bf16.msra.mxu0 %v2822
  %3136 = vmatpush.bf16.msra.mxu0 %v2818
  %3137 = vmatmul.bf16.gmra.mxu0 %v2291
  %v3138 = vpop.f32.mrf.mxu0
  %v3139 = vadd.f32 %v2426, %v3138
  %v3140 = vpop.f32.mrf.mxu0
  %v3141 = vadd.f32 %v2426, %v3140
  %3142 = vdwg.mxu0
  %3143 = vmatpush.bf16.msra.mxu0 %v2878
  %3144 = vmatpush.bf16.msra.mxu0 %v2874
  %3145 = vmatpush.bf16.msra.mxu0 %v2870
  %3146 = vmatpush.bf16.msra.mxu0 %v2866
  %3147 = vmatpush.bf16.msra.mxu0 %v2862
  %3148 = vmatpush.bf16.msra.mxu0 %v2858
  %3149 = vmatpush.bf16.msra.mxu0 %v2854
  %3150 = vmatpush.bf16.msra.mxu0 %v2850
  %3151 = vmatmul.bf16.gmra.mxu0 %v2292
  %v3152 = vpop.f32.mrf.mxu0
  %v3153 = vadd.f32 %v3139, %v3152
  %v3154 = vpop.f32.mrf.mxu0
  %v3155 = vadd.f32 %v3141, %v3154
  %3156 = vdwg.mxu0
  %3157 = vmatpush.bf16.msra.mxu0 %v2910
  %3158 = vmatpush.bf16.msra.mxu0 %v2906
  %3159 = vmatpush.bf16.msra.mxu0 %v2902
  %3160 = vmatpush.bf16.msra.mxu0 %v2898
  %3161 = vmatpush.bf16.msra.mxu0 %v2894
  %3162 = vmatpush.bf16.msra.mxu0 %v2890
  %3163 = vmatpush.bf16.msra.mxu0 %v2886
  %3164 = vmatpush.bf16.msra.mxu0 %v2882
  %3165 = vmatmul.bf16.gmra.mxu0 %v2293
  %v3166 = vpop.f32.mrf.mxu0
  %v3167 = vadd.f32 %v3153, %v3166
  %v3168 = vpop.f32.mrf.mxu0
  %v3169 = vadd.f32 %v3155, %v3168
  %3170 = vdwg.mxu0
  %3171 = vmatpush.bf16.msra.mxu0 %v2942
  %3172 = vmatpush.bf16.msra.mxu0 %v2938
  %3173 = vmatpush.bf16.msra.mxu0 %v2934
  %3174 = vmatpush.bf16.msra.mxu0 %v2930
  %3175 = vmatpush.bf16.msra.mxu0 %v2926
  %3176 = vmatpush.bf16.msra.mxu0 %v2922
  %3177 = vmatpush.bf16.msra.mxu0 %v2918
  %3178 = vmatpush.bf16.msra.mxu0 %v2914
  %3179 = vmatmul.bf16.gmra.mxu0 %v2294
  %v3180 = vpop.f32.mrf.mxu0
  %v3181 = vadd.f32 %v3167, %v3180
  %v3182 = vpop.f32.mrf.mxu0
  %v3183 = vadd.f32 %v3169, %v3182
  %3184 = vdwg.mxu0
  %3185 = vmatpush.bf16.msra.mxu0 %v2847
  %3186 = vmatpush.bf16.msra.mxu0 %v2843
  %3187 = vmatpush.bf16.msra.mxu0 %v2839
  %3188 = vmatpush.bf16.msra.mxu0 %v2835
  %3189 = vmatpush.bf16.msra.mxu0 %v2831
  %3190 = vmatpush.bf16.msra.mxu0 %v2827
  %3191 = vmatpush.bf16.msra.mxu0 %v2823
  %3192 = vmatpush.bf16.msra.mxu0 %v2819
  %3193 = vmatmul.bf16.gmra.mxu0 %v2291
  %v3194 = vpop.f32.mrf.mxu0
  %v3195 = vadd.f32 %v2427, %v3194
  %v3196 = vpop.f32.mrf.mxu0
  %v3197 = vadd.f32 %v2427, %v3196
  %3198 = vdwg.mxu0
  %3199 = vmatpush.bf16.msra.mxu0 %v2879
  %3200 = vmatpush.bf16.msra.mxu0 %v2875
  %3201 = vmatpush.bf16.msra.mxu0 %v2871
  %3202 = vmatpush.bf16.msra.mxu0 %v2867
  %3203 = vmatpush.bf16.msra.mxu0 %v2863
  %3204 = vmatpush.bf16.msra.mxu0 %v2859
  %3205 = vmatpush.bf16.msra.mxu0 %v2855
  %3206 = vmatpush.bf16.msra.mxu0 %v2851
  %3207 = vmatmul.bf16.gmra.mxu0 %v2292
  %v3208 = vpop.f32.mrf.mxu0
  %v3209 = vadd.f32 %v3195, %v3208
  %v3210 = vpop.f32.mrf.mxu0
  %v3211 = vadd.f32 %v3197, %v3210
  %3212 = vdwg.mxu0
  %3213 = vmatpush.bf16.msra.mxu0 %v2911
  %3214 = vmatpush.bf16.msra.mxu0 %v2907
  %3215 = vmatpush.bf16.msra.mxu0 %v2903
  %3216 = vmatpush.bf16.msra.mxu0 %v2899
  %3217 = vmatpush.bf16.msra.mxu0 %v2895
  %3218 = vmatpush.bf16.msra.mxu0 %v2891
  %3219 = vmatpush.bf16.msra.mxu0 %v2887
  %3220 = vmatpush.bf16.msra.mxu0 %v2883
  %3221 = vmatmul.bf16.gmra.mxu0 %v2293
  %v3222 = vpop.f32.mrf.mxu0
  %v3223 = vadd.f32 %v3209, %v3222
  %v3224 = vpop.f32.mrf.mxu0
  %v3225 = vadd.f32 %v3211, %v3224
  %3226 = vdwg.mxu0
  %3227 = vmatpush.bf16.msra.mxu0 %v2943
  %3228 = vmatpush.bf16.msra.mxu0 %v2939
  %3229 = vmatpush.bf16.msra.mxu0 %v2935
  %3230 = vmatpush.bf16.msra.mxu0 %v2931
  %3231 = vmatpush.bf16.msra.mxu0 %v2927
  %3232 = vmatpush.bf16.msra.mxu0 %v2923
  %3233 = vmatpush.bf16.msra.mxu0 %v2919
  %3234 = vmatpush.bf16.msra.mxu0 %v2915
  %3235 = vmatmul.bf16.gmra.mxu0 %v2294
  %v3236 = vpop.f32.mrf.mxu0
  %v3237 = vadd.f32 %v3223, %v3236
  %v3238 = vpop.f32.mrf.mxu0
  %v3239 = vadd.f32 %v3225, %v3238
  %3240 = vdwg.mxu0
  %3241 = vmatpush.bf16.msra.mxu0 %v2848
  %3242 = vmatpush.bf16.msra.mxu0 %v2844
  %3243 = vmatpush.bf16.msra.mxu0 %v2840
  %3244 = vmatpush.bf16.msra.mxu0 %v2836
  %3245 = vmatpush.bf16.msra.mxu0 %v2832
  %3246 = vmatpush.bf16.msra.mxu0 %v2828
  %3247 = vmatpush.bf16.msra.mxu0 %v2824
  %3248 = vmatpush.bf16.msra.mxu0 %v2820
  %3249 = vmatmul.bf16.gmra.mxu0 %v2291
  %v3250 = vpop.f32.mrf.mxu0
  %v3251 = vadd.f32 %v2428, %v3250
  %v3252 = vpop.f32.mrf.mxu0
  %v3253 = vadd.f32 %v2428, %v3252
  %3254 = vdwg.mxu0
  %3255 = vmatpush.bf16.msra.mxu0 %v2880
  %3256 = vmatpush.bf16.msra.mxu0 %v2876
  %3257 = vmatpush.bf16.msra.mxu0 %v2872
  %3258 = vmatpush.bf16.msra.mxu0 %v2868
  %3259 = vmatpush.bf16.msra.mxu0 %v2864
  %3260 = vmatpush.bf16.msra.mxu0 %v2860
  %3261 = vmatpush.bf16.msra.mxu0 %v2856
  %3262 = vmatpush.bf16.msra.mxu0 %v2852
  %3263 = vmatmul.bf16.gmra.mxu0 %v2292
  %v3264 = vpop.f32.mrf.mxu0
  %v3265 = vadd.f32 %v3251, %v3264
  %v3266 = vpop.f32.mrf.mxu0
  %v3267 = vadd.f32 %v3253, %v3266
  %3268 = vdwg.mxu0
  %3269 = vmatpush.bf16.msra.mxu0 %v2912
  %3270 = vmatpush.bf16.msra.mxu0 %v2908
  %3271 = vmatpush.bf16.msra.mxu0 %v2904
  %3272 = vmatpush.bf16.msra.mxu0 %v2900
  %3273 = vmatpush.bf16.msra.mxu0 %v2896
  %3274 = vmatpush.bf16.msra.mxu0 %v2892
  %3275 = vmatpush.bf16.msra.mxu0 %v2888
  %3276 = vmatpush.bf16.msra.mxu0 %v2884
  %3277 = vmatmul.bf16.gmra.mxu0 %v2293
  %v3278 = vpop.f32.mrf.mxu0
  %v3279 = vadd.f32 %v3265, %v3278
  %v3280 = vpop.f32.mrf.mxu0
  %v3281 = vadd.f32 %v3267, %v3280
  %3282 = vdwg.mxu0
  %3283 = vmatpush.bf16.msra.mxu0 %v2944
  %3284 = vmatpush.bf16.msra.mxu0 %v2940
  %3285 = vmatpush.bf16.msra.mxu0 %v2936
  %3286 = vmatpush.bf16.msra.mxu0 %v2932
  %3287 = vmatpush.bf16.msra.mxu0 %v2928
  %3288 = vmatpush.bf16.msra.mxu0 %v2924
  %3289 = vmatpush.bf16.msra.mxu0 %v2920
  %3290 = vmatpush.bf16.msra.mxu0 %v2916
  %3291 = vmatmul.bf16.gmra.mxu0 %v2294
  %v3292 = vpop.f32.mrf.mxu0
  %v3293 = vadd.f32 %v3279, %v3292
  %v3294 = vpop.f32.mrf.mxu0
  %v3295 = vadd.f32 %v3281, %v3294
  %3296 = vdwg.mxu0
  %v3297 = vmul.f32 %v3125, 0.01
  %v3298 = vmul.f32 %v3181, 0.01
  %v3299 = vmul.f32 %v3237, 0.01
  %v3300 = vmul.f32 %v3293, 0.01
  %v3301 = vmul.f32 %v3127, 0.01
  %v3302 = vmul.f32 %v3183, 0.01
  %v3303 = vmul.f32 %v3239, 0.01
  %v3304 = vmul.f32 %v3295, 0.01
  %v3305 = vmax.f32 %v3125, %v3297
  %v3306 = vmax.f32 %v3181, %v3298
  %v3307 = vmax.f32 %v3237, %v3299
  %v3308 = vmax.f32 %v3293, %v3300
  %v3309 = vmax.f32 %v3127, %v3301
  %v3310 = vmax.f32 %v3183, %v3302
  %v3311 = vmax.f32 %v3239, %v3303
  %v3312 = vmax.f32 %v3295, %v3304
  %s3313 = smul.u32 %s239, 1
  %s3314 = sshll.u32 %s3313, 4
  %3315 = dma.done %s84, %s3314
  %v3316 = vpack.c.bf16 %v3309, %v3305
  %v3317 = vpack.c.bf16 %v3310, %v3306
  %v3318 = vpack.c.bf16 %v3311, %v3307
  %v3319 = vpack.c.bf16 %v3312, %v3308
  %v3320 = vld [vmem:[#allocation6] sm:$0xf]
  %v3321 = vld [vmem:[#allocation6 + $0x4] sm:$0xf]
  %v3322 = vld [vmem:[#allocation6 + $0x8] sm:$0xf]
  %v3323 = vld [vmem:[#allocation6 + $0xc] sm:$0xf]
  %v3324 = vld [vmem:[#allocation6 + $0x10] sm:$0xf]
  %v3325 = vld [vmem:[#allocation6 + $0x14] sm:$0xf]
  %v3326 = vld [vmem:[#allocation6 + $0x18] sm:$0xf]
  %v3327 = vld [vmem:[#allocation6 + $0x1c] sm:$0xf]
  %v3328 = vld [vmem:[#allocation6 + $0x20] sm:$0xf]
  %v3329 = vld [vmem:[#allocation6 + $0x24] sm:$0xf]
  %v3330 = vld [vmem:[#allocation6 + $0x28] sm:$0xf]
  %v3331 = vld [vmem:[#allocation6 + $0x2c] sm:$0xf]
  %v3332 = vld [vmem:[#allocation6 + $0x30] sm:$0xf]
  %v3333 = vld [vmem:[#allocation6 + $0x34] sm:$0xf]
  %v3334 = vld [vmem:[#allocation6 + $0x38] sm:$0xf]
  %v3335 = vld [vmem:[#allocation6 + $0x3c] sm:$0xf]
  %v3336 = vld [vmem:[#allocation6 + $0x40] sm:$0xf]
  %v3337 = vld [vmem:[#allocation6 + $0x44] sm:$0xf]
  %v3338 = vld [vmem:[#allocation6 + $0x48] sm:$0xf]
  %v3339 = vld [vmem:[#allocation6 + $0x4c] sm:$0xf]
  %v3340 = vld [vmem:[#allocation6 + $0x50] sm:$0xf]
  %v3341 = vld [vmem:[#allocation6 + $0x54] sm:$0xf]
  %v3342 = vld [vmem:[#allocation6 + $0x58] sm:$0xf]
  %v3343 = vld [vmem:[#allocation6 + $0x5c] sm:$0xf]
  %v3344 = vld [vmem:[#allocation6 + $0x60] sm:$0xf]
  %v3345 = vld [vmem:[#allocation6 + $0x64] sm:$0xf]
  %v3346 = vld [vmem:[#allocation6 + $0x68] sm:$0xf]
  %v3347 = vld [vmem:[#allocation6 + $0x6c] sm:$0xf]
  %v3348 = vld [vmem:[#allocation6 + $0x70] sm:$0xf]
  %v3349 = vld [vmem:[#allocation6 + $0x74] sm:$0xf]
  %v3350 = vld [vmem:[#allocation6 + $0x78] sm:$0xf]
  %v3351 = vld [vmem:[#allocation6 + $0x7c] sm:$0xf]
  %v3352 = vld [vmem:[#allocation6 + $0x80] sm:$0xf]
  %v3353 = vld [vmem:[#allocation6 + $0x84] sm:$0xf]
  %v3354 = vld [vmem:[#allocation6 + $0x88] sm:$0xf]
  %v3355 = vld [vmem:[#allocation6 + $0x8c] sm:$0xf]
  %v3356 = vld [vmem:[#allocation6 + $0x90] sm:$0xf]
  %v3357 = vld [vmem:[#allocation6 + $0x94] sm:$0xf]
  %v3358 = vld [vmem:[#allocation6 + $0x98] sm:$0xf]
  %v3359 = vld [vmem:[#allocation6 + $0x9c] sm:$0xf]
  %v3360 = vld [vmem:[#allocation6 + $0xa0] sm:$0xf]
  %v3361 = vld [vmem:[#allocation6 + $0xa4] sm:$0xf]
  %v3362 = vld [vmem:[#allocation6 + $0xa8] sm:$0xf]
  %v3363 = vld [vmem:[#allocation6 + $0xac] sm:$0xf]
  %v3364 = vld [vmem:[#allocation6 + $0xb0] sm:$0xf]
  %v3365 = vld [vmem:[#allocation6 + $0xb4] sm:$0xf]
  %v3366 = vld [vmem:[#allocation6 + $0xb8] sm:$0xf]
  %v3367 = vld [vmem:[#allocation6 + $0xbc] sm:$0xf]
  %v3368 = vld [vmem:[#allocation6 + $0xc0] sm:$0xf]
  %v3369 = vld [vmem:[#allocation6 + $0xc4] sm:$0xf]
  %v3370 = vld [vmem:[#allocation6 + $0xc8] sm:$0xf]
  %v3371 = vld [vmem:[#allocation6 + $0xcc] sm:$0xf]
  %v3372 = vld [vmem:[#allocation6 + $0xd0] sm:$0xf]
  %v3373 = vld [vmem:[#allocation6 + $0xd4] sm:$0xf]
  %v3374 = vld [vmem:[#allocation6 + $0xd8] sm:$0xf]
  %v3375 = vld [vmem:[#allocation6 + $0xdc] sm:$0xf]
  %v3376 = vld [vmem:[#allocation6 + $0xe0] sm:$0xf]
  %v3377 = vld [vmem:[#allocation6 + $0xe4] sm:$0xf]
  %v3378 = vld [vmem:[#allocation6 + $0xe8] sm:$0xf]
  %v3379 = vld [vmem:[#allocation6 + $0xec] sm:$0xf]
  %v3380 = vld [vmem:[#allocation6 + $0xf0] sm:$0xf]
  %v3381 = vld [vmem:[#allocation6 + $0xf4] sm:$0xf]
  %v3382 = vld [vmem:[#allocation6 + $0xf8] sm:$0xf]
  %v3383 = vld [vmem:[#allocation6 + $0xfc] sm:$0xf]
  %v3384 = vld [vmem:[%s5] sm:$0x1]
  %v3386 = vperm.slane %v3384, 0
  %v3452 = vunpack.c.l.b16 %v3320
  %v3453 = vunpack.c.l.b16 %v3321
  %v3454 = vunpack.c.l.b16 %v3322
  %v3455 = vunpack.c.l.b16 %v3323
  %v3456 = vunpack.c.l.b16 %v3324
  %v3457 = vunpack.c.l.b16 %v3325
  %v3458 = vunpack.c.l.b16 %v3326
  %v3459 = vunpack.c.l.b16 %v3327
  %v3460 = vunpack.c.l.b16 %v3328
  %v3461 = vunpack.c.l.b16 %v3329
  %v3462 = vunpack.c.l.b16 %v3330
  %v3463 = vunpack.c.l.b16 %v3331
  %v3464 = vunpack.c.l.b16 %v3332
  %v3465 = vunpack.c.l.b16 %v3333
  %v3466 = vunpack.c.l.b16 %v3334
  %v3467 = vunpack.c.l.b16 %v3335
  %v3468 = vunpack.c.l.b16 %v3336
  %v3469 = vunpack.c.l.b16 %v3337
  %v3470 = vunpack.c.l.b16 %v3338
  %v3471 = vunpack.c.l.b16 %v3339
  %v3472 = vunpack.c.l.b16 %v3340
  %v3473 = vunpack.c.l.b16 %v3341
  %v3474 = vunpack.c.l.b16 %v3342
  %v3475 = vunpack.c.l.b16 %v3343
  %v3476 = vunpack.c.l.b16 %v3344
  %v3477 = vunpack.c.l.b16 %v3345
  %v3478 = vunpack.c.l.b16 %v3346
  %v3479 = vunpack.c.l.b16 %v3347
  %v3480 = vunpack.c.l.b16 %v3348
  %v3481 = vunpack.c.l.b16 %v3349
  %v3482 = vunpack.c.l.b16 %v3350
  %v3483 = vunpack.c.l.b16 %v3351
  %v3484 = vunpack.c.l.b16 %v3352
  %v3485 = vunpack.c.l.b16 %v3353
  %v3486 = vunpack.c.l.b16 %v3354
  %v3487 = vunpack.c.l.b16 %v3355
  %v3488 = vunpack.c.l.b16 %v3356
  %v3489 = vunpack.c.l.b16 %v3357
  %v3490 = vunpack.c.l.b16 %v3358
  %v3491 = vunpack.c.l.b16 %v3359
  %v3492 = vunpack.c.l.b16 %v3360
  %v3493 = vunpack.c.l.b16 %v3361
  %v3494 = vunpack.c.l.b16 %v3362
  %v3495 = vunpack.c.l.b16 %v3363
  %v3496 = vunpack.c.l.b16 %v3364
  %v3497 = vunpack.c.l.b16 %v3365
  %v3498 = vunpack.c.l.b16 %v3366
  %v3499 = vunpack.c.l.b16 %v3367
  %v3500 = vunpack.c.l.b16 %v3368
  %v3501 = vunpack.c.l.b16 %v3369
  %v3502 = vunpack.c.l.b16 %v3370
  %v3503 = vunpack.c.l.b16 %v3371
  %v3504 = vunpack.c.l.b16 %v3372
  %v3505 = vunpack.c.l.b16 %v3373
  %v3506 = vunpack.c.l.b16 %v3374
  %v3507 = vunpack.c.l.b16 %v3375
  %v3508 = vunpack.c.l.b16 %v3376
  %v3509 = vunpack.c.l.b16 %v3377
  %v3510 = vunpack.c.l.b16 %v3378
  %v3511 = vunpack.c.l.b16 %v3379
  %v3512 = vunpack.c.l.b16 %v3380
  %v3513 = vunpack.c.l.b16 %v3381
  %v3514 = vunpack.c.l.b16 %v3382
  %v3515 = vunpack.c.l.b16 %v3383
  %v3516 = vpack.c.b16 %v3453, %v3452
  %v3517 = vpack.c.b16 %v3455, %v3454
  %v3518 = vpack.c.b16 %v3457, %v3456
  %v3519 = vpack.c.b16 %v3459, %v3458
  %v3520 = vpack.c.b16 %v3461, %v3460
  %v3521 = vpack.c.b16 %v3463, %v3462
  %v3522 = vpack.c.b16 %v3465, %v3464
  %v3523 = vpack.c.b16 %v3467, %v3466
  %v3524 = vpack.c.b16 %v3469, %v3468
  %v3525 = vpack.c.b16 %v3471, %v3470
  %v3526 = vpack.c.b16 %v3473, %v3472
  %v3527 = vpack.c.b16 %v3475, %v3474
  %v3528 = vpack.c.b16 %v3477, %v3476
  %v3529 = vpack.c.b16 %v3479, %v3478
  %v3530 = vpack.c.b16 %v3481, %v3480
  %v3531 = vpack.c.b16 %v3483, %v3482
  %v3532 = vpack.c.b16 %v3485, %v3484
  %v3533 = vpack.c.b16 %v3487, %v3486
  %v3534 = vpack.c.b16 %v3489, %v3488
  %v3535 = vpack.c.b16 %v3491, %v3490
  %v3536 = vpack.c.b16 %v3493, %v3492
  %v3537 = vpack.c.b16 %v3495, %v3494
  %v3538 = vpack.c.b16 %v3497, %v3496
  %v3539 = vpack.c.b16 %v3499, %v3498
  %v3540 = vpack.c.b16 %v3501, %v3500
  %v3541 = vpack.c.b16 %v3503, %v3502
  %v3542 = vpack.c.b16 %v3505, %v3504
  %v3543 = vpack.c.b16 %v3507, %v3506
  %v3544 = vpack.c.b16 %v3509, %v3508
  %v3545 = vpack.c.b16 %v3511, %v3510
  %v3546 = vpack.c.b16 %v3513, %v3512
  %v3547 = vpack.c.b16 %v3515, %v3514
  %3580 = vmatpush.bf16.msra.mxu0 %v3523
  %3581 = vmatpush.bf16.msra.mxu0 %v3522
  %3582 = vmatpush.bf16.msra.mxu0 %v3521
  %3583 = vmatpush.bf16.msra.mxu0 %v3520
  %3584 = vmatpush.bf16.msra.mxu0 %v3519
  %3585 = vmatpush.bf16.msra.mxu0 %v3518
  %3586 = vmatpush.bf16.msra.mxu0 %v3517
  %3587 = vmatpush.bf16.msra.mxu0 %v3516
  %3588 = vmatmul.bf16.gmra.mxu0 %v3316
  %v3589 = vpop.f32.mrf.mxu0
  %v3590 = vadd.f32 %v3386, %v3589
  %v3591 = vpop.f32.mrf.mxu0
  %v3592 = vadd.f32 %v3386, %v3591
  %3593 = vdwg.mxu0
  %3594 = vmatpush.bf16.msra.mxu0 %v3531
  %3595 = vmatpush.bf16.msra.mxu0 %v3530
  %3596 = vmatpush.bf16.msra.mxu0 %v3529
  %3597 = vmatpush.bf16.msra.mxu0 %v3528
  %3598 = vmatpush.bf16.msra.mxu0 %v3527
  %3599 = vmatpush.bf16.msra.mxu0 %v3526
  %3600 = vmatpush.bf16.msra.mxu0 %v3525
  %3601 = vmatpush.bf16.msra.mxu0 %v3524
  %3602 = vmatmul.bf16.gmra.mxu0 %v3317
  %v3603 = vpop.f32.mrf.mxu0
  %v3604 = vadd.f32 %v3590, %v3603
  %v3605 = vpop.f32.mrf.mxu0
  %v3606 = vadd.f32 %v3592, %v3605
  %3607 = vdwg.mxu0
  %3608 = vmatpush.bf16.msra.mxu0 %v3539
  %3609 = vmatpush.bf16.msra.mxu0 %v3538
  %3610 = vmatpush.bf16.msra.mxu0 %v3537
  %3611 = vmatpush.bf16.msra.mxu0 %v3536
  %3612 = vmatpush.bf16.msra.mxu0 %v3535
  %3613 = vmatpush.bf16.msra.mxu0 %v3534
  %3614 = vmatpush.bf16.msra.mxu0 %v3533
  %3615 = vmatpush.bf16.msra.mxu0 %v3532
  %3616 = vmatmul.bf16.gmra.mxu0 %v3318
  %v3617 = vpop.f32.mrf.mxu0
  %v3618 = vadd.f32 %v3604, %v3617
  %v3619 = vpop.f32.mrf.mxu0
  %v3620 = vadd.f32 %v3606, %v3619
  %3621 = vdwg.mxu0
  %3622 = vmatpush.bf16.msra.mxu0 %v3547
  %3623 = vmatpush.bf16.msra.mxu0 %v3546
  %3624 = vmatpush.bf16.msra.mxu0 %v3545
  %3625 = vmatpush.bf16.msra.mxu0 %v3544
  %3626 = vmatpush.bf16.msra.mxu0 %v3543
  %3627 = vmatpush.bf16.msra.mxu0 %v3542
  %3628 = vmatpush.bf16.msra.mxu0 %v3541
  %3629 = vmatpush.bf16.msra.mxu0 %v3540
  %3630 = vmatmul.bf16.gmra.mxu0 %v3319
  %v3631 = vpop.f32.mrf.mxu0
  %v3632 = vadd.f32 %v3618, %v3631
  %v3633 = vpop.f32.mrf.mxu0
  %v3634 = vadd.f32 %v3620, %v3633
  %3635 = vdwg.mxu0
  %3636 = vst [vmem:[%s11] sm:$0xff] %v3632
  %3637 = vst [vmem:[%s11 + $0x8] sm:$0xff] %v3634
  // Predicated region
  $region46: #{dqn_forward.1} parent=0 // pred_check
    _
  $region47: #{dqn_forward.1} parent=0 // pred_check_branch
    %3639 = sbr.rel (0) target = $region49
  $region48: #{dqn_forward.1} parent=0 // pred_region
    _
  $region49: #{dqn_forward.1} parent=0 // pred_fallthru
    _
  // Predicated region
  $region50: #{dqn_forward.1} parent=0 // pred_check
    _
  $region51: #{dqn_forward.1} parent=0 // pred_check_branch
    %3641 = sbr.rel (0) target = $region53
  $region52: #{dqn_forward.1} parent=0 // pred_region
    _
  $region53: #{dqn_forward.1} parent=0 // pred_fallthru
    _
  %3642 = vsyncmov [#allocation7]
  %s3643 = vpop.sfrf %3642
  %p3644 = scmp.eq.s32.totalorder %s3643, 0
  %p3645 = pneg %p3644
  %3647 = shalt.err (%p3645)
  %s3648 = scalar_lea.sflag [#allocation7], 1
  %3649 = vsyncmov %s3648
  %s3650 = vpop.sfrf %3649
  %p3651 = scmp.eq.s32.totalorder %s3650, 0
  %p3652 = pneg %p3651
  %3654 = shalt.err (%p3652)
  %s3655 = scalar_lea.sflag [#allocation7], 2
  %3656 = vsyncmov %s3655
  %s3657 = vpop.sfrf %3656
  %p3658 = scmp.eq.s32.totalorder %s3657, 0
  %p3659 = pneg %p3658
  %3661 = shalt.err (%p3659)
  %s3662 = scalar_lea.sflag [#allocation7], 3
  %3663 = vsyncmov %s3662
  %s3664 = vpop.sfrf %3663
  %p3665 = scmp.eq.s32.totalorder %s3664, 0
  %p3666 = pneg %p3665
  %3668 = shalt.err (%p3666)
  %s3669 = scalar_lea.sflag [#allocation7], 4
  %3670 = vsyncmov %s3669
  %s3671 = vpop.sfrf %3670
  %p3672 = scmp.eq.s32.totalorder %s3671, 0
  %p3673 = pneg %p3672
  %3675 = shalt.err (%p3673)

</llo_original>
